<compile_context>
chip_gen: v6e
topology: v6e:2x2x1
jax: 0.10.0
libtpu: 0.0.40
codegen_flags: <defaults>
</compile_context>

<pallas_src>
import math

import numpy as np
import jax
import jax.numpy as jnp
from jax.experimental import pallas as pl
from jax.experimental.pallas import tpu as pltpu


_MS_SSIM_WEIGHTS = (0.0448, 0.2856, 0.3001, 0.2363, 0.1333)
_NSTAT = 5  # x1, x2, x1*x1, x2*x2, x1*x2


def _round_up(x, m):
    return ((x + m - 1) // m) * m


def _gaussian_1d(window_size, sigma):
    g = np.array(
        [math.exp(-((x - window_size // 2) ** 2) / float(2 * sigma ** 2))
         for x in range(window_size)],
        dtype=np.float64,
    )
    return (g / g.sum()).astype(np.float32)


def _conv_operator(n, ws, sigma):
    """(out, n) matrix M with M @ x == 1-D cross-correlation of x with the
    normalized Gaussian, stride 1, zero padding ws//2 -- exactly what
    F.conv2d(..., padding=ws//2) does along one spatial axis."""
    g = _gaussian_1d(ws, sigma)
    p = ws // 2
    out = n + 2 * p - ws + 1
    M = np.zeros((out, n), np.float32)
    for o in range(out):
        for k in range(ws):
            i = o + k - p
            if 0 <= i < n:
                M[o, i] = g[k]
    return M


def _pool_operator(n, level):
    """(n >> level, n) matrix == `level` iterations of avg_pool(kernel=2,
    stride=2) along one axis (averaging over 2**level blocks)."""
    k = 1 << level
    A = np.zeros((n >> level, n), np.float32)
    for i in range(n >> level):
        A[i, i * k:(i + 1) * k] = 1.0 / k
    return A


# ---------------------------------------------------------------------------
# LMLoss forward: 0.99 * L1 + 0.01 * MS-SSIM (rgb_range=1, like the reference)
# ---------------------------------------------------------------------------
def lm_loss(output, target, *, rgb_range: float = 1.0, levels: int = 5):
    B, C, H, W = output.shape
    BC = B * C
    if H % (1 << (levels - 1)) or W % (1 << (levels - 1)):
        raise ValueError("spatial size must halve cleanly at every MS-SSIM level")

    # ---- static per-level geometry (matches the PyTorch reference) --------
    Hs = [H >> l for l in range(levels)]
    Ws = [W >> l for l in range(levels)]
    wss = [min(Hs[l], Ws[l], 11) for l in range(levels)]
    sgs = [1.5 * wss[l] / 11.0 for l in range(levels)]
    OHs = [Hs[l] + 2 * (wss[l] // 2) - wss[l] + 1 for l in range(levels)]
    OWs = [Ws[l] + 2 * (wss[l] // 2) - wss[l] + 1 for l in range(levels)]

    def prefix(v):
        out = [0]
        for x in v:
            out.append(out[-1] + x)
        return out

    HS, OHS, WS, OWS = prefix(Hs), prefix(OHs), prefix(Ws), prefix(OWs)
    HPAD = _round_up(HS[-1], 8)       # per-image pyramid rows (8-aligned)
    OHPAD = _round_up(OHS[-1], 8)     # per-stat conv-output rows (8-aligned)
    LTOT = BC * WS[-1]                # pyramid lanes (all levels, B*C packed)
    OLTOT = BC * OWS[-1]              # conv-output lanes
    MROWS = _round_up(2 * levels, 8)
    MCOLS = _round_up(levels, 8)

    # ---- operator matrices (numpy, trace-time) -----------------------------
    # Pooling pyramid (level-0 image -> every level at once), vertical part.
    Abig = np.zeros((HPAD, H), np.float32)
    for l in range(levels):
        Abig[HS[l]:HS[l] + Hs[l], :] = _pool_operator(H, l)
    AbigS = np.zeros((2 * HPAD, 2 * H), np.float32)
    AbigS[:HPAD, :H] = Abig
    AbigS[HPAD:, H:] = Abig

    # Pooling pyramid, horizontal part (block-diag over the B*C packed images).
    Bbig = np.zeros((BC * W, LTOT), np.float32)
    for l in range(levels):
        Bl = _pool_operator(W, l).T
        for c in range(BC):
            Bbig[c * W:(c + 1) * W,
                 BC * WS[l] + c * Ws[l]:BC * WS[l] + (c + 1) * Ws[l]] = Bl

    # Separable Gaussian conv, vertical part (block-diag over 5 stats x levels).
    Vbig = np.zeros((_NSTAT * OHPAD, _NSTAT * HPAD), np.float32)
    for l in range(levels):
        Vl = _conv_operator(Hs[l], wss[l], sgs[l])
        for s in range(_NSTAT):
            Vbig[s * OHPAD + OHS[l]:s * OHPAD + OHS[l] + OHs[l],
                 s * HPAD + HS[l]:s * HPAD + HS[l] + Hs[l]] = Vl

    # Separable Gaussian conv, horizontal part (block-diag over levels x B*C).
    Hbig = np.zeros((LTOT, OLTOT), np.float32)
    for l in range(levels):
        Hl = _conv_operator(Ws[l], wss[l], sgs[l]).T
        for c in range(BC):
            Hbig[BC * WS[l] + c * Ws[l]:BC * WS[l] + (c + 1) * Ws[l],
                 BC * OWS[l] + c * OWs[l]:BC * OWS[l] + (c + 1) * OWs[l]] = Hl

    # Per-level mean extraction (row selector + lane selector/normalizer).
    Rowsel = np.zeros((MROWS, 2 * OHPAD), np.float32)
    Colsel = np.zeros((OLTOT, MCOLS), np.float32)
    for l in range(levels):
        Rowsel[l, OHS[l]:OHS[l] + OHs[l]] = 1.0                               # ssim rows
        Rowsel[levels + l, OHPAD + OHS[l]:OHPAD + OHS[l] + OHs[l]] = 1.0       # mcs rows
        Colsel[BC * OWS[l]:BC * (OWS[l] + OWs[l]), l] = 1.0 / (BC * OHs[l] * OWs[l])

    # ---- pack all operators except Colsel into ONE constant slab (one DMA) --
    mats = [AbigS, Bbig, Hbig, Vbig, Rowsel]
    slab_w = max(mm.shape[1] for mm in mats)
    offs, rtot = [], 0
    for mm in mats:
        offs.append(rtot)
        rtot += _round_up(mm.shape[0], 8)
    slab = np.zeros((rtot, slab_w), np.float32)
    for off, mm in zip(offs, mats):
        slab[off:off + mm.shape[0], :mm.shape[1]] = mm
    o_A, o_B, o_H, o_V, o_R = offs

    C1 = (0.01 * rgb_range) ** 2
    C2 = (0.03 * rgb_range) ** 2

    # ---- the fused kernel (no grid: whole problem in one invocation) -------
    def kernel(x1_ref, x2_ref, slab_ref, colsel_ref, m_ref, l1_ref):
        # In-kernel lane packing: (B*C, H, W) -> (H, B*C*W).
        a1 = jnp.concatenate([x1_ref[c] for c in range(BC)], axis=1)
        a2 = jnp.concatenate([x2_ref[c] for c in range(BC)], axis=1)

        # L1 term: mean absolute error over every element.
        l1_ref[0, 0] = jnp.mean(jnp.abs(a1 - a2))

        # Static views into the constant slab.
        abigs = slab_ref[o_A:o_A + 2 * HPAD, 0:2 * H]
        bbig = slab_ref[o_B:o_B + BC * W, 0:LTOT]
        hbig = slab_ref[o_H:o_H + LTOT, 0:OLTOT]
        vbig = slab_ref[o_V:o_V + _NSTAT * OHPAD, 0:_NSTAT * HPAD]
        rowsel = slab_ref[o_R:o_R + MROWS, 0:2 * OHPAD]
        colsel = colsel_ref[...]

        # Whole pooling pyramid (both images, all levels): 2 MXU matmuls.
        xs = jnp.concatenate([a1, a2], axis=0)                                # (2H, BC*W)
        yp = jnp.dot(xs, bbig, preferred_element_type=jnp.float32)            # (2H, LTOT)
        xpyr = jnp.dot(abigs, yp, preferred_element_type=jnp.float32)         # (2*HPAD, LTOT)
        x1p, x2p = xpyr[:HPAD], xpyr[HPAD:]

        # 5 statistic planes for ALL levels -> one separable Gaussian operator
        # pair (zero padding of F.conv2d folded into the operators): 2 matmuls.
        planes = jnp.concatenate([xpyr, x1p * x1p, x2p * x2p, x1p * x2p], axis=0)
        yh = jnp.dot(planes, hbig, preferred_element_type=jnp.float32)        # (5*HPAD, OLTOT)
        z = jnp.dot(vbig, yh, preferred_element_type=jnp.float32)             # (5*OHPAD, OLTOT)

        mu1 = z[0 * OHPAD:1 * OHPAD]
        mu2 = z[1 * OHPAD:2 * OHPAD]
        s11 = z[2 * OHPAD:3 * OHPAD]
        s22 = z[3 * OHPAD:4 * OHPAD]
        s12 = z[4 * OHPAD:5 * OHPAD]

        mu1_sq = mu1 * mu1
        mu2_sq = mu2 * mu2
        mu1_mu2 = mu1 * mu2
        sigma1_sq = s11 - mu1_sq
        sigma2_sq = s22 - mu2_sq
        sigma12 = s12 - mu1_mu2

        v1 = 2.0 * sigma12 + C2
        v2 = sigma1_sq + sigma2_sq + C2
        inv_v2 = pl.reciprocal(v2)                    # computed once, reused
        mcs_map = v1 * inv_v2
        ssim_map = (2.0 * mu1_mu2 + C1) * mcs_map * pl.reciprocal(mu1_sq + mu2_sq + C1)

        # Per-level means of both maps with two tiny selector matmuls.  The
        # diagonal entries of m are the wanted per-level means; off-diagonal
        # entries are harmless cross-level terms the host glue never reads.
        maps = jnp.concatenate([ssim_map, mcs_map], axis=0)                   # (2*OHPAD, OLTOT)
        m10 = jnp.dot(rowsel, maps, preferred_element_type=jnp.float32)       # (MROWS, OLTOT)
        m_ref[...] = jnp.dot(m10, colsel, preferred_element_type=jnp.float32)  # (MROWS, MCOLS)

    # ---- launch -------------------------------------------------------------
    x1 = output.astype(jnp.float32).reshape(BC, H, W)   # free contiguous reshape
    x2 = target.astype(jnp.float32).reshape(BC, H, W)

    m, l1 = pl.pallas_call(
        kernel,
        out_shape=(
            jax.ShapeDtypeStruct((MROWS, MCOLS), jnp.float32),   # [ssim; mcs] level means
            jax.ShapeDtypeStruct((1, 1), jnp.float32),           # L1 mean
        ),
        in_specs=[pl.BlockSpec(memory_space=pltpu.MemorySpace.VMEM)] * 4,
        out_specs=(
            pl.BlockSpec(memory_space=pltpu.MemorySpace.VMEM),
            pl.BlockSpec(memory_space=pltpu.MemorySpace.SMEM),
        ),
    )(x1, x2, jnp.asarray(slab), jnp.asarray(Colsel))

    ssim_v = jnp.diagonal(m[:levels, :levels])
    mcs_v = jnp.diagonal(m[levels:2 * levels, :levels])
    weight = jnp.asarray(_MS_SSIM_WEIGHTS[:levels], jnp.float32)
    # NOTE: like the PyTorch reference, negative mcs raised to fractional
    # weights can produce NaN; semantics are intentionally kept identical.
    ms_ssim_value = jnp.prod(mcs_v[:levels - 1] ** weight[:levels - 1]) * (
        ssim_v[levels - 1] ** weight[levels - 1]
    )
    return 0.99 * l1[0, 0] + (1.0 - 0.99) * ms_ssim_value


if __name__ == "__main__":
    # channel=3 is required by MS_SSIM (depthwise conv with groups=3); spatial
    # 32 so all 5 pyramid levels (32->16->8->4->2) pool cleanly, exactly as the
    # PyTorch module requires.  target is a small perturbation of output so the
    # MS-SSIM product stays finite.
    key = jax.random.PRNGKey(0)
    k1, k2 = jax.random.split(key)
    B, C, H, W = 2, 3, 32, 32
    output = jax.random.uniform(k1, (B, C, H, W), dtype=jnp.float32)
    target = jnp.clip(
        output + 0.05 * (jax.random.uniform(k2, (B, C, H, W), dtype=jnp.float32) - 0.5),
        0.0, 1.0,
    )

    loss = jax.jit(lm_loss)(output, target)
    jax.block_until_ready(loss)
    print("KERNEL_OK")
</pallas_src>

<mosaic_0001>
module attributes {stable_mosaic.version = 11 : i64} {
  func.func @kernel(%arg0: memref<6x32x32xf32, #tpu.memory_space<vmem>>, %arg1: memref<6x32x32xf32, #tpu.memory_space<vmem>>, %arg2: memref<1072x390xf32, #tpu.memory_space<vmem>>, %arg3: memref<390x8xf32, #tpu.memory_space<vmem>>, %arg4: memref<16x8xf32, #tpu.memory_space<vmem>>, %arg5: memref<1x1xf32, #tpu.memory_space<smem>>) attributes {dimension_semantics = [], scalar_prefetch = 0 : i64, scratch_operands = 0 : i64, tpu.core_type = #tpu.core_type<tc>} {
    %c0 = arith.constant 0 : index
    %c0_0 = arith.constant 0 : index
    %c0_1 = arith.constant 0 : index
    %0 = vector.load %arg0[%c0, %c0_0, %c0_1] : memref<6x32x32xf32, #tpu.memory_space<vmem>>, vector<1x32x32xf32>
    %1 = vector.shape_cast %0 : vector<1x32x32xf32> to vector<32x32xf32>
    %c1 = arith.constant 1 : index
    %c0_2 = arith.constant 0 : index
    %c0_3 = arith.constant 0 : index
    %2 = vector.load %arg0[%c1, %c0_2, %c0_3] : memref<6x32x32xf32, #tpu.memory_space<vmem>>, vector<1x32x32xf32>
    %3 = vector.shape_cast %2 : vector<1x32x32xf32> to vector<32x32xf32>
    %c2 = arith.constant 2 : index
    %c0_4 = arith.constant 0 : index
    %c0_5 = arith.constant 0 : index
    %4 = vector.load %arg0[%c2, %c0_4, %c0_5] : memref<6x32x32xf32, #tpu.memory_space<vmem>>, vector<1x32x32xf32>
    %5 = vector.shape_cast %4 : vector<1x32x32xf32> to vector<32x32xf32>
    %c3 = arith.constant 3 : index
    %c0_6 = arith.constant 0 : index
    %c0_7 = arith.constant 0 : index
    %6 = vector.load %arg0[%c3, %c0_6, %c0_7] : memref<6x32x32xf32, #tpu.memory_space<vmem>>, vector<1x32x32xf32>
    %7 = vector.shape_cast %6 : vector<1x32x32xf32> to vector<32x32xf32>
    %c4 = arith.constant 4 : index
    %c0_8 = arith.constant 0 : index
    %c0_9 = arith.constant 0 : index
    %8 = vector.load %arg0[%c4, %c0_8, %c0_9] : memref<6x32x32xf32, #tpu.memory_space<vmem>>, vector<1x32x32xf32>
    %9 = vector.shape_cast %8 : vector<1x32x32xf32> to vector<32x32xf32>
    %c5 = arith.constant 5 : index
    %c0_10 = arith.constant 0 : index
    %c0_11 = arith.constant 0 : index
    %10 = vector.load %arg0[%c5, %c0_10, %c0_11] : memref<6x32x32xf32, #tpu.memory_space<vmem>>, vector<1x32x32xf32>
    %11 = vector.shape_cast %10 : vector<1x32x32xf32> to vector<32x32xf32>
    %12 = tpu.concatenate %1, %3, %5, %7, %9, %11 in 1 : vector<32x32xf32>, vector<32x32xf32>, vector<32x32xf32>, vector<32x32xf32>, vector<32x32xf32>, vector<32x32xf32> -> vector<32x192xf32>
    %c0_12 = arith.constant 0 : index
    %c0_13 = arith.constant 0 : index
    %c0_14 = arith.constant 0 : index
    %13 = vector.load %arg1[%c0_12, %c0_13, %c0_14] : memref<6x32x32xf32, #tpu.memory_space<vmem>>, vector<1x32x32xf32>
    %14 = vector.shape_cast %13 : vector<1x32x32xf32> to vector<32x32xf32>
    %c1_15 = arith.constant 1 : index
    %c0_16 = arith.constant 0 : index
    %c0_17 = arith.constant 0 : index
    %15 = vector.load %arg1[%c1_15, %c0_16, %c0_17] : memref<6x32x32xf32, #tpu.memory_space<vmem>>, vector<1x32x32xf32>
    %16 = vector.shape_cast %15 : vector<1x32x32xf32> to vector<32x32xf32>
    %c2_18 = arith.constant 2 : index
    %c0_19 = arith.constant 0 : index
    %c0_20 = arith.constant 0 : index
    %17 = vector.load %arg1[%c2_18, %c0_19, %c0_20] : memref<6x32x32xf32, #tpu.memory_space<vmem>>, vector<1x32x32xf32>
    %18 = vector.shape_cast %17 : vector<1x32x32xf32> to vector<32x32xf32>
    %c3_21 = arith.constant 3 : index
    %c0_22 = arith.constant 0 : index
    %c0_23 = arith.constant 0 : index
    %19 = vector.load %arg1[%c3_21, %c0_22, %c0_23] : memref<6x32x32xf32, #tpu.memory_space<vmem>>, vector<1x32x32xf32>
    %20 = vector.shape_cast %19 : vector<1x32x32xf32> to vector<32x32xf32>
    %c4_24 = arith.constant 4 : index
    %c0_25 = arith.constant 0 : index
    %c0_26 = arith.constant 0 : index
    %21 = vector.load %arg1[%c4_24, %c0_25, %c0_26] : memref<6x32x32xf32, #tpu.memory_space<vmem>>, vector<1x32x32xf32>
    %22 = vector.shape_cast %21 : vector<1x32x32xf32> to vector<32x32xf32>
    %c5_27 = arith.constant 5 : index
    %c0_28 = arith.constant 0 : index
    %c0_29 = arith.constant 0 : index
    %23 = vector.load %arg1[%c5_27, %c0_28, %c0_29] : memref<6x32x32xf32, #tpu.memory_space<vmem>>, vector<1x32x32xf32>
    %24 = vector.shape_cast %23 : vector<1x32x32xf32> to vector<32x32xf32>
    %25 = tpu.concatenate %14, %16, %18, %20, %22, %24 in 1 : vector<32x32xf32>, vector<32x32xf32>, vector<32x32xf32>, vector<32x32xf32>, vector<32x32xf32>, vector<32x32xf32> -> vector<32x192xf32>
    %26 = arith.subf %12, %25 : vector<32x192xf32>
    %27 = math.absf %26 : vector<32x192xf32>
    %28 = vector.shape_cast %27 : vector<32x192xf32> to vector<1x32x192xf32>
    %cst = arith.constant dense<0.000000e+00> : vector<1xf32>
    %29 = vector.multi_reduction <add>, %28, %cst [1, 2] : vector<1x32x192xf32> to vector<1xf32>
    %30 = vector.shape_cast %29 : vector<1xf32> to vector<1x1x1xf32>
    %31 = vector.extract %30[0, 0, 0] : f32 from vector<1x1x1xf32>
    %cst_30 = arith.constant 6.144000e+03 : f32
    %32 = arith.divf %31, %cst_30 : f32
    %c0_31 = arith.constant 0 : index
    %c0_32 = arith.constant 0 : index
    %33 = memref.load %arg5[%c0_31, %c0_32] : memref<1x1xf32, #tpu.memory_space<smem>>
    memref.store %32, %arg5[%c0_31, %c0_32] : memref<1x1xf32, #tpu.memory_space<smem>>
    %c0_33 = arith.constant 0 : index
    %c0_34 = arith.constant 0 : index
    %34 = vector.load %arg2[%c0_33, %c0_34] : memref<1072x390xf32, #tpu.memory_space<vmem>>, vector<128x64xf32>
    %c128 = arith.constant 128 : index
    %c0_35 = arith.constant 0 : index
    %35 = vector.load %arg2[%c128, %c0_35] : memref<1072x390xf32, #tpu.memory_space<vmem>>, vector<192x372xf32>
    %c320 = arith.constant 320 : index
    %c0_36 = arith.constant 0 : index
    %36 = vector.load %arg2[%c320, %c0_36] : memref<1072x390xf32, #tpu.memory_space<vmem>>, vector<372x390xf32>
    %c696 = arith.constant 696 : index
    %c0_37 = arith.constant 0 : index
    %37 = vector.load %arg2[%c696, %c0_37] : memref<1072x390xf32, #tpu.memory_space<vmem>>, vector<360x320xf32>
    %c1056 = arith.constant 1056 : index
    %c0_38 = arith.constant 0 : index
    %38 = vector.load %arg2[%c1056, %c0_38] : memref<1072x390xf32, #tpu.memory_space<vmem>>, vector<16x144xf32>
    %c0_39 = arith.constant 0 : index
    %c0_40 = arith.constant 0 : index
    %39 = vector.load %arg3[%c0_39, %c0_40] : memref<390x8xf32, #tpu.memory_space<vmem>>, vector<390x8xf32>
    %40 = tpu.concatenate %12, %25 in 0 : vector<32x192xf32>, vector<32x192xf32> -> vector<64x192xf32>
    %cst_41 = arith.constant dense<0.000000e+00> : vector<64x372xf32>
    %41 = tpu.matmul %40, %35, %cst_41 {dimension_numbers = #tpu.dot_dimension_numbers<[1], [0], [0], [1], [0, 0, 1, 1], [], []>} : vector<64x192xf32>, vector<192x372xf32>, vector<64x372xf32> -> vector<64x372xf32>
    %cst_42 = arith.constant dense<0.000000e+00> : vector<128x372xf32>
    %42 = tpu.matmul %34, %41, %cst_42 {dimension_numbers = #tpu.dot_dimension_numbers<[1], [0], [0], [1], [0, 0, 1, 1], [], []>} : vector<128x64xf32>, vector<64x372xf32>, vector<128x372xf32> -> vector<128x372xf32>
    %43 = vector.extract_strided_slice %42 {offsets = [0, 0], sizes = [64, 372], strides = [1, 1]} : vector<128x372xf32> to vector<64x372xf32>
    %44 = vector.extract_strided_slice %42 {offsets = [64, 0], sizes = [64, 372], strides = [1, 1]} : vector<128x372xf32> to vector<64x372xf32>
    %45 = arith.mulf %43, %43 : vector<64x372xf32>
    %46 = arith.mulf %44, %44 : vector<64x372xf32>
    %47 = arith.mulf %43, %44 : vector<64x372xf32>
    %48 = tpu.concatenate %42, %45, %46, %47 in 0 : vector<128x372xf32>, vector<64x372xf32>, vector<64x372xf32>, vector<64x372xf32> -> vector<320x372xf32>
    %cst_43 = arith.constant dense<0.000000e+00> : vector<320x390xf32>
    %49 = tpu.matmul %48, %36, %cst_43 {dimension_numbers = #tpu.dot_dimension_numbers<[1], [0], [0], [1], [0, 0, 1, 1], [], []>} : vector<320x372xf32>, vector<372x390xf32>, vector<320x390xf32> -> vector<320x390xf32>
    %cst_44 = arith.constant dense<0.000000e+00> : vector<360x390xf32>
    %50 = tpu.matmul %37, %49, %cst_44 {dimension_numbers = #tpu.dot_dimension_numbers<[1], [0], [0], [1], [0, 0, 1, 1], [], []>} : vector<360x320xf32>, vector<320x390xf32>, vector<360x390xf32> -> vector<360x390xf32>
    %51 = vector.extract_strided_slice %50 {offsets = [0, 0], sizes = [72, 390], strides = [1, 1]} : vector<360x390xf32> to vector<72x390xf32>
    %52 = vector.extract_strided_slice %50 {offsets = [72, 0], sizes = [72, 390], strides = [1, 1]} : vector<360x390xf32> to vector<72x390xf32>
    %53 = vector.extract_strided_slice %50 {offsets = [144, 0], sizes = [72, 390], strides = [1, 1]} : vector<360x390xf32> to vector<72x390xf32>
    %54 = vector.extract_strided_slice %50 {offsets = [216, 0], sizes = [72, 390], strides = [1, 1]} : vector<360x390xf32> to vector<72x390xf32>
    %55 = vector.extract_strided_slice %50 {offsets = [288, 0], sizes = [72, 390], strides = [1, 1]} : vector<360x390xf32> to vector<72x390xf32>
    %56 = arith.mulf %51, %51 : vector<72x390xf32>
    %57 = arith.mulf %52, %52 : vector<72x390xf32>
    %58 = arith.mulf %51, %52 : vector<72x390xf32>
    %59 = arith.subf %53, %56 : vector<72x390xf32>
    %60 = arith.subf %54, %57 : vector<72x390xf32>
    %61 = arith.subf %55, %58 : vector<72x390xf32>
    %cst_45 = arith.constant 2.000000e+00 : f32
    %62 = vector.broadcast %cst_45 : f32 to vector<72x390xf32>
    %63 = arith.mulf %62, %61 : vector<72x390xf32>
    %cst_46 = arith.constant 8.99999984E-4 : f32
    %64 = vector.broadcast %cst_46 : f32 to vector<72x390xf32>
    %65 = arith.addf %63, %64 : vector<72x390xf32>
    %66 = arith.addf %59, %60 : vector<72x390xf32>
    %cst_47 = arith.constant 8.99999984E-4 : f32
    %67 = vector.broadcast %cst_47 : f32 to vector<72x390xf32>
    %68 = arith.addf %66, %67 : vector<72x390xf32>
    %69 = tpu.reciprocal %68 : vector<72x390xf32> -> vector<72x390xf32>
    %70 = arith.mulf %65, %69 : vector<72x390xf32>
    %cst_48 = arith.constant 2.000000e+00 : f32
    %71 = vector.broadcast %cst_48 : f32 to vector<72x390xf32>
    %72 = arith.mulf %71, %58 : vector<72x390xf32>
    %cst_49 = arith.constant 9.99999974E-5 : f32
    %73 = vector.broadcast %cst_49 : f32 to vector<72x390xf32>
    %74 = arith.addf %72, %73 : vector<72x390xf32>
    %75 = arith.mulf %74, %70 : vector<72x390xf32>
    %76 = arith.addf %56, %57 : vector<72x390xf32>
    %cst_50 = arith.constant 9.99999974E-5 : f32
    %77 = vector.broadcast %cst_50 : f32 to vector<72x390xf32>
    %78 = arith.addf %76, %77 : vector<72x390xf32>
    %79 = tpu.reciprocal %78 : vector<72x390xf32> -> vector<72x390xf32>
    %80 = arith.mulf %75, %79 : vector<72x390xf32>
    %81 = tpu.concatenate %80, %70 in 0 : vector<72x390xf32>, vector<72x390xf32> -> vector<144x390xf32>
    %cst_51 = arith.constant dense<0.000000e+00> : vector<16x390xf32>
    %82 = tpu.matmul %38, %81, %cst_51 {dimension_numbers = #tpu.dot_dimension_numbers<[1], [0], [0], [1], [0, 0, 1, 1], [], []>} : vector<16x144xf32>, vector<144x390xf32>, vector<16x390xf32> -> vector<16x390xf32>
    %cst_52 = arith.constant dense<0.000000e+00> : vector<16x8xf32>
    %83 = tpu.matmul %82, %39, %cst_52 {dimension_numbers = #tpu.dot_dimension_numbers<[1], [0], [0], [1], [0, 0, 1, 1], [], []>} : vector<16x390xf32>, vector<390x8xf32>, vector<16x8xf32> -> vector<16x8xf32>
    %c0_53 = arith.constant 0 : index
    %c0_54 = arith.constant 0 : index
    %84 = vector.load %arg4[%c0_53, %c0_54] : memref<16x8xf32, #tpu.memory_space<vmem>>, vector<16x8xf32>
    tpu.vector_store %arg4[%c0_53, %c0_54], %83 {strides = array<i32>} : memref<16x8xf32, #tpu.memory_space<vmem>>, vector<16x8xf32>,
    return
  }
}

</mosaic_0001>

<llo_original>
// kernel: lm_loss.1
$region0: #{lm_loss.1}
  #allocation0 [shape = 'u32[]', space=smem, size = 0x4, offset = 0x4, fixed_abs, tag = 'smem constant byte address 0x4 - core index']
  #allocation1 [shape = 'u32[144,128]{1,0:T(1,128)}', space=vmem, size = 0x12000, scoped, tag = 'internal scratch']
  %s0 = inlined_call_operand.hbm [shape: f32[6,32,32], index: 0, kind: input, shape index: {}]
  %s1 = inlined_call_operand.hbm [shape: f32[6,32,32], index: 1, kind: input, shape index: {}]
  %s2 = inlined_call_operand.hbm [shape: f32[1072,390], index: 2, kind: input, shape index: {}]
  %s3 = inlined_call_operand.hbm [shape: f32[390,8], index: 3, kind: input, shape index: {}]
  %s4 = inlined_call_operand.vmem [shape: f32[16,8], index: 4, kind: output, shape index: {0}]
  %s5 = inlined_call_operand.hbm [shape: f32[1,1], index: 5, kind: output, shape index: {1}]
  %6 = xla_tuple %s4, %s5
  %s7 = sld [smem:[#allocation0]]
  $region50: #{lm_loss.1} parent=0
    _
  %s9 = ssub.s32 1, %s7
  %s10 = scalar_select 0, %s9, %s7
  $region1: #{lm_loss.1} parent=0
    #allocation2 [shape = 'u8[98304]{0}', space=vmem, size = 0x18000, scoped, tag = 'input window, operand 0, single buffered']
    #allocation3 [shape = 's32[1]{0}', space=sflag, size = 0x4, scoped, tag = 'scoped memory for lm_loss.1']
    #allocation4 [shape = 's32[1]{0}', space=sflag, size = 0x4, scoped, tag = 'scoped memory for lm_loss.1']
    #allocation5 [shape = 'u8[98304]{0}', space=vmem, size = 0x18000, scoped, tag = 'input window, operand 1, single buffered']
    #allocation6 [shape = 's32[1]{0}', space=sflag, size = 0x4, scoped, tag = 'scoped memory for lm_loss.1']
    #allocation7 [shape = 'u8[2195456]{0}', space=vmem, size = 0x218000, scoped, tag = 'input window, operand 2, single buffered']
    #allocation8 [shape = 'u8[200704]{0}', space=vmem, size = 0x31000, scoped, tag = 'input window, operand 3, single buffered']
    #allocation9 [shape = 's32[1]{0}', space=sflag, size = 0x4, scoped, tag = 'scoped memory for lm_loss.1']
    #allocation10 [shape = 'u8[512]{0}', space=smem, size = 0x200, scoped, tag = 'output window, operand 1, single buffered']
    %11 = vsyncpa [#allocation3], 0
    %12 = vsyncpa [#allocation6], 0
    %13 = vsyncpa [#allocation9], 0
    %14 = vsyncpa [#allocation4], 0
    // Predicated region
    $region2: #{lm_loss.1} parent=1 // pred_check
      _
    $region3: #{lm_loss.1} parent=1 // pred_check_branch
      %16 = sbr.rel (0) target = $region5
    $region4: #{lm_loss.1} parent=1 // pred_region
      %s18 = ssub.s32 3072, 3072
      %19 = vsyncadd [#allocation3], %s18
      %s20 = sshll.u32 [#allocation2], 4
      %s21 = int_to_ptr.vmem [resolvable:$true] %s20
      %26 = dma.hbm_to_vmem [thread:$0]  %s0, 3072, %s21, [#allocation3], 128, 128, 8
    $region5: #{lm_loss.1} parent=1 // pred_fallthru
      _
    // Predicated region
    $region6: #{lm_loss.1} parent=1 // pred_check
      _
    $region7: #{lm_loss.1} parent=1 // pred_check_branch
      %28 = sbr.rel (0) target = $region9
    $region8: #{lm_loss.1} parent=1 // pred_region
      %s30 = ssub.s32 3072, 3072
      %31 = vsyncadd [#allocation6], %s30
      %s32 = sshll.u32 [#allocation5], 4
      %s33 = int_to_ptr.vmem [resolvable:$true] %s32
      %38 = dma.hbm_to_vmem [thread:$0]  %s1, 3072, %s33, [#allocation6], 128, 128, 8
    $region9: #{lm_loss.1} parent=1 // pred_fallthru
      _
    // Predicated region
    $region10: #{lm_loss.1} parent=1 // pred_check
      _
    $region11: #{lm_loss.1} parent=1 // pred_check_branch
      %40 = sbr.rel (0) target = $region13
    $region12: #{lm_loss.1} parent=1 // pred_region
      %s42 = ssub.s32 68608, 68608
      %43 = vsyncadd [#allocation6], %s42
      %s44 = sshll.u32 [#allocation7], 4
      %s45 = int_to_ptr.vmem [resolvable:$true] %s44
      %50 = dma.hbm_to_vmem [thread:$0]  %s2, 68608, %s45, [#allocation6], 512, 512, 32
    $region13: #{lm_loss.1} parent=1 // pred_fallthru
      _
    // Predicated region
    $region14: #{lm_loss.1} parent=1 // pred_check
      _
    $region15: #{lm_loss.1} parent=1 // pred_check_branch
      %52 = sbr.rel (0) target = $region17
    $region16: #{lm_loss.1} parent=1 // pred_region
      %s54 = ssub.s32 6272, 6272
      %55 = vsyncadd [#allocation9], %s54
      %s56 = sshll.u32 [#allocation8], 4
      %s57 = int_to_ptr.vmem [resolvable:$true] %s56
      %62 = dma.hbm_to_vmem [thread:$0]  %s3, 6272, %s57, [#allocation9], 128, 128, 8
    $region17: #{lm_loss.1} parent=1 // pred_fallthru
      _
    // Predicated region
    $region18: #{lm_loss.1} parent=1 // pred_check
      _
    $region19: #{lm_loss.1} parent=1 // pred_check_branch
      %64 = sbr.rel (0) target = $region21
    $region20: #{lm_loss.1} parent=1 // pred_region
      %65 = dma.done [#allocation3], 3072
    $region21: #{lm_loss.1} parent=1 // pred_fallthru
      _
    // Predicated region
    $region22: #{lm_loss.1} parent=1 // pred_check
      _
    $region23: #{lm_loss.1} parent=1 // pred_check_branch
      %67 = sbr.rel (0) target = $region25
    $region24: #{lm_loss.1} parent=1 // pred_region
      %68 = dma.done [#allocation6], 3072
    $region25: #{lm_loss.1} parent=1 // pred_fallthru
      _
    // Predicated region
    $region26: #{lm_loss.1} parent=1 // pred_check
      _
    $region27: #{lm_loss.1} parent=1 // pred_check_branch
      %70 = sbr.rel (0) target = $region29
    $region28: #{lm_loss.1} parent=1 // pred_region
      %71 = dma.done [#allocation6], 68608
    $region29: #{lm_loss.1} parent=1 // pred_fallthru
      _
    // Predicated region
    $region30: #{lm_loss.1} parent=1 // pred_check
      _
    $region31: #{lm_loss.1} parent=1 // pred_check_branch
      %73 = sbr.rel (0) target = $region33
    $region32: #{lm_loss.1} parent=1 // pred_region
      %74 = dma.done [#allocation9], 6272
    $region33: #{lm_loss.1} parent=1 // pred_fallthru
      _
    %v75 = vld [vmem:[#allocation2] sm:$0xff]
    %v76 = vld [vmem:[#allocation2 + $0x8] sm:$0xff]
    %v77 = vld [vmem:[#allocation2 + $0x10] sm:$0xff]
    %v78 = vld [vmem:[#allocation2 + $0x18] sm:$0xff]
    %s79 = scalar_lea.vmem [#allocation2], 32
    %v80 = vld [vmem:[%s79] sm:$0xff]
    %v81 = vld [vmem:[%s79 + $0x8] sm:$0xff]
    %v82 = vld [vmem:[%s79 + $0x10] sm:$0xff]
    %v83 = vld [vmem:[%s79 + $0x18] sm:$0xff]
    %s84 = scalar_lea.vmem [#allocation2], 64
    %v85 = vld [vmem:[%s84] sm:$0xff]
    %v86 = vld [vmem:[%s84 + $0x8] sm:$0xff]
    %v87 = vld [vmem:[%s84 + $0x10] sm:$0xff]
    %v88 = vld [vmem:[%s84 + $0x18] sm:$0xff]
    %s89 = scalar_lea.vmem [#allocation2], 96
    %v90 = vld [vmem:[%s89] sm:$0xff]
    %v91 = vld [vmem:[%s89 + $0x8] sm:$0xff]
    %v92 = vld [vmem:[%s89 + $0x10] sm:$0xff]
    %v93 = vld [vmem:[%s89 + $0x18] sm:$0xff]
    %s94 = scalar_lea.vmem [#allocation2], 128
    %v95 = vld [vmem:[%s94] sm:$0xff]
    %v96 = vld [vmem:[%s94 + $0x8] sm:$0xff]
    %v97 = vld [vmem:[%s94 + $0x10] sm:$0xff]
    %v98 = vld [vmem:[%s94 + $0x18] sm:$0xff]
    %s99 = scalar_lea.vmem [#allocation2], 160
    %v100 = vld [vmem:[%s99] sm:$0xff]
    %v101 = vld [vmem:[%s99 + $0x8] sm:$0xff]
    %v102 = vld [vmem:[%s99 + $0x10] sm:$0xff]
    %v103 = vld [vmem:[%s99 + $0x18] sm:$0xff]
    %108 = vrot.lane.b32.xlu0 %v80, 32
    %v109 = vpop.permute.xlu0 %108
    %110 = vrot.lane.b32.xlu0 %v81, 32
    %v111 = vpop.permute.xlu0 %110
    %112 = vrot.lane.b32.xlu0 %v82, 32
    %v113 = vpop.permute.xlu0 %112
    %114 = vrot.lane.b32.xlu0 %v83, 32
    %v115 = vpop.permute.xlu0 %114
    %124 = vrot.lane.b32.xlu0 %v85, 64
    %v125 = vpop.permute.xlu0 %124
    %126 = vrot.lane.b32.xlu0 %v86, 64
    %v127 = vpop.permute.xlu0 %126
    %128 = vrot.lane.b32.xlu0 %v87, 64
    %v129 = vpop.permute.xlu0 %128
    %130 = vrot.lane.b32.xlu0 %v88, 64
    %v131 = vpop.permute.xlu0 %130
    %140 = vrot.lane.b32.xlu0 %v90, 96
    %v141 = vpop.permute.xlu0 %140
    %142 = vrot.lane.b32.xlu0 %v91, 96
    %v143 = vpop.permute.xlu0 %142
    %144 = vrot.lane.b32.xlu0 %v92, 96
    %v145 = vpop.permute.xlu0 %144
    %146 = vrot.lane.b32.xlu0 %v93, 96
    %v147 = vpop.permute.xlu0 %146
    %156 = vrot.lane.b32.xlu0 %v100, 32
    %v157 = vpop.permute.xlu0 %156
    %158 = vrot.lane.b32.xlu0 %v101, 32
    %v159 = vpop.permute.xlu0 %158
    %160 = vrot.lane.b32.xlu0 %v102, 32
    %v161 = vpop.permute.xlu0 %160
    %162 = vrot.lane.b32.xlu0 %v103, 32
    %v163 = vpop.permute.xlu0 %162
    %vm168 = vcmask 261120
    %v169 = vsel %vm168, %v75, %v109
    %v170 = vsel %vm168, %v76, %v111
    %v171 = vsel %vm168, %v77, %v113
    %v172 = vsel %vm168, %v78, %v115
    %vm173 = vcmask 523264
    %v174 = vsel %vm173, %v169, %v125
    %v175 = vsel %vm173, %v170, %v127
    %v176 = vsel %vm173, %v171, %v129
    %v177 = vsel %vm173, %v172, %v131
    %vm178 = vcmask 785408
    %v179 = vsel %vm178, %v174, %v141
    %v180 = vsel %vm178, %v175, %v143
    %v181 = vsel %vm178, %v176, %v145
    %v182 = vsel %vm178, %v177, %v147
    %v183 = vsel %vm168, %v95, %v157
    %v184 = vsel %vm168, %v96, %v159
    %v185 = vsel %vm168, %v97, %v161
    %v186 = vsel %vm168, %v98, %v163
    %v187 = vld [vmem:[#allocation5] sm:$0xff]
    %v188 = vld [vmem:[#allocation5 + $0x8] sm:$0xff]
    %v189 = vld [vmem:[#allocation5 + $0x10] sm:$0xff]
    %v190 = vld [vmem:[#allocation5 + $0x18] sm:$0xff]
    %s191 = scalar_lea.vmem [#allocation5], 32
    %v192 = vld [vmem:[%s191] sm:$0xff]
    %v193 = vld [vmem:[%s191 + $0x8] sm:$0xff]
    %v194 = vld [vmem:[%s191 + $0x10] sm:$0xff]
    %v195 = vld [vmem:[%s191 + $0x18] sm:$0xff]
    %s196 = scalar_lea.vmem [#allocation5], 64
    %v197 = vld [vmem:[%s196] sm:$0xff]
    %v198 = vld [vmem:[%s196 + $0x8] sm:$0xff]
    %v199 = vld [vmem:[%s196 + $0x10] sm:$0xff]
    %v200 = vld [vmem:[%s196 + $0x18] sm:$0xff]
    %s201 = scalar_lea.vmem [#allocation5], 96
    %v202 = vld [vmem:[%s201] sm:$0xff]
    %v203 = vld [vmem:[%s201 + $0x8] sm:$0xff]
    %v204 = vld [vmem:[%s201 + $0x10] sm:$0xff]
    %v205 = vld [vmem:[%s201 + $0x18] sm:$0xff]
    %s206 = scalar_lea.vmem [#allocation5], 128
    %v207 = vld [vmem:[%s206] sm:$0xff]
    %v208 = vld [vmem:[%s206 + $0x8] sm:$0xff]
    %v209 = vld [vmem:[%s206 + $0x10] sm:$0xff]
    %v210 = vld [vmem:[%s206 + $0x18] sm:$0xff]
    %s211 = scalar_lea.vmem [#allocation5], 160
    %v212 = vld [vmem:[%s211] sm:$0xff]
    %v213 = vld [vmem:[%s211 + $0x8] sm:$0xff]
    %v214 = vld [vmem:[%s211 + $0x10] sm:$0xff]
    %v215 = vld [vmem:[%s211 + $0x18] sm:$0xff]
    %220 = vrot.lane.b32.xlu0 %v192, 32
    %v221 = vpop.permute.xlu0 %220
    %222 = vrot.lane.b32.xlu0 %v193, 32
    %v223 = vpop.permute.xlu0 %222
    %224 = vrot.lane.b32.xlu0 %v194, 32
    %v225 = vpop.permute.xlu0 %224
    %226 = vrot.lane.b32.xlu0 %v195, 32
    %v227 = vpop.permute.xlu0 %226
    %236 = vrot.lane.b32.xlu0 %v197, 64
    %v237 = vpop.permute.xlu0 %236
    %238 = vrot.lane.b32.xlu0 %v198, 64
    %v239 = vpop.permute.xlu0 %238
    %240 = vrot.lane.b32.xlu0 %v199, 64
    %v241 = vpop.permute.xlu0 %240
    %242 = vrot.lane.b32.xlu0 %v200, 64
    %v243 = vpop.permute.xlu0 %242
    %252 = vrot.lane.b32.xlu0 %v202, 96
    %v253 = vpop.permute.xlu0 %252
    %254 = vrot.lane.b32.xlu0 %v203, 96
    %v255 = vpop.permute.xlu0 %254
    %256 = vrot.lane.b32.xlu0 %v204, 96
    %v257 = vpop.permute.xlu0 %256
    %258 = vrot.lane.b32.xlu0 %v205, 96
    %v259 = vpop.permute.xlu0 %258
    %268 = vrot.lane.b32.xlu0 %v212, 32
    %v269 = vpop.permute.xlu0 %268
    %270 = vrot.lane.b32.xlu0 %v213, 32
    %v271 = vpop.permute.xlu0 %270
    %272 = vrot.lane.b32.xlu0 %v214, 32
    %v273 = vpop.permute.xlu0 %272
    %274 = vrot.lane.b32.xlu0 %v215, 32
    %v275 = vpop.permute.xlu0 %274
    %v280 = vsel %vm168, %v187, %v221
    %v281 = vsel %vm168, %v188, %v223
    %v282 = vsel %vm168, %v189, %v225
    %v283 = vsel %vm168, %v190, %v227
    %v284 = vsel %vm173, %v280, %v237
    %v285 = vsel %vm173, %v281, %v239
    %v286 = vsel %vm173, %v282, %v241
    %v287 = vsel %vm173, %v283, %v243
    %v288 = vsel %vm178, %v284, %v253
    %v289 = vsel %vm178, %v285, %v255
    %v290 = vsel %vm178, %v286, %v257
    %v291 = vsel %vm178, %v287, %v259
    %v292 = vsel %vm168, %v207, %v269
    %v293 = vsel %vm168, %v208, %v271
    %v294 = vsel %vm168, %v209, %v273
    %v295 = vsel %vm168, %v210, %v275
    %v296 = vsub.f32 %v179, %v288
    %v297 = vsub.f32 %v183, %v292
    %v298 = vsub.f32 %v180, %v289
    %v299 = vsub.f32 %v184, %v293
    %v300 = vsub.f32 %v181, %v290
    %v301 = vsub.f32 %v185, %v294
    %v302 = vsub.f32 %v182, %v291
    %v303 = vsub.f32 %v186, %v295
    %v304 = vand.u32 2147483647, %v296
    %v305 = vand.u32 2147483647, %v297
    %v306 = vand.u32 2147483647, %v298
    %v307 = vand.u32 2147483647, %v299
    %v308 = vand.u32 2147483647, %v300
    %v309 = vand.u32 2147483647, %v301
    %v310 = vand.u32 2147483647, %v302
    %v311 = vand.u32 2147483647, %v303
    %v312 = vsel %vm173, %v305, 0.0
    %v313 = vadd.f32 %v304, %v312
    %v314 = vadd.f32 %v313, %v306
    %v315 = vsel %vm173, %v307, 0.0
    %v316 = vadd.f32 %v314, %v315
    %v317 = vadd.f32 %v316, %v308
    %v318 = vsel %vm173, %v309, 0.0
    %v319 = vadd.f32 %v317, %v318
    %v320 = vadd.f32 %v319, %v310
    %v321 = vsel %vm173, %v311, 0.0
    %v322 = vadd.f32 %v320, %v321
    %323 = vadd.xlane.f32.xlu0 %v322
    %v324 = vpop.xlane.xlu0 %323
    %v325 = vrot.slane %v324, 4
    %v326 = vadd.f32 %v324, %v325
    %v327 = vrot.slane %v326, 2
    %v328 = vadd.f32 %v326, %v327
    %v329 = vrot.slane %v328, 1
    %v330 = vadd.f32 %v328, %v329
    %s331 = vtos %v330
    %v332 = vrcp.pop 6144.0
    %s333 = vtos %v332
    %s334 = smul.f32 %s331, %s333
    %s335 = scalar_lea.smem [#allocation10], 0
    %336 = sst [smem:[%s335]] %s334
    %v337 = vld [vmem:[#allocation7] sm:$0xff]
    %v338 = vld [vmem:[#allocation7 + $0x20] sm:$0xff]
    %v339 = vld [vmem:[#allocation7 + $0x40] sm:$0xff]
    %v340 = vld [vmem:[#allocation7 + $0x60] sm:$0xff]
    %v341 = vld [vmem:[#allocation7 + $0x80] sm:$0xff]
    %v342 = vld [vmem:[#allocation7 + $0xa0] sm:$0xff]
    %v343 = vld [vmem:[#allocation7 + $0xc0] sm:$0xff]
    %v344 = vld [vmem:[#allocation7 + $0xe0] sm:$0xff]
    %v345 = vld [vmem:[#allocation7 + $0x100] sm:$0xff]
    %v346 = vld [vmem:[#allocation7 + $0x120] sm:$0xff]
    %v347 = vld [vmem:[#allocation7 + $0x140] sm:$0xff]
    %v348 = vld [vmem:[#allocation7 + $0x160] sm:$0xff]
    %v349 = vld [vmem:[#allocation7 + $0x180] sm:$0xff]
    %v350 = vld [vmem:[#allocation7 + $0x1a0] sm:$0xff]
    %v351 = vld [vmem:[#allocation7 + $0x1c0] sm:$0xff]
    %v352 = vld [vmem:[#allocation7 + $0x1e0] sm:$0xff]
    %v353 = vld [vmem:[#allocation7 + $0x200] sm:$0xff]
    %v354 = vld [vmem:[#allocation7 + $0x208] sm:$0xff]
    %v355 = vld [vmem:[#allocation7 + $0x210] sm:$0xff]
    %v356 = vld [vmem:[#allocation7 + $0x220] sm:$0xff]
    %v357 = vld [vmem:[#allocation7 + $0x228] sm:$0xff]
    %v358 = vld [vmem:[#allocation7 + $0x230] sm:$0xff]
    %v359 = vld [vmem:[#allocation7 + $0x240] sm:$0xff]
    %v360 = vld [vmem:[#allocation7 + $0x248] sm:$0xff]
    %v361 = vld [vmem:[#allocation7 + $0x250] sm:$0xff]
    %v362 = vld [vmem:[#allocation7 + $0x260] sm:$0xff]
    %v363 = vld [vmem:[#allocation7 + $0x268] sm:$0xff]
    %v364 = vld [vmem:[#allocation7 + $0x270] sm:$0xff]
    %v365 = vld [vmem:[#allocation7 + $0x280] sm:$0xff]
    %v366 = vld [vmem:[#allocation7 + $0x288] sm:$0xff]
    %v367 = vld [vmem:[#allocation7 + $0x290] sm:$0xff]
    %v368 = vld [vmem:[#allocation7 + $0x2a0] sm:$0xff]
    %v369 = vld [vmem:[#allocation7 + $0x2a8] sm:$0xff]
    %v370 = vld [vmem:[#allocation7 + $0x2b0] sm:$0xff]
    %v371 = vld [vmem:[#allocation7 + $0x2c0] sm:$0xff]
    %v372 = vld [vmem:[#allocation7 + $0x2c8] sm:$0xff]
    %v373 = vld [vmem:[#allocation7 + $0x2d0] sm:$0xff]
    %v374 = vld [vmem:[#allocation7 + $0x2e0] sm:$0xff]
    %v375 = vld [vmem:[#allocation7 + $0x2e8] sm:$0xff]
    %v376 = vld [vmem:[#allocation7 + $0x2f0] sm:$0xff]
    %v377 = vld [vmem:[#allocation7 + $0x300] sm:$0xff]
    %v378 = vld [vmem:[#allocation7 + $0x308] sm:$0xff]
    %v379 = vld [vmem:[#allocation7 + $0x310] sm:$0xff]
    %v380 = vld [vmem:[#allocation7 + $0x320] sm:$0xff]
    %v381 = vld [vmem:[#allocation7 + $0x328] sm:$0xff]
    %v382 = vld [vmem:[#allocation7 + $0x330] sm:$0xff]
    %v383 = vld [vmem:[#allocation7 + $0x340] sm:$0xff]
    %v384 = vld [vmem:[#allocation7 + $0x348] sm:$0xff]
    %v385 = vld [vmem:[#allocation7 + $0x350] sm:$0xff]
    %v386 = vld [vmem:[#allocation7 + $0x360] sm:$0xff]
    %v387 = vld [vmem:[#allocation7 + $0x368] sm:$0xff]
    %v388 = vld [vmem:[#allocation7 + $0x370] sm:$0xff]
    %v389 = vld [vmem:[#allocation7 + $0x380] sm:$0xff]
    %v390 = vld [vmem:[#allocation7 + $0x388] sm:$0xff]
    %v391 = vld [vmem:[#allocation7 + $0x390] sm:$0xff]
    %v392 = vld [vmem:[#allocation7 + $0x3a0] sm:$0xff]
    %v393 = vld [vmem:[#allocation7 + $0x3a8] sm:$0xff]
    %v394 = vld [vmem:[#allocation7 + $0x3b0] sm:$0xff]
    %v395 = vld [vmem:[#allocation7 + $0x3c0] sm:$0xff]
    %v396 = vld [vmem:[#allocation7 + $0x3c8] sm:$0xff]
    %v397 = vld [vmem:[#allocation7 + $0x3d0] sm:$0xff]
    %v398 = vld [vmem:[#allocation7 + $0x3e0] sm:$0xff]
    %v399 = vld [vmem:[#allocation7 + $0x3e8] sm:$0xff]
    %v400 = vld [vmem:[#allocation7 + $0x3f0] sm:$0xff]
    %v401 = vld [vmem:[#allocation7 + $0x400] sm:$0xff]
    %v402 = vld [vmem:[#allocation7 + $0x408] sm:$0xff]
    %v403 = vld [vmem:[#allocation7 + $0x410] sm:$0xff]
    %v404 = vld [vmem:[#allocation7 + $0x420] sm:$0xff]
    %v405 = vld [vmem:[#allocation7 + $0x428] sm:$0xff]
    %v406 = vld [vmem:[#allocation7 + $0x430] sm:$0xff]
    %v407 = vld [vmem:[#allocation7 + $0x440] sm:$0xff]
    %v408 = vld [vmem:[#allocation7 + $0x448] sm:$0xff]
    %v409 = vld [vmem:[#allocation7 + $0x450] sm:$0xff]
    %v410 = vld [vmem:[#allocation7 + $0x460] sm:$0xff]
    %v411 = vld [vmem:[#allocation7 + $0x468] sm:$0xff]
    %v412 = vld [vmem:[#allocation7 + $0x470] sm:$0xff]
    %v413 = vld [vmem:[#allocation7 + $0x480] sm:$0xff]
    %v414 = vld [vmem:[#allocation7 + $0x488] sm:$0xff]
    %v415 = vld [vmem:[#allocation7 + $0x490] sm:$0xff]
    %v416 = vld [vmem:[#allocation7 + $0x4a0] sm:$0xff]
    %v417 = vld [vmem:[#allocation7 + $0x4a8] sm:$0xff]
    %v418 = vld [vmem:[#allocation7 + $0x4b0] sm:$0xff]
    %v419 = vld [vmem:[#allocation7 + $0x4c0] sm:$0xff]
    %v420 = vld [vmem:[#allocation7 + $0x4c8] sm:$0xff]
    %v421 = vld [vmem:[#allocation7 + $0x4d0] sm:$0xff]
    %v422 = vld [vmem:[#allocation7 + $0x4e0] sm:$0xff]
    %v423 = vld [vmem:[#allocation7 + $0x4e8] sm:$0xff]
    %v424 = vld [vmem:[#allocation7 + $0x4f0] sm:$0xff]
    %v425 = vld [vmem:[#allocation7 + $0x500] sm:$0xff]
    %v426 = vld [vmem:[#allocation7 + $0x508] sm:$0xff]
    %v427 = vld [vmem:[#allocation7 + $0x510] sm:$0xff]
    %v428 = vld [vmem:[#allocation7 + $0x518] sm:$0xff]
    %v429 = vld [vmem:[#allocation7 + $0x520] sm:$0xff]
    %v430 = vld [vmem:[#allocation7 + $0x528] sm:$0xff]
    %v431 = vld [vmem:[#allocation7 + $0x530] sm:$0xff]
    %v432 = vld [vmem:[#allocation7 + $0x538] sm:$0xff]
    %v433 = vld [vmem:[#allocation7 + $0x540] sm:$0xff]
    %v434 = vld [vmem:[#allocation7 + $0x548] sm:$0xff]
    %v435 = vld [vmem:[#allocation7 + $0x550] sm:$0xff]
    %v436 = vld [vmem:[#allocation7 + $0x558] sm:$0xff]
    %v437 = vld [vmem:[#allocation7 + $0x560] sm:$0xff]
    %v438 = vld [vmem:[#allocation7 + $0x568] sm:$0xff]
    %v439 = vld [vmem:[#allocation7 + $0x570] sm:$0xff]
    %v440 = vld [vmem:[#allocation7 + $0x578] sm:$0xff]
    %v441 = vld [vmem:[#allocation7 + $0x580] sm:$0xff]
    %v442 = vld [vmem:[#allocation7 + $0x588] sm:$0xff]
    %v443 = vld [vmem:[#allocation7 + $0x590] sm:$0xff]
    %v444 = vld [vmem:[#allocation7 + $0x598] sm:$0xff]
    %v445 = vld [vmem:[#allocation7 + $0x5a0] sm:$0xff]
    %v446 = vld [vmem:[#allocation7 + $0x5a8] sm:$0xff]
    %v447 = vld [vmem:[#allocation7 + $0x5b0] sm:$0xff]
    %v448 = vld [vmem:[#allocation7 + $0x5b8] sm:$0xff]
    %v449 = vld [vmem:[#allocation7 + $0x5c0] sm:$0xff]
    %v450 = vld [vmem:[#allocation7 + $0x5c8] sm:$0xff]
    %v451 = vld [vmem:[#allocation7 + $0x5d0] sm:$0xff]
    %v452 = vld [vmem:[#allocation7 + $0x5d8] sm:$0xff]
    %v453 = vld [vmem:[#allocation7 + $0x5e0] sm:$0xff]
    %v454 = vld [vmem:[#allocation7 + $0x5e8] sm:$0xff]
    %v455 = vld [vmem:[#allocation7 + $0x5f0] sm:$0xff]
    %v456 = vld [vmem:[#allocation7 + $0x5f8] sm:$0xff]
    %v457 = vld [vmem:[#allocation7 + $0x600] sm:$0xff]
    %v458 = vld [vmem:[#allocation7 + $0x608] sm:$0xff]
    %v459 = vld [vmem:[#allocation7 + $0x610] sm:$0xff]
    %v460 = vld [vmem:[#allocation7 + $0x618] sm:$0xff]
    %v461 = vld [vmem:[#allocation7 + $0x620] sm:$0xff]
    %v462 = vld [vmem:[#allocation7 + $0x628] sm:$0xff]
    %v463 = vld [vmem:[#allocation7 + $0x630] sm:$0xff]
    %v464 = vld [vmem:[#allocation7 + $0x638] sm:$0xff]
    %v465 = vld [vmem:[#allocation7 + $0x640] sm:$0xff]
    %v466 = vld [vmem:[#allocation7 + $0x648] sm:$0xff]
    %v467 = vld [vmem:[#allocation7 + $0x650] sm:$0xff]
    %v468 = vld [vmem:[#allocation7 + $0x658] sm:$0xff]
    %v469 = vld [vmem:[#allocation7 + $0x660] sm:$0xff]
    %v470 = vld [vmem:[#allocation7 + $0x668] sm:$0xff]
    %v471 = vld [vmem:[#allocation7 + $0x670] sm:$0xff]
    %v472 = vld [vmem:[#allocation7 + $0x678] sm:$0xff]
    %v473 = vld [vmem:[#allocation7 + $0x680] sm:$0xff]
    %v474 = vld [vmem:[#allocation7 + $0x688] sm:$0xff]
    %v475 = vld [vmem:[#allocation7 + $0x690] sm:$0xff]
    %v476 = vld [vmem:[#allocation7 + $0x698] sm:$0xff]
    %v477 = vld [vmem:[#allocation7 + $0x6a0] sm:$0xff]
    %v478 = vld [vmem:[#allocation7 + $0x6a8] sm:$0xff]
    %v479 = vld [vmem:[#allocation7 + $0x6b0] sm:$0xff]
    %v480 = vld [vmem:[#allocation7 + $0x6b8] sm:$0xff]
    %v481 = vld [vmem:[#allocation7 + $0x6c0] sm:$0xff]
    %v482 = vld [vmem:[#allocation7 + $0x6c8] sm:$0xff]
    %v483 = vld [vmem:[#allocation7 + $0x6d0] sm:$0xff]
    %v484 = vld [vmem:[#allocation7 + $0x6d8] sm:$0xff]
    %v485 = vld [vmem:[#allocation7 + $0x6e0] sm:$0xff]
    %v486 = vld [vmem:[#allocation7 + $0x6e8] sm:$0xff]
    %v487 = vld [vmem:[#allocation7 + $0x6f0] sm:$0xff]
    %v488 = vld [vmem:[#allocation7 + $0x6f8] sm:$0xff]
    %v489 = vld [vmem:[#allocation7 + $0x700] sm:$0xff]
    %v490 = vld [vmem:[#allocation7 + $0x708] sm:$0xff]
    %v491 = vld [vmem:[#allocation7 + $0x710] sm:$0xff]
    %v492 = vld [vmem:[#allocation7 + $0x718] sm:$0xff]
    %v493 = vld [vmem:[#allocation7 + $0x720] sm:$0xff]
    %v494 = vld [vmem:[#allocation7 + $0x728] sm:$0xff]
    %v495 = vld [vmem:[#allocation7 + $0x730] sm:$0xff]
    %v496 = vld [vmem:[#allocation7 + $0x738] sm:$0xff]
    %v497 = vld [vmem:[#allocation7 + $0x740] sm:$0xff]
    %v498 = vld [vmem:[#allocation7 + $0x748] sm:$0xff]
    %v499 = vld [vmem:[#allocation7 + $0x750] sm:$0xff]
    %v500 = vld [vmem:[#allocation7 + $0x758] sm:$0xff]
    %v501 = vld [vmem:[#allocation7 + $0x760] sm:$0xff]
    %v502 = vld [vmem:[#allocation7 + $0x768] sm:$0xff]
    %v503 = vld [vmem:[#allocation7 + $0x770] sm:$0xff]
    %v504 = vld [vmem:[#allocation7 + $0x778] sm:$0xff]
    %v505 = vld [vmem:[#allocation7 + $0x780] sm:$0xff]
    %v506 = vld [vmem:[#allocation7 + $0x788] sm:$0xff]
    %v507 = vld [vmem:[#allocation7 + $0x790] sm:$0xff]
    %v508 = vld [vmem:[#allocation7 + $0x798] sm:$0xff]
    %v509 = vld [vmem:[#allocation7 + $0x7a0] sm:$0xff]
    %v510 = vld [vmem:[#allocation7 + $0x7a8] sm:$0xff]
    %v511 = vld [vmem:[#allocation7 + $0x7b0] sm:$0xff]
    %v512 = vld [vmem:[#allocation7 + $0x7b8] sm:$0xff]
    %v513 = vld [vmem:[#allocation7 + $0x7c0] sm:$0xff]
    %v514 = vld [vmem:[#allocation7 + $0x7c8] sm:$0xff]
    %v515 = vld [vmem:[#allocation7 + $0x7d0] sm:$0xff]
    %v516 = vld [vmem:[#allocation7 + $0x7d8] sm:$0xff]
    %v517 = vld [vmem:[#allocation7 + $0x7e0] sm:$0xff]
    %v518 = vld [vmem:[#allocation7 + $0x7e8] sm:$0xff]
    %v519 = vld [vmem:[#allocation7 + $0x7f0] sm:$0xff]
    %v520 = vld [vmem:[#allocation7 + $0x7f8] sm:$0xff]
    %v521 = vld [vmem:[#allocation7 + $0x800] sm:$0xff]
    %v522 = vld [vmem:[#allocation7 + $0x808] sm:$0xff]
    %v523 = vld [vmem:[#allocation7 + $0x810] sm:$0xff]
    %v524 = vld [vmem:[#allocation7 + $0x818] sm:$0xff]
    %v525 = vld [vmem:[#allocation7 + $0x820] sm:$0xff]
    %v526 = vld [vmem:[#allocation7 + $0x828] sm:$0xff]
    %v527 = vld [vmem:[#allocation7 + $0x830] sm:$0xff]
    %v528 = vld [vmem:[#allocation7 + $0x838] sm:$0xff]
    %v529 = vld [vmem:[#allocation7 + $0x840] sm:$0xff]
    %v530 = vld [vmem:[#allocation7 + $0x848] sm:$0xff]
    %v531 = vld [vmem:[#allocation7 + $0x850] sm:$0xff]
    %v532 = vld [vmem:[#allocation7 + $0x858] sm:$0xff]
    %v533 = vld [vmem:[#allocation7 + $0x860] sm:$0xff]
    %v534 = vld [vmem:[#allocation7 + $0x868] sm:$0xff]
    %v535 = vld [vmem:[#allocation7 + $0x870] sm:$0xff]
    %v536 = vld [vmem:[#allocation7 + $0x878] sm:$0xff]
    %v537 = vld [vmem:[#allocation7 + $0x880] sm:$0xff]
    %v538 = vld [vmem:[#allocation7 + $0x888] sm:$0xff]
    %v539 = vld [vmem:[#allocation7 + $0x890] sm:$0xff]
    %v540 = vld [vmem:[#allocation7 + $0x898] sm:$0xff]
    %v541 = vld [vmem:[#allocation7 + $0x8a0] sm:$0xff]
    %v542 = vld [vmem:[#allocation7 + $0x8a8] sm:$0xff]
    %v543 = vld [vmem:[#allocation7 + $0x8b0] sm:$0xff]
    %v544 = vld [vmem:[#allocation7 + $0x8b8] sm:$0xff]
    %v545 = vld [vmem:[#allocation7 + $0x8c0] sm:$0xff]
    %v546 = vld [vmem:[#allocation7 + $0x8c8] sm:$0xff]
    %v547 = vld [vmem:[#allocation7 + $0x8d0] sm:$0xff]
    %v548 = vld [vmem:[#allocation7 + $0x8d8] sm:$0xff]
    %v549 = vld [vmem:[#allocation7 + $0x8e0] sm:$0xff]
    %v550 = vld [vmem:[#allocation7 + $0x8e8] sm:$0xff]
    %v551 = vld [vmem:[#allocation7 + $0x8f0] sm:$0xff]
    %v552 = vld [vmem:[#allocation7 + $0x8f8] sm:$0xff]
    %v553 = vld [vmem:[#allocation7 + $0x900] sm:$0xff]
    %v554 = vld [vmem:[#allocation7 + $0x908] sm:$0xff]
    %v555 = vld [vmem:[#allocation7 + $0x910] sm:$0xff]
    %v556 = vld [vmem:[#allocation7 + $0x918] sm:$0xff]
    %v557 = vld [vmem:[#allocation7 + $0x920] sm:$0xff]
    %v558 = vld [vmem:[#allocation7 + $0x928] sm:$0xff]
    %v559 = vld [vmem:[#allocation7 + $0x930] sm:$0xff]
    %v560 = vld [vmem:[#allocation7 + $0x938] sm:$0xff]
    %v561 = vld [vmem:[#allocation7 + $0x940] sm:$0xff]
    %v562 = vld [vmem:[#allocation7 + $0x948] sm:$0xff]
    %v563 = vld [vmem:[#allocation7 + $0x950] sm:$0xff]
    %v564 = vld [vmem:[#allocation7 + $0x958] sm:$0xff]
    %v565 = vld [vmem:[#allocation7 + $0x960] sm:$0xff]
    %v566 = vld [vmem:[#allocation7 + $0x968] sm:$0xff]
    %v567 = vld [vmem:[#allocation7 + $0x970] sm:$0xff]
    %v568 = vld [vmem:[#allocation7 + $0x978] sm:$0xff]
    %v569 = vld [vmem:[#allocation7 + $0x980] sm:$0xff]
    %v570 = vld [vmem:[#allocation7 + $0x988] sm:$0xff]
    %v571 = vld [vmem:[#allocation7 + $0x990] sm:$0xff]
    %v572 = vld [vmem:[#allocation7 + $0x998] sm:$0xff]
    %v573 = vld [vmem:[#allocation7 + $0x9a0] sm:$0xff]
    %v574 = vld [vmem:[#allocation7 + $0x9a8] sm:$0xff]
    %v575 = vld [vmem:[#allocation7 + $0x9b0] sm:$0xff]
    %v576 = vld [vmem:[#allocation7 + $0x9b8] sm:$0xff]
    %v577 = vld [vmem:[#allocation7 + $0x9c0] sm:$0xff]
    %v578 = vld [vmem:[#allocation7 + $0x9c8] sm:$0xff]
    %v579 = vld [vmem:[#allocation7 + $0x9d0] sm:$0xff]
    %v580 = vld [vmem:[#allocation7 + $0x9d8] sm:$0xff]
    %v581 = vld [vmem:[#allocation7 + $0x9e0] sm:$0xff]
    %v582 = vld [vmem:[#allocation7 + $0x9e8] sm:$0xff]
    %v583 = vld [vmem:[#allocation7 + $0x9f0] sm:$0xff]
    %v584 = vld [vmem:[#allocation7 + $0x9f8] sm:$0xff]
    %v585 = vld [vmem:[#allocation7 + $0xa00] sm:$0xff]
    %v586 = vld [vmem:[#allocation7 + $0xa08] sm:$0xff]
    %v587 = vld [vmem:[#allocation7 + $0xa10] sm:$0xff]
    %v588 = vld [vmem:[#allocation7 + $0xa18] sm:$0xff]
    %v589 = vld [vmem:[#allocation7 + $0xa20] sm:$0xff]
    %v590 = vld [vmem:[#allocation7 + $0xa28] sm:$0xff]
    %v591 = vld [vmem:[#allocation7 + $0xa30] sm:$0xff]
    %v592 = vld [vmem:[#allocation7 + $0xa38] sm:$0xff]
    %v593 = vld [vmem:[#allocation7 + $0xa40] sm:$0xff]
    %v594 = vld [vmem:[#allocation7 + $0xa48] sm:$0xff]
    %v595 = vld [vmem:[#allocation7 + $0xa50] sm:$0xff]
    %v596 = vld [vmem:[#allocation7 + $0xa58] sm:$0xff]
    %v597 = vld [vmem:[#allocation7 + $0xa60] sm:$0xff]
    %v598 = vld [vmem:[#allocation7 + $0xa68] sm:$0xff]
    %v599 = vld [vmem:[#allocation7 + $0xa70] sm:$0xff]
    %v600 = vld [vmem:[#allocation7 + $0xa78] sm:$0xff]
    %v601 = vld [vmem:[#allocation7 + $0xa80] sm:$0xff]
    %v602 = vld [vmem:[#allocation7 + $0xa88] sm:$0xff]
    %v603 = vld [vmem:[#allocation7 + $0xa90] sm:$0xff]
    %v604 = vld [vmem:[#allocation7 + $0xa98] sm:$0xff]
    %v605 = vld [vmem:[#allocation7 + $0xaa0] sm:$0xff]
    %v606 = vld [vmem:[#allocation7 + $0xaa8] sm:$0xff]
    %v607 = vld [vmem:[#allocation7 + $0xab0] sm:$0xff]
    %v608 = vld [vmem:[#allocation7 + $0xab8] sm:$0xff]
    %v609 = vld [vmem:[#allocation7 + $0xac0] sm:$0xf]
    %v610 = vld [vmem:[#allocation7 + $0xac8] sm:$0xf]
    %v611 = vld [vmem:[#allocation7 + $0xad0] sm:$0xf]
    %v612 = vld [vmem:[#allocation7 + $0xad8] sm:$0xf]
    %v613 = vld [vmem:[#allocation7 + $0xae0] sm:$0xff]
    %v614 = vld [vmem:[#allocation7 + $0xae8] sm:$0xff]
    %v615 = vld [vmem:[#allocation7 + $0xaf0] sm:$0xff]
    %v616 = vld [vmem:[#allocation7 + $0xb00] sm:$0xff]
    %v617 = vld [vmem:[#allocation7 + $0xb08] sm:$0xff]
    %v618 = vld [vmem:[#allocation7 + $0xb10] sm:$0xff]
    %v619 = vld [vmem:[#allocation7 + $0xb20] sm:$0xff]
    %v620 = vld [vmem:[#allocation7 + $0xb28] sm:$0xff]
    %v621 = vld [vmem:[#allocation7 + $0xb30] sm:$0xff]
    %v622 = vld [vmem:[#allocation7 + $0xb40] sm:$0xff]
    %v623 = vld [vmem:[#allocation7 + $0xb48] sm:$0xff]
    %v624 = vld [vmem:[#allocation7 + $0xb50] sm:$0xff]
    %v625 = vld [vmem:[#allocation7 + $0xb60] sm:$0xff]
    %v626 = vld [vmem:[#allocation7 + $0xb68] sm:$0xff]
    %v627 = vld [vmem:[#allocation7 + $0xb70] sm:$0xff]
    %v628 = vld [vmem:[#allocation7 + $0xb80] sm:$0xff]
    %v629 = vld [vmem:[#allocation7 + $0xb88] sm:$0xff]
    %v630 = vld [vmem:[#allocation7 + $0xb90] sm:$0xff]
    %v631 = vld [vmem:[#allocation7 + $0xba0] sm:$0xff]
    %v632 = vld [vmem:[#allocation7 + $0xba8] sm:$0xff]
    %v633 = vld [vmem:[#allocation7 + $0xbb0] sm:$0xff]
    %v634 = vld [vmem:[#allocation7 + $0xbc0] sm:$0xff]
    %v635 = vld [vmem:[#allocation7 + $0xbc8] sm:$0xff]
    %v636 = vld [vmem:[#allocation7 + $0xbd0] sm:$0xff]
    %v637 = vld [vmem:[#allocation7 + $0xbe0] sm:$0xff]
    %v638 = vld [vmem:[#allocation7 + $0xbe8] sm:$0xff]
    %v639 = vld [vmem:[#allocation7 + $0xbf0] sm:$0xff]
    %v640 = vld [vmem:[#allocation7 + $0xc00] sm:$0xff]
    %v641 = vld [vmem:[#allocation7 + $0xc08] sm:$0xff]
    %v642 = vld [vmem:[#allocation7 + $0xc10] sm:$0xff]
    %v643 = vld [vmem:[#allocation7 + $0xc20] sm:$0xff]
    %v644 = vld [vmem:[#allocation7 + $0xc28] sm:$0xff]
    %v645 = vld [vmem:[#allocation7 + $0xc30] sm:$0xff]
    %v646 = vld [vmem:[#allocation7 + $0xc40] sm:$0xff]
    %v647 = vld [vmem:[#allocation7 + $0xc48] sm:$0xff]
    %v648 = vld [vmem:[#allocation7 + $0xc50] sm:$0xff]
    %v649 = vld [vmem:[#allocation7 + $0xc60] sm:$0xff]
    %v650 = vld [vmem:[#allocation7 + $0xc68] sm:$0xff]
    %v651 = vld [vmem:[#allocation7 + $0xc70] sm:$0xff]
    %v652 = vld [vmem:[#allocation7 + $0xc80] sm:$0xff]
    %v653 = vld [vmem:[#allocation7 + $0xc88] sm:$0xff]
    %v654 = vld [vmem:[#allocation7 + $0xc90] sm:$0xff]
    %v655 = vld [vmem:[#allocation7 + $0xca0] sm:$0xff]
    %v656 = vld [vmem:[#allocation7 + $0xca8] sm:$0xff]
    %v657 = vld [vmem:[#allocation7 + $0xcb0] sm:$0xff]
    %v658 = vld [vmem:[#allocation7 + $0xcc0] sm:$0xff]
    %v659 = vld [vmem:[#allocation7 + $0xcc8] sm:$0xff]
    %v660 = vld [vmem:[#allocation7 + $0xcd0] sm:$0xff]
    %v661 = vld [vmem:[#allocation7 + $0xce0] sm:$0xff]
    %v662 = vld [vmem:[#allocation7 + $0xce8] sm:$0xff]
    %v663 = vld [vmem:[#allocation7 + $0xcf0] sm:$0xff]
    %v664 = vld [vmem:[#allocation7 + $0xd00] sm:$0xff]
    %v665 = vld [vmem:[#allocation7 + $0xd08] sm:$0xff]
    %v666 = vld [vmem:[#allocation7 + $0xd10] sm:$0xff]
    %v667 = vld [vmem:[#allocation7 + $0xd20] sm:$0xff]
    %v668 = vld [vmem:[#allocation7 + $0xd28] sm:$0xff]
    %v669 = vld [vmem:[#allocation7 + $0xd30] sm:$0xff]
    %v670 = vld [vmem:[#allocation7 + $0xd40] sm:$0xff]
    %v671 = vld [vmem:[#allocation7 + $0xd48] sm:$0xff]
    %v672 = vld [vmem:[#allocation7 + $0xd50] sm:$0xff]
    %v673 = vld [vmem:[#allocation7 + $0xd60] sm:$0xff]
    %v674 = vld [vmem:[#allocation7 + $0xd68] sm:$0xff]
    %v675 = vld [vmem:[#allocation7 + $0xd70] sm:$0xff]
    %v676 = vld [vmem:[#allocation7 + $0xd80] sm:$0xff]
    %v677 = vld [vmem:[#allocation7 + $0xd88] sm:$0xff]
    %v678 = vld [vmem:[#allocation7 + $0xd90] sm:$0xff]
    %v679 = vld [vmem:[#allocation7 + $0xda0] sm:$0xff]
    %v680 = vld [vmem:[#allocation7 + $0xda8] sm:$0xff]
    %v681 = vld [vmem:[#allocation7 + $0xdb0] sm:$0xff]
    %v682 = vld [vmem:[#allocation7 + $0xdc0] sm:$0xff]
    %v683 = vld [vmem:[#allocation7 + $0xdc8] sm:$0xff]
    %v684 = vld [vmem:[#allocation7 + $0xdd0] sm:$0xff]
    %v685 = vld [vmem:[#allocation7 + $0xde0] sm:$0xff]
    %v686 = vld [vmem:[#allocation7 + $0xde8] sm:$0xff]
    %v687 = vld [vmem:[#allocation7 + $0xdf0] sm:$0xff]
    %v688 = vld [vmem:[#allocation7 + $0xe00] sm:$0xff]
    %v689 = vld [vmem:[#allocation7 + $0xe08] sm:$0xff]
    %v690 = vld [vmem:[#allocation7 + $0xe10] sm:$0xff]
    %v691 = vld [vmem:[#allocation7 + $0xe20] sm:$0xff]
    %v692 = vld [vmem:[#allocation7 + $0xe28] sm:$0xff]
    %v693 = vld [vmem:[#allocation7 + $0xe30] sm:$0xff]
    %v694 = vld [vmem:[#allocation7 + $0xe40] sm:$0xff]
    %v695 = vld [vmem:[#allocation7 + $0xe48] sm:$0xff]
    %v696 = vld [vmem:[#allocation7 + $0xe50] sm:$0xff]
    %v697 = vld [vmem:[#allocation7 + $0xe60] sm:$0xff]
    %v698 = vld [vmem:[#allocation7 + $0xe68] sm:$0xff]
    %v699 = vld [vmem:[#allocation7 + $0xe70] sm:$0xff]
    %v700 = vld [vmem:[#allocation7 + $0xe80] sm:$0xff]
    %v701 = vld [vmem:[#allocation7 + $0xe88] sm:$0xff]
    %v702 = vld [vmem:[#allocation7 + $0xe90] sm:$0xff]
    %v703 = vld [vmem:[#allocation7 + $0xea0] sm:$0xff]
    %v704 = vld [vmem:[#allocation7 + $0xea8] sm:$0xff]
    %v705 = vld [vmem:[#allocation7 + $0xeb0] sm:$0xff]
    %v706 = vld [vmem:[#allocation7 + $0xec0] sm:$0xff]
    %v707 = vld [vmem:[#allocation7 + $0xec8] sm:$0xff]
    %v708 = vld [vmem:[#allocation7 + $0xed0] sm:$0xff]
    %v709 = vld [vmem:[#allocation7 + $0xee0] sm:$0xff]
    %v710 = vld [vmem:[#allocation7 + $0xee8] sm:$0xff]
    %v711 = vld [vmem:[#allocation7 + $0xef0] sm:$0xff]
    %v712 = vld [vmem:[#allocation7 + $0xf00] sm:$0xff]
    %v713 = vld [vmem:[#allocation7 + $0xf08] sm:$0xff]
    %v714 = vld [vmem:[#allocation7 + $0xf10] sm:$0xff]
    %v715 = vld [vmem:[#allocation7 + $0xf20] sm:$0xff]
    %v716 = vld [vmem:[#allocation7 + $0xf28] sm:$0xff]
    %v717 = vld [vmem:[#allocation7 + $0xf30] sm:$0xff]
    %v718 = vld [vmem:[#allocation7 + $0xf40] sm:$0xff]
    %v719 = vld [vmem:[#allocation7 + $0xf48] sm:$0xff]
    %v720 = vld [vmem:[#allocation7 + $0xf50] sm:$0xff]
    %v721 = vld [vmem:[#allocation7 + $0xf60] sm:$0xff]
    %v722 = vld [vmem:[#allocation7 + $0xf68] sm:$0xff]
    %v723 = vld [vmem:[#allocation7 + $0xf70] sm:$0xff]
    %v724 = vld [vmem:[#allocation7 + $0xf80] sm:$0xff]
    %v725 = vld [vmem:[#allocation7 + $0xf88] sm:$0xff]
    %v726 = vld [vmem:[#allocation7 + $0xf90] sm:$0xff]
    %v727 = vld [vmem:[#allocation7 + $0xfa0] sm:$0xff]
    %v728 = vld [vmem:[#allocation7 + $0xfa8] sm:$0xff]
    %v729 = vld [vmem:[#allocation7 + $0xfb0] sm:$0xff]
    %v730 = vld [vmem:[#allocation7 + $0xfc0] sm:$0xff]
    %v731 = vld [vmem:[#allocation7 + $0xfc8] sm:$0xff]
    %v732 = vld [vmem:[#allocation7 + $0xfd0] sm:$0xff]
    %v733 = vld [vmem:[#allocation7 + $0xfe0] sm:$0xff]
    %v734 = vld [vmem:[#allocation7 + $0xfe8] sm:$0xff]
    %v735 = vld [vmem:[#allocation7 + $0xff0] sm:$0xff]
    %v736 = vld [vmem:[#allocation7 + $0x1000] sm:$0xff]
    %v737 = vld [vmem:[#allocation7 + $0x1008] sm:$0xff]
    %v738 = vld [vmem:[#allocation7 + $0x1010] sm:$0xff]
    %v739 = vld [vmem:[#allocation7 + $0x1020] sm:$0xff]
    %v740 = vld [vmem:[#allocation7 + $0x1028] sm:$0xff]
    %v741 = vld [vmem:[#allocation7 + $0x1030] sm:$0xff]
    %v742 = vld [vmem:[#allocation7 + $0x1040] sm:$0xff]
    %v743 = vld [vmem:[#allocation7 + $0x1048] sm:$0xff]
    %v744 = vld [vmem:[#allocation7 + $0x1050] sm:$0xff]
    %v745 = vld [vmem:[#allocation7 + $0x1060] sm:$0xff]
    %v746 = vld [vmem:[#allocation7 + $0x1068] sm:$0xff]
    %v747 = vld [vmem:[#allocation7 + $0x1070] sm:$0xff]
    %v748 = vld [vmem:[#allocation7 + $0x1080] sm:$0xff]
    %v749 = vld [vmem:[#allocation7 + $0x1088] sm:$0xff]
    %v750 = vld [vmem:[#allocation7 + $0x10a0] sm:$0xff]
    %v751 = vld [vmem:[#allocation7 + $0x10a8] sm:$0xff]
    %v752 = vld [vmem:[#allocation8] sm:$0xff]
    %v753 = vld [vmem:[#allocation8 + $0x8] sm:$0xff]
    %v754 = vld [vmem:[#allocation8 + $0x10] sm:$0xff]
    %v755 = vld [vmem:[#allocation8 + $0x18] sm:$0xff]
    %v756 = vld [vmem:[#allocation8 + $0x20] sm:$0xff]
    %v757 = vld [vmem:[#allocation8 + $0x28] sm:$0xff]
    %v758 = vld [vmem:[#allocation8 + $0x30] sm:$0xff]
    %v759 = vld [vmem:[#allocation8 + $0x38] sm:$0xff]
    %v760 = vld [vmem:[#allocation8 + $0x40] sm:$0xff]
    %v761 = vld [vmem:[#allocation8 + $0x48] sm:$0xff]
    %v762 = vld [vmem:[#allocation8 + $0x50] sm:$0xff]
    %v763 = vld [vmem:[#allocation8 + $0x58] sm:$0xff]
    %v764 = vld [vmem:[#allocation8 + $0x60] sm:$0xff]
    %v765 = vld [vmem:[#allocation8 + $0x68] sm:$0xff]
    %v766 = vld [vmem:[#allocation8 + $0x70] sm:$0xff]
    %v767 = vld [vmem:[#allocation8 + $0x78] sm:$0xff]
    %v768 = vld [vmem:[#allocation8 + $0x80] sm:$0xff]
    %v769 = vld [vmem:[#allocation8 + $0x88] sm:$0xff]
    %v770 = vld [vmem:[#allocation8 + $0x90] sm:$0xff]
    %v771 = vld [vmem:[#allocation8 + $0x98] sm:$0xff]
    %v772 = vld [vmem:[#allocation8 + $0xa0] sm:$0xff]
    %v773 = vld [vmem:[#allocation8 + $0xa8] sm:$0xff]
    %v774 = vld [vmem:[#allocation8 + $0xb0] sm:$0xff]
    %v775 = vld [vmem:[#allocation8 + $0xb8] sm:$0xff]
    %v776 = vld [vmem:[#allocation8 + $0xc0] sm:$0xff]
    %v777 = vld [vmem:[#allocation8 + $0xc8] sm:$0xff]
    %v778 = vld [vmem:[#allocation8 + $0xd0] sm:$0xff]
    %v779 = vld [vmem:[#allocation8 + $0xd8] sm:$0xff]
    %v780 = vld [vmem:[#allocation8 + $0xe0] sm:$0xff]
    %v781 = vld [vmem:[#allocation8 + $0xe8] sm:$0xff]
    %v782 = vld [vmem:[#allocation8 + $0xf0] sm:$0xff]
    %v783 = vld [vmem:[#allocation8 + $0xf8] sm:$0xff]
    %v784 = vld [vmem:[#allocation8 + $0x100] sm:$0xff]
    %v785 = vld [vmem:[#allocation8 + $0x108] sm:$0xff]
    %v786 = vld [vmem:[#allocation8 + $0x110] sm:$0xff]
    %v787 = vld [vmem:[#allocation8 + $0x118] sm:$0xff]
    %v788 = vld [vmem:[#allocation8 + $0x120] sm:$0xff]
    %v789 = vld [vmem:[#allocation8 + $0x128] sm:$0xff]
    %v790 = vld [vmem:[#allocation8 + $0x130] sm:$0xff]
    %v791 = vld [vmem:[#allocation8 + $0x138] sm:$0xff]
    %v792 = vld [vmem:[#allocation8 + $0x140] sm:$0xff]
    %v793 = vld [vmem:[#allocation8 + $0x148] sm:$0xff]
    %v794 = vld [vmem:[#allocation8 + $0x150] sm:$0xff]
    %v795 = vld [vmem:[#allocation8 + $0x158] sm:$0xff]
    %v796 = vld [vmem:[#allocation8 + $0x160] sm:$0xff]
    %v797 = vld [vmem:[#allocation8 + $0x168] sm:$0xff]
    %v798 = vld [vmem:[#allocation8 + $0x170] sm:$0xff]
    %v799 = vld [vmem:[#allocation8 + $0x178] sm:$0xff]
    %v800 = vld [vmem:[#allocation8 + $0x180] sm:$0x3f]
    %v802 = vsel %vm173, %v183, 0
    %v805 = vsel %vm173, %v184, 0
    %v808 = vsel %vm173, %v185, 0
    %v811 = vsel %vm173, %v186, 0
    %v814 = vsel %vm173, %v292, 0
    %v817 = vsel %vm173, %v293, 0
    %v820 = vsel %vm173, %v294, 0
    %v823 = vsel %vm173, %v295, 0
    %825 = vmatprep.subr.mxu0 %v399
    %826 = vmatpush1.msra.mxu0 %v398
    %827 = vmatprep.subr.mxu0 %v396
    %828 = vmatpush1.msra.mxu0 %v395
    %829 = vmatprep.subr.mxu0 %v393
    %830 = vmatpush1.msra.mxu0 %v392
    %831 = vmatprep.subr.mxu0 %v390
    %832 = vmatpush1.msra.mxu0 %v389
    %833 = vmatprep.subr.mxu0 %v387
    %834 = vmatpush1.msra.mxu0 %v386
    %835 = vmatprep.subr.mxu0 %v384
    %836 = vmatpush1.msra.mxu0 %v383
    %837 = vmatprep.subr.mxu0 %v381
    %838 = vmatpush1.msra.mxu0 %v380
    %839 = vmatprep.subr.mxu0 %v378
    %840 = vmatpush1.msra.mxu0 %v377
    %841 = vmatprep.subr.mxu0 %v375
    %842 = vmatpush1.msra.mxu0 %v374
    %843 = vmatprep.subr.mxu0 %v372
    %844 = vmatpush1.msra.mxu0 %v371
    %845 = vmatprep.subr.mxu0 %v369
    %846 = vmatpush1.msra.mxu0 %v368
    %847 = vmatprep.subr.mxu0 %v366
    %848 = vmatpush1.msra.mxu0 %v365
    %849 = vmatprep.subr.mxu0 %v363
    %850 = vmatpush1.msra.mxu0 %v362
    %851 = vmatprep.subr.mxu0 %v360
    %852 = vmatpush1.msra.mxu0 %v359
    %853 = vmatprep.subr.mxu0 %v357
    %854 = vmatpush1.msra.mxu0 %v356
    %855 = vmatprep.subr.mxu0 %v354
    %856 = vmatpush1.msra.mxu0 %v353
    %857 = vmatprep.subr.mxu0 0.0
    %858 = vmatpush2.msra.mxu0 0.0
    %859 = vmatprep.subr.mxu0 0.0
    %860 = vmatpush2.msra.mxu0 0.0
    %861 = vmatprep.subr.mxu0 0.0
    %862 = vmatpush2.msra.mxu0 0.0
    %863 = vmatprep.subr.mxu0 0.0
    %864 = vmatpush2.msra.mxu0 0.0
    %865 = vmatprep.subr.mxu0 0.0
    %866 = vmatpush2.msra.mxu0 0.0
    %867 = vmatprep.subr.mxu0 0.0
    %868 = vmatpush2.msra.mxu0 0.0
    %869 = vmatprep.subr.mxu0 0.0
    %870 = vmatpush2.msra.mxu0 0.0
    %871 = vmatprep.subr.mxu0 0.0
    %872 = vmatpush2.msra.mxu0 0.0
    %873 = vmatprep.subr.mxu0 %v423
    %874 = vmatpush2.msra.mxu0 %v422
    %875 = vmatprep.subr.mxu0 %v420
    %876 = vmatpush2.msra.mxu0 %v419
    %877 = vmatprep.subr.mxu0 %v417
    %878 = vmatpush2.msra.mxu0 %v416
    %879 = vmatprep.subr.mxu0 %v414
    %880 = vmatpush2.msra.mxu0 %v413
    %881 = vmatprep.subr.mxu0 %v411
    %882 = vmatpush2.msra.mxu0 %v410
    %883 = vmatprep.subr.mxu0 %v408
    %884 = vmatpush2.msra.mxu0 %v407
    %885 = vmatprep.subr.mxu0 %v405
    %886 = vmatpush2.msra.mxu0 %v404
    %887 = vmatprep.subr.mxu0 %v402
    %888 = vmatpush2.msra.mxu0 %v401
    %889 = vmatprep.mubr.f32.mxu0 %v802
    %890 = vmatmul.mubr.f32.gmra.mxu0 %v179
    %v891 = vpop.f32.mrf.mxu0
    %v892 = vadd.f32 0.0, %v891
    %v893 = vpop.f32.mrf.mxu0
    %v894 = vadd.f32 0.0, %v893
    %895 = vmatprep.mubr.f32.mxu0 %v805
    %896 = vmatmul.mubr.f32.gmra.mxu0 %v180
    %v897 = vpop.f32.mrf.mxu0
    %v898 = vadd.f32 0.0, %v897
    %v899 = vpop.f32.mrf.mxu0
    %v900 = vadd.f32 0.0, %v899
    %901 = vmatprep.mubr.f32.mxu0 %v808
    %902 = vmatmul.mubr.f32.gmra.mxu0 %v181
    %v903 = vpop.f32.mrf.mxu0
    %v904 = vadd.f32 0.0, %v903
    %v905 = vpop.f32.mrf.mxu0
    %v906 = vadd.f32 0.0, %v905
    %907 = vmatprep.mubr.f32.mxu0 %v811
    %908 = vmatmul.mubr.f32.gmra.mxu0 %v182
    %v909 = vpop.f32.mrf.mxu0
    %v910 = vadd.f32 0.0, %v909
    %v911 = vpop.f32.mrf.mxu0
    %v912 = vadd.f32 0.0, %v911
    %913 = vmatprep.mubr.f32.mxu0 %v814
    %914 = vmatmul.mubr.f32.gmra.mxu0 %v288
    %v915 = vpop.f32.mrf.mxu0
    %v916 = vadd.f32 0.0, %v915
    %v917 = vpop.f32.mrf.mxu0
    %v918 = vadd.f32 0.0, %v917
    %919 = vmatprep.mubr.f32.mxu0 %v817
    %920 = vmatmul.mubr.f32.gmra.mxu0 %v289
    %v921 = vpop.f32.mrf.mxu0
    %v922 = vadd.f32 0.0, %v921
    %v923 = vpop.f32.mrf.mxu0
    %v924 = vadd.f32 0.0, %v923
    %925 = vmatprep.mubr.f32.mxu0 %v820
    %926 = vmatmul.mubr.f32.gmra.mxu0 %v290
    %v927 = vpop.f32.mrf.mxu0
    %v928 = vadd.f32 0.0, %v927
    %v929 = vpop.f32.mrf.mxu0
    %v930 = vadd.f32 0.0, %v929
    %931 = vmatprep.mubr.f32.mxu0 %v823
    %932 = vmatmul.mubr.f32.gmra.mxu0 %v291
    %v933 = vpop.f32.mrf.mxu0
    %v934 = vadd.f32 0.0, %v933
    %v935 = vpop.f32.mrf.mxu0
    %v936 = vadd.f32 0.0, %v935
    %937 = vdwg.mxu0
    %938 = vmatprep.subr.mxu0 0.0
    %939 = vmatpush1.msra.mxu0 %v400
    %940 = vmatprep.subr.mxu0 0.0
    %941 = vmatpush1.msra.mxu0 %v397
    %942 = vmatprep.subr.mxu0 0.0
    %943 = vmatpush1.msra.mxu0 %v394
    %944 = vmatprep.subr.mxu0 0.0
    %945 = vmatpush1.msra.mxu0 %v391
    %946 = vmatprep.subr.mxu0 0.0
    %947 = vmatpush1.msra.mxu0 %v388
    %948 = vmatprep.subr.mxu0 0.0
    %949 = vmatpush1.msra.mxu0 %v385
    %950 = vmatprep.subr.mxu0 0.0
    %951 = vmatpush1.msra.mxu0 %v382
    %952 = vmatprep.subr.mxu0 0.0
    %953 = vmatpush1.msra.mxu0 %v379
    %954 = vmatprep.subr.mxu0 0.0
    %955 = vmatpush1.msra.mxu0 %v376
    %956 = vmatprep.subr.mxu0 0.0
    %957 = vmatpush1.msra.mxu0 %v373
    %958 = vmatprep.subr.mxu0 0.0
    %959 = vmatpush1.msra.mxu0 %v370
    %960 = vmatprep.subr.mxu0 0.0
    %961 = vmatpush1.msra.mxu0 %v367
    %962 = vmatprep.subr.mxu0 0.0
    %963 = vmatpush1.msra.mxu0 %v364
    %964 = vmatprep.subr.mxu0 0.0
    %965 = vmatpush1.msra.mxu0 %v361
    %966 = vmatprep.subr.mxu0 0.0
    %967 = vmatpush1.msra.mxu0 %v358
    %968 = vmatprep.subr.mxu0 0.0
    %969 = vmatpush1.msra.mxu0 %v355
    %970 = vmatprep.subr.mxu0 0.0
    %971 = vmatpush2.msra.mxu0 0.0
    %972 = vmatprep.subr.mxu0 0.0
    %973 = vmatpush2.msra.mxu0 0.0
    %974 = vmatprep.subr.mxu0 0.0
    %975 = vmatpush2.msra.mxu0 0.0
    %976 = vmatprep.subr.mxu0 0.0
    %977 = vmatpush2.msra.mxu0 0.0
    %978 = vmatprep.subr.mxu0 0.0
    %979 = vmatpush2.msra.mxu0 0.0
    %980 = vmatprep.subr.mxu0 0.0
    %981 = vmatpush2.msra.mxu0 0.0
    %982 = vmatprep.subr.mxu0 0.0
    %983 = vmatpush2.msra.mxu0 0.0
    %984 = vmatprep.subr.mxu0 0.0
    %985 = vmatpush2.msra.mxu0 0.0
    %986 = vmatprep.subr.mxu0 0.0
    %987 = vmatpush2.msra.mxu0 %v424
    %988 = vmatprep.subr.mxu0 0.0
    %989 = vmatpush2.msra.mxu0 %v421
    %990 = vmatprep.subr.mxu0 0.0
    %991 = vmatpush2.msra.mxu0 %v418
    %992 = vmatprep.subr.mxu0 0.0
    %993 = vmatpush2.msra.mxu0 %v415
    %994 = vmatprep.subr.mxu0 0.0
    %995 = vmatpush2.msra.mxu0 %v412
    %996 = vmatprep.subr.mxu0 0.0
    %997 = vmatpush2.msra.mxu0 %v409
    %998 = vmatprep.subr.mxu0 0.0
    %999 = vmatpush2.msra.mxu0 %v406
    %1000 = vmatprep.subr.mxu0 0.0
    %1001 = vmatpush2.msra.mxu0 %v403
    %1002 = vmatprep.mubr.f32.mxu0 %v802
    %1003 = vmatmul.mubr.f32.gmra.mxu0 %v179
    %v1004 = vpop.f32.mrf.mxu0
    %v1005 = vadd.f32 0.0, %v1004
    %v1006 = vpop.f32.mrf.mxu0
    %1007 = vmatprep.mubr.f32.mxu0 %v805
    %1008 = vmatmul.mubr.f32.gmra.mxu0 %v180
    %v1009 = vpop.f32.mrf.mxu0
    %v1010 = vadd.f32 0.0, %v1009
    %v1011 = vpop.f32.mrf.mxu0
    %1012 = vmatprep.mubr.f32.mxu0 %v808
    %1013 = vmatmul.mubr.f32.gmra.mxu0 %v181
    %v1014 = vpop.f32.mrf.mxu0
    %v1015 = vadd.f32 0.0, %v1014
    %v1016 = vpop.f32.mrf.mxu0
    %1017 = vmatprep.mubr.f32.mxu0 %v811
    %1018 = vmatmul.mubr.f32.gmra.mxu0 %v182
    %v1019 = vpop.f32.mrf.mxu0
    %v1020 = vadd.f32 0.0, %v1019
    %v1021 = vpop.f32.mrf.mxu0
    %1022 = vmatprep.mubr.f32.mxu0 %v814
    %1023 = vmatmul.mubr.f32.gmra.mxu0 %v288
    %v1024 = vpop.f32.mrf.mxu0
    %v1025 = vadd.f32 0.0, %v1024
    %v1026 = vpop.f32.mrf.mxu0
    %1027 = vmatprep.mubr.f32.mxu0 %v817
    %1028 = vmatmul.mubr.f32.gmra.mxu0 %v289
    %v1029 = vpop.f32.mrf.mxu0
    %v1030 = vadd.f32 0.0, %v1029
    %v1031 = vpop.f32.mrf.mxu0
    %1032 = vmatprep.mubr.f32.mxu0 %v820
    %1033 = vmatmul.mubr.f32.gmra.mxu0 %v290
    %v1034 = vpop.f32.mrf.mxu0
    %v1035 = vadd.f32 0.0, %v1034
    %v1036 = vpop.f32.mrf.mxu0
    %1037 = vmatprep.mubr.f32.mxu0 %v823
    %1038 = vmatmul.mubr.f32.gmra.mxu0 %v291
    %v1039 = vpop.f32.mrf.mxu0
    %v1040 = vadd.f32 0.0, %v1039
    %v1041 = vpop.f32.mrf.mxu0
    %1042 = vdwg.mxu0
    %v1044 = vsel %vm173, %v337, 0
    %v1047 = vsel %vm173, %v338, 0
    %v1050 = vsel %vm173, %v339, 0
    %v1053 = vsel %vm173, %v340, 0
    %v1056 = vsel %vm173, %v341, 0
    %v1059 = vsel %vm173, %v342, 0
    %v1062 = vsel %vm173, %v343, 0
    %v1065 = vsel %vm173, %v344, 0
    %v1068 = vsel %vm173, %v345, 0
    %v1071 = vsel %vm173, %v346, 0
    %v1074 = vsel %vm173, %v347, 0
    %v1077 = vsel %vm173, %v348, 0
    %v1080 = vsel %vm173, %v349, 0
    %v1083 = vsel %vm173, %v350, 0
    %v1086 = vsel %vm173, %v351, 0
    %v1089 = vsel %vm173, %v352, 0
    %1091 = vmatprep.subr.mxu0 0.0
    %1092 = vmatpush1.msra.mxu0 0.0
    %1093 = vmatprep.subr.mxu0 0.0
    %1094 = vmatpush1.msra.mxu0 0.0
    %1095 = vmatprep.subr.mxu0 0.0
    %1096 = vmatpush1.msra.mxu0 0.0
    %1097 = vmatprep.subr.mxu0 0.0
    %1098 = vmatpush1.msra.mxu0 0.0
    %1099 = vmatprep.subr.mxu0 0.0
    %1100 = vmatpush1.msra.mxu0 0.0
    %1101 = vmatprep.subr.mxu0 0.0
    %1102 = vmatpush1.msra.mxu0 0.0
    %1103 = vmatprep.subr.mxu0 0.0
    %1104 = vmatpush1.msra.mxu0 0.0
    %1105 = vmatprep.subr.mxu0 0.0
    %1106 = vmatpush1.msra.mxu0 0.0
    %1107 = vmatprep.subr.mxu0 %v936
    %1108 = vmatpush1.msra.mxu0 %v934
    %1109 = vmatprep.subr.mxu0 %v930
    %1110 = vmatpush1.msra.mxu0 %v928
    %1111 = vmatprep.subr.mxu0 %v924
    %1112 = vmatpush1.msra.mxu0 %v922
    %1113 = vmatprep.subr.mxu0 %v918
    %1114 = vmatpush1.msra.mxu0 %v916
    %1115 = vmatprep.subr.mxu0 %v912
    %1116 = vmatpush1.msra.mxu0 %v910
    %1117 = vmatprep.subr.mxu0 %v906
    %1118 = vmatpush1.msra.mxu0 %v904
    %1119 = vmatprep.subr.mxu0 %v900
    %1120 = vmatpush1.msra.mxu0 %v898
    %1121 = vmatprep.subr.mxu0 %v894
    %1122 = vmatpush1.msra.mxu0 %v892
    %1123 = vmatprep.subr.mxu0 0.0
    %1124 = vmatpush2.msra.mxu0 0.0
    %1125 = vmatprep.subr.mxu0 0.0
    %1126 = vmatpush2.msra.mxu0 0.0
    %1127 = vmatprep.subr.mxu0 0.0
    %1128 = vmatpush2.msra.mxu0 0.0
    %1129 = vmatprep.subr.mxu0 0.0
    %1130 = vmatpush2.msra.mxu0 0.0
    %1131 = vmatprep.subr.mxu0 0.0
    %1132 = vmatpush2.msra.mxu0 0.0
    %1133 = vmatprep.subr.mxu0 0.0
    %1134 = vmatpush2.msra.mxu0 0.0
    %1135 = vmatprep.subr.mxu0 0.0
    %1136 = vmatpush2.msra.mxu0 0.0
    %1137 = vmatprep.subr.mxu0 0.0
    %1138 = vmatpush2.msra.mxu0 0.0
    %1139 = vmatprep.subr.mxu0 0.0
    %1140 = vmatpush2.msra.mxu0 0.0
    %1141 = vmatprep.subr.mxu0 0.0
    %1142 = vmatpush2.msra.mxu0 0.0
    %1143 = vmatprep.subr.mxu0 0.0
    %1144 = vmatpush2.msra.mxu0 0.0
    %1145 = vmatprep.subr.mxu0 0.0
    %1146 = vmatpush2.msra.mxu0 0.0
    %1147 = vmatprep.subr.mxu0 0.0
    %1148 = vmatpush2.msra.mxu0 0.0
    %1149 = vmatprep.subr.mxu0 0.0
    %1150 = vmatpush2.msra.mxu0 0.0
    %1151 = vmatprep.subr.mxu0 0.0
    %1152 = vmatpush2.msra.mxu0 0.0
    %1153 = vmatprep.subr.mxu0 0.0
    %1154 = vmatpush2.msra.mxu0 0.0
    %1155 = vmatprep.mubr.f32.mxu0 0.0
    %1156 = vmatmul.mubr.f32.gmra.mxu0 %v1044
    %v1157 = vpop.f32.mrf.mxu0
    %v1158 = vadd.f32 0.0, %v1157
    %v1159 = vpop.f32.mrf.mxu0
    %v1160 = vadd.f32 0.0, %v1159
    %1161 = vmatprep.mubr.f32.mxu0 0.0
    %1162 = vmatmul.mubr.f32.gmra.mxu0 %v1047
    %v1163 = vpop.f32.mrf.mxu0
    %v1164 = vadd.f32 0.0, %v1163
    %v1165 = vpop.f32.mrf.mxu0
    %v1166 = vadd.f32 0.0, %v1165
    %1167 = vmatprep.mubr.f32.mxu0 0.0
    %1168 = vmatmul.mubr.f32.gmra.mxu0 %v1050
    %v1169 = vpop.f32.mrf.mxu0
    %v1170 = vadd.f32 0.0, %v1169
    %v1171 = vpop.f32.mrf.mxu0
    %v1172 = vadd.f32 0.0, %v1171
    %1173 = vmatprep.mubr.f32.mxu0 0.0
    %1174 = vmatmul.mubr.f32.gmra.mxu0 %v1053
    %v1175 = vpop.f32.mrf.mxu0
    %v1176 = vadd.f32 0.0, %v1175
    %v1177 = vpop.f32.mrf.mxu0
    %v1178 = vadd.f32 0.0, %v1177
    %1179 = vmatprep.mubr.f32.mxu0 0.0
    %1180 = vmatmul.mubr.f32.gmra.mxu0 %v1056
    %v1181 = vpop.f32.mrf.mxu0
    %v1182 = vadd.f32 0.0, %v1181
    %v1183 = vpop.f32.mrf.mxu0
    %v1184 = vadd.f32 0.0, %v1183
    %1185 = vmatprep.mubr.f32.mxu0 0.0
    %1186 = vmatmul.mubr.f32.gmra.mxu0 %v1059
    %v1187 = vpop.f32.mrf.mxu0
    %v1188 = vadd.f32 0.0, %v1187
    %v1189 = vpop.f32.mrf.mxu0
    %v1190 = vadd.f32 0.0, %v1189
    %1191 = vmatprep.mubr.f32.mxu0 0.0
    %1192 = vmatmul.mubr.f32.gmra.mxu0 %v1062
    %v1193 = vpop.f32.mrf.mxu0
    %v1194 = vadd.f32 0.0, %v1193
    %v1195 = vpop.f32.mrf.mxu0
    %v1196 = vadd.f32 0.0, %v1195
    %1197 = vmatprep.mubr.f32.mxu0 0.0
    %1198 = vmatmul.mubr.f32.gmra.mxu0 %v1065
    %v1199 = vpop.f32.mrf.mxu0
    %v1200 = vadd.f32 0.0, %v1199
    %v1201 = vpop.f32.mrf.mxu0
    %v1202 = vadd.f32 0.0, %v1201
    %1203 = vmatprep.mubr.f32.mxu0 0.0
    %1204 = vmatmul.mubr.f32.gmra.mxu0 %v1068
    %v1205 = vpop.f32.mrf.mxu0
    %v1206 = vadd.f32 0.0, %v1205
    %v1207 = vpop.f32.mrf.mxu0
    %v1208 = vadd.f32 0.0, %v1207
    %1209 = vmatprep.mubr.f32.mxu0 0.0
    %1210 = vmatmul.mubr.f32.gmra.mxu0 %v1071
    %v1211 = vpop.f32.mrf.mxu0
    %v1212 = vadd.f32 0.0, %v1211
    %v1213 = vpop.f32.mrf.mxu0
    %v1214 = vadd.f32 0.0, %v1213
    %1215 = vmatprep.mubr.f32.mxu0 0.0
    %1216 = vmatmul.mubr.f32.gmra.mxu0 %v1074
    %v1217 = vpop.f32.mrf.mxu0
    %v1218 = vadd.f32 0.0, %v1217
    %v1219 = vpop.f32.mrf.mxu0
    %v1220 = vadd.f32 0.0, %v1219
    %1221 = vmatprep.mubr.f32.mxu0 0.0
    %1222 = vmatmul.mubr.f32.gmra.mxu0 %v1077
    %v1223 = vpop.f32.mrf.mxu0
    %v1224 = vadd.f32 0.0, %v1223
    %v1225 = vpop.f32.mrf.mxu0
    %v1226 = vadd.f32 0.0, %v1225
    %1227 = vmatprep.mubr.f32.mxu0 0.0
    %1228 = vmatmul.mubr.f32.gmra.mxu0 %v1080
    %v1229 = vpop.f32.mrf.mxu0
    %v1230 = vadd.f32 0.0, %v1229
    %v1231 = vpop.f32.mrf.mxu0
    %v1232 = vadd.f32 0.0, %v1231
    %1233 = vmatprep.mubr.f32.mxu0 0.0
    %1234 = vmatmul.mubr.f32.gmra.mxu0 %v1083
    %v1235 = vpop.f32.mrf.mxu0
    %v1236 = vadd.f32 0.0, %v1235
    %v1237 = vpop.f32.mrf.mxu0
    %v1238 = vadd.f32 0.0, %v1237
    %1239 = vmatprep.mubr.f32.mxu0 0.0
    %1240 = vmatmul.mubr.f32.gmra.mxu0 %v1086
    %v1241 = vpop.f32.mrf.mxu0
    %v1242 = vadd.f32 0.0, %v1241
    %v1243 = vpop.f32.mrf.mxu0
    %v1244 = vadd.f32 0.0, %v1243
    %1245 = vmatprep.mubr.f32.mxu0 0.0
    %1246 = vmatmul.mubr.f32.gmra.mxu0 %v1089
    %v1247 = vpop.f32.mrf.mxu0
    %v1248 = vadd.f32 0.0, %v1247
    %v1249 = vpop.f32.mrf.mxu0
    %v1250 = vadd.f32 0.0, %v1249
    %1251 = vdwg.mxu0
    %1252 = vmatprep.subr.mxu0 0.0
    %1253 = vmatpush1.msra.mxu0 0.0
    %1254 = vmatprep.subr.mxu0 0.0
    %1255 = vmatpush1.msra.mxu0 0.0
    %1256 = vmatprep.subr.mxu0 0.0
    %1257 = vmatpush1.msra.mxu0 0.0
    %1258 = vmatprep.subr.mxu0 0.0
    %1259 = vmatpush1.msra.mxu0 0.0
    %1260 = vmatprep.subr.mxu0 0.0
    %1261 = vmatpush1.msra.mxu0 0.0
    %1262 = vmatprep.subr.mxu0 0.0
    %1263 = vmatpush1.msra.mxu0 0.0
    %1264 = vmatprep.subr.mxu0 0.0
    %1265 = vmatpush1.msra.mxu0 0.0
    %1266 = vmatprep.subr.mxu0 0.0
    %1267 = vmatpush1.msra.mxu0 0.0
    %1268 = vmatprep.subr.mxu0 0.0
    %1269 = vmatpush1.msra.mxu0 %v1040
    %1270 = vmatprep.subr.mxu0 0.0
    %1271 = vmatpush1.msra.mxu0 %v1035
    %1272 = vmatprep.subr.mxu0 0.0
    %1273 = vmatpush1.msra.mxu0 %v1030
    %1274 = vmatprep.subr.mxu0 0.0
    %1275 = vmatpush1.msra.mxu0 %v1025
    %1276 = vmatprep.subr.mxu0 0.0
    %1277 = vmatpush1.msra.mxu0 %v1020
    %1278 = vmatprep.subr.mxu0 0.0
    %1279 = vmatpush1.msra.mxu0 %v1015
    %1280 = vmatprep.subr.mxu0 0.0
    %1281 = vmatpush1.msra.mxu0 %v1010
    %1282 = vmatprep.subr.mxu0 0.0
    %1283 = vmatpush1.msra.mxu0 %v1005
    %1284 = vmatprep.subr.mxu0 0.0
    %1285 = vmatpush2.msra.mxu0 0.0
    %1286 = vmatprep.subr.mxu0 0.0
    %1287 = vmatpush2.msra.mxu0 0.0
    %1288 = vmatprep.subr.mxu0 0.0
    %1289 = vmatpush2.msra.mxu0 0.0
    %1290 = vmatprep.subr.mxu0 0.0
    %1291 = vmatpush2.msra.mxu0 0.0
    %1292 = vmatprep.subr.mxu0 0.0
    %1293 = vmatpush2.msra.mxu0 0.0
    %1294 = vmatprep.subr.mxu0 0.0
    %1295 = vmatpush2.msra.mxu0 0.0
    %1296 = vmatprep.subr.mxu0 0.0
    %1297 = vmatpush2.msra.mxu0 0.0
    %1298 = vmatprep.subr.mxu0 0.0
    %1299 = vmatpush2.msra.mxu0 0.0
    %1300 = vmatprep.subr.mxu0 0.0
    %1301 = vmatpush2.msra.mxu0 0.0
    %1302 = vmatprep.subr.mxu0 0.0
    %1303 = vmatpush2.msra.mxu0 0.0
    %1304 = vmatprep.subr.mxu0 0.0
    %1305 = vmatpush2.msra.mxu0 0.0
    %1306 = vmatprep.subr.mxu0 0.0
    %1307 = vmatpush2.msra.mxu0 0.0
    %1308 = vmatprep.subr.mxu0 0.0
    %1309 = vmatpush2.msra.mxu0 0.0
    %1310 = vmatprep.subr.mxu0 0.0
    %1311 = vmatpush2.msra.mxu0 0.0
    %1312 = vmatprep.subr.mxu0 0.0
    %1313 = vmatpush2.msra.mxu0 0.0
    %1314 = vmatprep.subr.mxu0 0.0
    %1315 = vmatpush2.msra.mxu0 0.0
    %1316 = vmatprep.mubr.f32.mxu0 0.0
    %1317 = vmatmul.mubr.f32.gmra.mxu0 %v1044
    %v1318 = vpop.f32.mrf.mxu0
    %v1319 = vadd.f32 0.0, %v1318
    %v1320 = vpop.f32.mrf.mxu0
    %1321 = vmatprep.mubr.f32.mxu0 0.0
    %1322 = vmatmul.mubr.f32.gmra.mxu0 %v1047
    %v1323 = vpop.f32.mrf.mxu0
    %v1324 = vadd.f32 0.0, %v1323
    %v1325 = vpop.f32.mrf.mxu0
    %1326 = vmatprep.mubr.f32.mxu0 0.0
    %1327 = vmatmul.mubr.f32.gmra.mxu0 %v1050
    %v1328 = vpop.f32.mrf.mxu0
    %v1329 = vadd.f32 0.0, %v1328
    %v1330 = vpop.f32.mrf.mxu0
    %1331 = vmatprep.mubr.f32.mxu0 0.0
    %1332 = vmatmul.mubr.f32.gmra.mxu0 %v1053
    %v1333 = vpop.f32.mrf.mxu0
    %v1334 = vadd.f32 0.0, %v1333
    %v1335 = vpop.f32.mrf.mxu0
    %1336 = vmatprep.mubr.f32.mxu0 0.0
    %1337 = vmatmul.mubr.f32.gmra.mxu0 %v1056
    %v1338 = vpop.f32.mrf.mxu0
    %v1339 = vadd.f32 0.0, %v1338
    %v1340 = vpop.f32.mrf.mxu0
    %1341 = vmatprep.mubr.f32.mxu0 0.0
    %1342 = vmatmul.mubr.f32.gmra.mxu0 %v1059
    %v1343 = vpop.f32.mrf.mxu0
    %v1344 = vadd.f32 0.0, %v1343
    %v1345 = vpop.f32.mrf.mxu0
    %1346 = vmatprep.mubr.f32.mxu0 0.0
    %1347 = vmatmul.mubr.f32.gmra.mxu0 %v1062
    %v1348 = vpop.f32.mrf.mxu0
    %v1349 = vadd.f32 0.0, %v1348
    %v1350 = vpop.f32.mrf.mxu0
    %1351 = vmatprep.mubr.f32.mxu0 0.0
    %1352 = vmatmul.mubr.f32.gmra.mxu0 %v1065
    %v1353 = vpop.f32.mrf.mxu0
    %v1354 = vadd.f32 0.0, %v1353
    %v1355 = vpop.f32.mrf.mxu0
    %1356 = vmatprep.mubr.f32.mxu0 0.0
    %1357 = vmatmul.mubr.f32.gmra.mxu0 %v1068
    %v1358 = vpop.f32.mrf.mxu0
    %v1359 = vadd.f32 0.0, %v1358
    %v1360 = vpop.f32.mrf.mxu0
    %1361 = vmatprep.mubr.f32.mxu0 0.0
    %1362 = vmatmul.mubr.f32.gmra.mxu0 %v1071
    %v1363 = vpop.f32.mrf.mxu0
    %v1364 = vadd.f32 0.0, %v1363
    %v1365 = vpop.f32.mrf.mxu0
    %1366 = vmatprep.mubr.f32.mxu0 0.0
    %1367 = vmatmul.mubr.f32.gmra.mxu0 %v1074
    %v1368 = vpop.f32.mrf.mxu0
    %v1369 = vadd.f32 0.0, %v1368
    %v1370 = vpop.f32.mrf.mxu0
    %1371 = vmatprep.mubr.f32.mxu0 0.0
    %1372 = vmatmul.mubr.f32.gmra.mxu0 %v1077
    %v1373 = vpop.f32.mrf.mxu0
    %v1374 = vadd.f32 0.0, %v1373
    %v1375 = vpop.f32.mrf.mxu0
    %1376 = vmatprep.mubr.f32.mxu0 0.0
    %1377 = vmatmul.mubr.f32.gmra.mxu0 %v1080
    %v1378 = vpop.f32.mrf.mxu0
    %v1379 = vadd.f32 0.0, %v1378
    %v1380 = vpop.f32.mrf.mxu0
    %1381 = vmatprep.mubr.f32.mxu0 0.0
    %1382 = vmatmul.mubr.f32.gmra.mxu0 %v1083
    %v1383 = vpop.f32.mrf.mxu0
    %v1384 = vadd.f32 0.0, %v1383
    %v1385 = vpop.f32.mrf.mxu0
    %1386 = vmatprep.mubr.f32.mxu0 0.0
    %1387 = vmatmul.mubr.f32.gmra.mxu0 %v1086
    %v1388 = vpop.f32.mrf.mxu0
    %v1389 = vadd.f32 0.0, %v1388
    %v1390 = vpop.f32.mrf.mxu0
    %1391 = vmatprep.mubr.f32.mxu0 0.0
    %1392 = vmatmul.mubr.f32.gmra.mxu0 %v1089
    %v1393 = vpop.f32.mrf.mxu0
    %v1394 = vadd.f32 0.0, %v1393
    %v1395 = vpop.f32.mrf.mxu0
    %1396 = vdwg.mxu0
    %v1397 = vmul.f32 %v1158, %v1158
    %v1398 = vmul.f32 %v1160, %v1160
    %v1399 = vmul.f32 %v1319, %v1319
    %v1400 = vmul.f32 %v1164, %v1164
    %v1401 = vmul.f32 %v1166, %v1166
    %v1402 = vmul.f32 %v1324, %v1324
    %v1403 = vmul.f32 %v1170, %v1170
    %v1404 = vmul.f32 %v1172, %v1172
    %v1405 = vmul.f32 %v1329, %v1329
    %v1406 = vmul.f32 %v1176, %v1176
    %v1407 = vmul.f32 %v1178, %v1178
    %v1408 = vmul.f32 %v1334, %v1334
    %v1409 = vmul.f32 %v1182, %v1182
    %v1410 = vmul.f32 %v1184, %v1184
    %v1411 = vmul.f32 %v1339, %v1339
    %v1412 = vmul.f32 %v1188, %v1188
    %v1413 = vmul.f32 %v1190, %v1190
    %v1414 = vmul.f32 %v1344, %v1344
    %v1415 = vmul.f32 %v1194, %v1194
    %v1416 = vmul.f32 %v1196, %v1196
    %v1417 = vmul.f32 %v1349, %v1349
    %v1418 = vmul.f32 %v1200, %v1200
    %v1419 = vmul.f32 %v1202, %v1202
    %v1420 = vmul.f32 %v1354, %v1354
    %v1421 = vmul.f32 %v1206, %v1206
    %v1422 = vmul.f32 %v1208, %v1208
    %v1423 = vmul.f32 %v1359, %v1359
    %v1424 = vmul.f32 %v1212, %v1212
    %v1425 = vmul.f32 %v1214, %v1214
    %v1426 = vmul.f32 %v1364, %v1364
    %v1427 = vmul.f32 %v1218, %v1218
    %v1428 = vmul.f32 %v1220, %v1220
    %v1429 = vmul.f32 %v1369, %v1369
    %v1430 = vmul.f32 %v1224, %v1224
    %v1431 = vmul.f32 %v1226, %v1226
    %v1432 = vmul.f32 %v1374, %v1374
    %v1433 = vmul.f32 %v1230, %v1230
    %v1434 = vmul.f32 %v1232, %v1232
    %v1435 = vmul.f32 %v1379, %v1379
    %v1436 = vmul.f32 %v1236, %v1236
    %v1437 = vmul.f32 %v1238, %v1238
    %v1438 = vmul.f32 %v1384, %v1384
    %v1439 = vmul.f32 %v1242, %v1242
    %v1440 = vmul.f32 %v1244, %v1244
    %v1441 = vmul.f32 %v1389, %v1389
    %v1442 = vmul.f32 %v1248, %v1248
    %v1443 = vmul.f32 %v1250, %v1250
    %v1444 = vmul.f32 %v1394, %v1394
    %v1445 = vmul.f32 %v1158, %v1206
    %v1446 = vmul.f32 %v1160, %v1208
    %v1447 = vmul.f32 %v1319, %v1359
    %v1448 = vmul.f32 %v1164, %v1212
    %v1449 = vmul.f32 %v1166, %v1214
    %v1450 = vmul.f32 %v1324, %v1364
    %v1451 = vmul.f32 %v1170, %v1218
    %v1452 = vmul.f32 %v1172, %v1220
    %v1453 = vmul.f32 %v1329, %v1369
    %v1454 = vmul.f32 %v1176, %v1224
    %v1455 = vmul.f32 %v1178, %v1226
    %v1456 = vmul.f32 %v1334, %v1374
    %v1457 = vmul.f32 %v1182, %v1230
    %v1458 = vmul.f32 %v1184, %v1232
    %v1459 = vmul.f32 %v1339, %v1379
    %v1460 = vmul.f32 %v1188, %v1236
    %v1461 = vmul.f32 %v1190, %v1238
    %v1462 = vmul.f32 %v1344, %v1384
    %v1463 = vmul.f32 %v1194, %v1242
    %v1464 = vmul.f32 %v1196, %v1244
    %v1465 = vmul.f32 %v1349, %v1389
    %v1466 = vmul.f32 %v1200, %v1248
    %v1467 = vmul.f32 %v1202, %v1250
    %v1468 = vmul.f32 %v1354, %v1394
    %vm1469 = vcmask 949248
    %v1471 = vsel %vm1469, %v1319, 0
    %v1474 = vsel %vm1469, %v1324, 0
    %v1477 = vsel %vm1469, %v1329, 0
    %v1480 = vsel %vm1469, %v1334, 0
    %v1483 = vsel %vm1469, %v1339, 0
    %v1486 = vsel %vm1469, %v1344, 0
    %v1489 = vsel %vm1469, %v1349, 0
    %v1492 = vsel %vm1469, %v1354, 0
    %v1495 = vsel %vm1469, %v1359, 0
    %v1498 = vsel %vm1469, %v1364, 0
    %v1501 = vsel %vm1469, %v1369, 0
    %v1504 = vsel %vm1469, %v1374, 0
    %v1507 = vsel %vm1469, %v1379, 0
    %v1510 = vsel %vm1469, %v1384, 0
    %v1513 = vsel %vm1469, %v1389, 0
    %v1516 = vsel %vm1469, %v1394, 0
    %v1519 = vsel %vm1469, %v1399, 0
    %v1522 = vsel %vm1469, %v1402, 0
    %v1525 = vsel %vm1469, %v1405, 0
    %v1528 = vsel %vm1469, %v1408, 0
    %v1531 = vsel %vm1469, %v1411, 0
    %v1534 = vsel %vm1469, %v1414, 0
    %v1537 = vsel %vm1469, %v1417, 0
    %v1540 = vsel %vm1469, %v1420, 0
    %v1543 = vsel %vm1469, %v1423, 0
    %v1546 = vsel %vm1469, %v1426, 0
    %v1549 = vsel %vm1469, %v1429, 0
    %v1552 = vsel %vm1469, %v1432, 0
    %v1555 = vsel %vm1469, %v1435, 0
    %v1558 = vsel %vm1469, %v1438, 0
    %v1561 = vsel %vm1469, %v1441, 0
    %v1564 = vsel %vm1469, %v1444, 0
    %v1567 = vsel %vm1469, %v1447, 0
    %v1570 = vsel %vm1469, %v1450, 0
    %v1573 = vsel %vm1469, %v1453, 0
    %v1576 = vsel %vm1469, %v1456, 0
    %v1579 = vsel %vm1469, %v1459, 0
    %v1582 = vsel %vm1469, %v1462, 0
    %v1585 = vsel %vm1469, %v1465, 0
    %v1588 = vsel %vm1469, %v1468, 0
    %vm1590 = vcmask 1043456
    %v1592 = vsel %vm1590, %v609, 0
    %v1595 = vsel %vm1590, %v610, 0
    %v1598 = vsel %vm1590, %v611, 0
    %v1601 = vsel %vm1590, %v612, 0
    %1603 = vmatprep.subr.mxu0 %v486
    %1604 = vmatpush1.msra.mxu0 %v485
    %1605 = vmatprep.subr.mxu0 %v482
    %1606 = vmatpush1.msra.mxu0 %v481
    %1607 = vmatprep.subr.mxu0 %v478
    %1608 = vmatpush1.msra.mxu0 %v477
    %1609 = vmatprep.subr.mxu0 %v474
    %1610 = vmatpush1.msra.mxu0 %v473
    %1611 = vmatprep.subr.mxu0 %v470
    %1612 = vmatpush1.msra.mxu0 %v469
    %1613 = vmatprep.subr.mxu0 %v466
    %1614 = vmatpush1.msra.mxu0 %v465
    %1615 = vmatprep.subr.mxu0 %v462
    %1616 = vmatpush1.msra.mxu0 %v461
    %1617 = vmatprep.subr.mxu0 %v458
    %1618 = vmatpush1.msra.mxu0 %v457
    %1619 = vmatprep.subr.mxu0 %v454
    %1620 = vmatpush1.msra.mxu0 %v453
    %1621 = vmatprep.subr.mxu0 %v450
    %1622 = vmatpush1.msra.mxu0 %v449
    %1623 = vmatprep.subr.mxu0 %v446
    %1624 = vmatpush1.msra.mxu0 %v445
    %1625 = vmatprep.subr.mxu0 %v442
    %1626 = vmatpush1.msra.mxu0 %v441
    %1627 = vmatprep.subr.mxu0 %v438
    %1628 = vmatpush1.msra.mxu0 %v437
    %1629 = vmatprep.subr.mxu0 %v434
    %1630 = vmatpush1.msra.mxu0 %v433
    %1631 = vmatprep.subr.mxu0 %v430
    %1632 = vmatpush1.msra.mxu0 %v429
    %1633 = vmatprep.subr.mxu0 %v426
    %1634 = vmatpush1.msra.mxu0 %v425
    %1635 = vmatprep.subr.mxu0 %v550
    %1636 = vmatpush2.msra.mxu0 %v549
    %1637 = vmatprep.subr.mxu0 %v546
    %1638 = vmatpush2.msra.mxu0 %v545
    %1639 = vmatprep.subr.mxu0 %v542
    %1640 = vmatpush2.msra.mxu0 %v541
    %1641 = vmatprep.subr.mxu0 %v538
    %1642 = vmatpush2.msra.mxu0 %v537
    %1643 = vmatprep.subr.mxu0 %v534
    %1644 = vmatpush2.msra.mxu0 %v533
    %1645 = vmatprep.subr.mxu0 %v530
    %1646 = vmatpush2.msra.mxu0 %v529
    %1647 = vmatprep.subr.mxu0 %v526
    %1648 = vmatpush2.msra.mxu0 %v525
    %1649 = vmatprep.subr.mxu0 %v522
    %1650 = vmatpush2.msra.mxu0 %v521
    %1651 = vmatprep.subr.mxu0 %v518
    %1652 = vmatpush2.msra.mxu0 %v517
    %1653 = vmatprep.subr.mxu0 %v514
    %1654 = vmatpush2.msra.mxu0 %v513
    %1655 = vmatprep.subr.mxu0 %v510
    %1656 = vmatpush2.msra.mxu0 %v509
    %1657 = vmatprep.subr.mxu0 %v506
    %1658 = vmatpush2.msra.mxu0 %v505
    %1659 = vmatprep.subr.mxu0 %v502
    %1660 = vmatpush2.msra.mxu0 %v501
    %1661 = vmatprep.subr.mxu0 %v498
    %1662 = vmatpush2.msra.mxu0 %v497
    %1663 = vmatprep.subr.mxu0 %v494
    %1664 = vmatpush2.msra.mxu0 %v493
    %1665 = vmatprep.subr.mxu0 %v490
    %1666 = vmatpush2.msra.mxu0 %v489
    %1667 = vmatprep.mubr.f32.mxu0 %v1160
    %1668 = vmatmul.mubr.f32.gmra.mxu0 %v1158
    %v1669 = vpop.f32.mrf.mxu0
    %v1670 = vadd.f32 0.0, %v1669
    %v1671 = vpop.f32.mrf.mxu0
    %v1672 = vadd.f32 0.0, %v1671
    %1673 = vmatprep.mubr.f32.mxu0 %v1166
    %1674 = vmatmul.mubr.f32.gmra.mxu0 %v1164
    %v1675 = vpop.f32.mrf.mxu0
    %v1676 = vadd.f32 0.0, %v1675
    %v1677 = vpop.f32.mrf.mxu0
    %v1678 = vadd.f32 0.0, %v1677
    %1679 = vmatprep.mubr.f32.mxu0 %v1172
    %1680 = vmatmul.mubr.f32.gmra.mxu0 %v1170
    %v1681 = vpop.f32.mrf.mxu0
    %v1682 = vadd.f32 0.0, %v1681
    %v1683 = vpop.f32.mrf.mxu0
    %v1684 = vadd.f32 0.0, %v1683
    %1685 = vmatprep.mubr.f32.mxu0 %v1178
    %1686 = vmatmul.mubr.f32.gmra.mxu0 %v1176
    %v1687 = vpop.f32.mrf.mxu0
    %v1688 = vadd.f32 0.0, %v1687
    %v1689 = vpop.f32.mrf.mxu0
    %v1690 = vadd.f32 0.0, %v1689
    %1691 = vmatprep.mubr.f32.mxu0 %v1184
    %1692 = vmatmul.mubr.f32.gmra.mxu0 %v1182
    %v1693 = vpop.f32.mrf.mxu0
    %v1694 = vadd.f32 0.0, %v1693
    %v1695 = vpop.f32.mrf.mxu0
    %v1696 = vadd.f32 0.0, %v1695
    %1697 = vmatprep.mubr.f32.mxu0 %v1190
    %1698 = vmatmul.mubr.f32.gmra.mxu0 %v1188
    %v1699 = vpop.f32.mrf.mxu0
    %v1700 = vadd.f32 0.0, %v1699
    %v1701 = vpop.f32.mrf.mxu0
    %v1702 = vadd.f32 0.0, %v1701
    %1703 = vmatprep.mubr.f32.mxu0 %v1196
    %1704 = vmatmul.mubr.f32.gmra.mxu0 %v1194
    %v1705 = vpop.f32.mrf.mxu0
    %v1706 = vadd.f32 0.0, %v1705
    %v1707 = vpop.f32.mrf.mxu0
    %v1708 = vadd.f32 0.0, %v1707
    %1709 = vmatprep.mubr.f32.mxu0 %v1202
    %1710 = vmatmul.mubr.f32.gmra.mxu0 %v1200
    %v1711 = vpop.f32.mrf.mxu0
    %v1712 = vadd.f32 0.0, %v1711
    %v1713 = vpop.f32.mrf.mxu0
    %v1714 = vadd.f32 0.0, %v1713
    %1715 = vmatprep.mubr.f32.mxu0 %v1208
    %1716 = vmatmul.mubr.f32.gmra.mxu0 %v1206
    %v1717 = vpop.f32.mrf.mxu0
    %v1718 = vadd.f32 0.0, %v1717
    %v1719 = vpop.f32.mrf.mxu0
    %v1720 = vadd.f32 0.0, %v1719
    %1721 = vmatprep.mubr.f32.mxu0 %v1214
    %1722 = vmatmul.mubr.f32.gmra.mxu0 %v1212
    %v1723 = vpop.f32.mrf.mxu0
    %v1724 = vadd.f32 0.0, %v1723
    %v1725 = vpop.f32.mrf.mxu0
    %v1726 = vadd.f32 0.0, %v1725
    %1727 = vmatprep.mubr.f32.mxu0 %v1220
    %1728 = vmatmul.mubr.f32.gmra.mxu0 %v1218
    %v1729 = vpop.f32.mrf.mxu0
    %v1730 = vadd.f32 0.0, %v1729
    %v1731 = vpop.f32.mrf.mxu0
    %v1732 = vadd.f32 0.0, %v1731
    %1733 = vmatprep.mubr.f32.mxu0 %v1226
    %1734 = vmatmul.mubr.f32.gmra.mxu0 %v1224
    %v1735 = vpop.f32.mrf.mxu0
    %v1736 = vadd.f32 0.0, %v1735
    %v1737 = vpop.f32.mrf.mxu0
    %v1738 = vadd.f32 0.0, %v1737
    %1739 = vmatprep.mubr.f32.mxu0 %v1232
    %1740 = vmatmul.mubr.f32.gmra.mxu0 %v1230
    %v1741 = vpop.f32.mrf.mxu0
    %v1742 = vadd.f32 0.0, %v1741
    %v1743 = vpop.f32.mrf.mxu0
    %v1744 = vadd.f32 0.0, %v1743
    %1745 = vmatprep.mubr.f32.mxu0 %v1238
    %1746 = vmatmul.mubr.f32.gmra.mxu0 %v1236
    %v1747 = vpop.f32.mrf.mxu0
    %v1748 = vadd.f32 0.0, %v1747
    %v1749 = vpop.f32.mrf.mxu0
    %v1750 = vadd.f32 0.0, %v1749
    %1751 = vmatprep.mubr.f32.mxu0 %v1244
    %1752 = vmatmul.mubr.f32.gmra.mxu0 %v1242
    %v1753 = vpop.f32.mrf.mxu0
    %v1754 = vadd.f32 0.0, %v1753
    %v1755 = vpop.f32.mrf.mxu0
    %v1756 = vadd.f32 0.0, %v1755
    %1757 = vmatprep.mubr.f32.mxu0 %v1250
    %1758 = vmatmul.mubr.f32.gmra.mxu0 %v1248
    %v1759 = vpop.f32.mrf.mxu0
    %v1760 = vadd.f32 0.0, %v1759
    %v1761 = vpop.f32.mrf.mxu0
    %v1762 = vadd.f32 0.0, %v1761
    %1763 = vmatprep.mubr.f32.mxu0 %v1398
    %1764 = vmatmul.mubr.f32.gmra.mxu0 %v1397
    %v1765 = vpop.f32.mrf.mxu0
    %v1766 = vadd.f32 0.0, %v1765
    %v1767 = vpop.f32.mrf.mxu0
    %v1768 = vadd.f32 0.0, %v1767
    %1769 = vmatprep.mubr.f32.mxu0 %v1401
    %1770 = vmatmul.mubr.f32.gmra.mxu0 %v1400
    %v1771 = vpop.f32.mrf.mxu0
    %v1772 = vadd.f32 0.0, %v1771
    %v1773 = vpop.f32.mrf.mxu0
    %v1774 = vadd.f32 0.0, %v1773
    %1775 = vmatprep.mubr.f32.mxu0 %v1404
    %1776 = vmatmul.mubr.f32.gmra.mxu0 %v1403
    %v1777 = vpop.f32.mrf.mxu0
    %v1778 = vadd.f32 0.0, %v1777
    %v1779 = vpop.f32.mrf.mxu0
    %v1780 = vadd.f32 0.0, %v1779
    %1781 = vmatprep.mubr.f32.mxu0 %v1407
    %1782 = vmatmul.mubr.f32.gmra.mxu0 %v1406
    %v1783 = vpop.f32.mrf.mxu0
    %v1784 = vadd.f32 0.0, %v1783
    %v1785 = vpop.f32.mrf.mxu0
    %v1786 = vadd.f32 0.0, %v1785
    %1787 = vmatprep.mubr.f32.mxu0 %v1410
    %1788 = vmatmul.mubr.f32.gmra.mxu0 %v1409
    %v1789 = vpop.f32.mrf.mxu0
    %v1790 = vadd.f32 0.0, %v1789
    %v1791 = vpop.f32.mrf.mxu0
    %v1792 = vadd.f32 0.0, %v1791
    %1793 = vmatprep.mubr.f32.mxu0 %v1413
    %1794 = vmatmul.mubr.f32.gmra.mxu0 %v1412
    %v1795 = vpop.f32.mrf.mxu0
    %v1796 = vadd.f32 0.0, %v1795
    %v1797 = vpop.f32.mrf.mxu0
    %v1798 = vadd.f32 0.0, %v1797
    %1799 = vmatprep.mubr.f32.mxu0 %v1416
    %1800 = vmatmul.mubr.f32.gmra.mxu0 %v1415
    %v1801 = vpop.f32.mrf.mxu0
    %v1802 = vadd.f32 0.0, %v1801
    %v1803 = vpop.f32.mrf.mxu0
    %v1804 = vadd.f32 0.0, %v1803
    %1805 = vmatprep.mubr.f32.mxu0 %v1419
    %1806 = vmatmul.mubr.f32.gmra.mxu0 %v1418
    %v1807 = vpop.f32.mrf.mxu0
    %v1808 = vadd.f32 0.0, %v1807
    %v1809 = vpop.f32.mrf.mxu0
    %v1810 = vadd.f32 0.0, %v1809
    %1811 = vmatprep.mubr.f32.mxu0 %v1422
    %1812 = vmatmul.mubr.f32.gmra.mxu0 %v1421
    %v1813 = vpop.f32.mrf.mxu0
    %v1814 = vadd.f32 0.0, %v1813
    %v1815 = vpop.f32.mrf.mxu0
    %v1816 = vadd.f32 0.0, %v1815
    %1817 = vmatprep.mubr.f32.mxu0 %v1425
    %1818 = vmatmul.mubr.f32.gmra.mxu0 %v1424
    %v1819 = vpop.f32.mrf.mxu0
    %v1820 = vadd.f32 0.0, %v1819
    %v1821 = vpop.f32.mrf.mxu0
    %v1822 = vadd.f32 0.0, %v1821
    %1823 = vmatprep.mubr.f32.mxu0 %v1428
    %1824 = vmatmul.mubr.f32.gmra.mxu0 %v1427
    %v1825 = vpop.f32.mrf.mxu0
    %v1826 = vadd.f32 0.0, %v1825
    %v1827 = vpop.f32.mrf.mxu0
    %v1828 = vadd.f32 0.0, %v1827
    %1829 = vmatprep.mubr.f32.mxu0 %v1431
    %1830 = vmatmul.mubr.f32.gmra.mxu0 %v1430
    %v1831 = vpop.f32.mrf.mxu0
    %v1832 = vadd.f32 0.0, %v1831
    %v1833 = vpop.f32.mrf.mxu0
    %v1834 = vadd.f32 0.0, %v1833
    %1835 = vmatprep.mubr.f32.mxu0 %v1434
    %1836 = vmatmul.mubr.f32.gmra.mxu0 %v1433
    %v1837 = vpop.f32.mrf.mxu0
    %v1838 = vadd.f32 0.0, %v1837
    %v1839 = vpop.f32.mrf.mxu0
    %v1840 = vadd.f32 0.0, %v1839
    %1841 = vmatprep.mubr.f32.mxu0 %v1437
    %1842 = vmatmul.mubr.f32.gmra.mxu0 %v1436
    %v1843 = vpop.f32.mrf.mxu0
    %v1844 = vadd.f32 0.0, %v1843
    %v1845 = vpop.f32.mrf.mxu0
    %v1846 = vadd.f32 0.0, %v1845
    %1847 = vmatprep.mubr.f32.mxu0 %v1440
    %1848 = vmatmul.mubr.f32.gmra.mxu0 %v1439
    %v1849 = vpop.f32.mrf.mxu0
    %v1850 = vadd.f32 0.0, %v1849
    %v1851 = vpop.f32.mrf.mxu0
    %v1852 = vadd.f32 0.0, %v1851
    %1853 = vmatprep.mubr.f32.mxu0 %v1443
    %1854 = vmatmul.mubr.f32.gmra.mxu0 %v1442
    %v1855 = vpop.f32.mrf.mxu0
    %v1856 = vadd.f32 0.0, %v1855
    %v1857 = vpop.f32.mrf.mxu0
    %v1858 = vadd.f32 0.0, %v1857
    %1859 = vmatprep.mubr.f32.mxu0 %v1446
    %1860 = vmatmul.mubr.f32.gmra.mxu0 %v1445
    %v1861 = vpop.f32.mrf.mxu0
    %v1862 = vadd.f32 0.0, %v1861
    %v1863 = vpop.f32.mrf.mxu0
    %v1864 = vadd.f32 0.0, %v1863
    %1865 = vmatprep.mubr.f32.mxu0 %v1449
    %1866 = vmatmul.mubr.f32.gmra.mxu0 %v1448
    %v1867 = vpop.f32.mrf.mxu0
    %v1868 = vadd.f32 0.0, %v1867
    %v1869 = vpop.f32.mrf.mxu0
    %v1870 = vadd.f32 0.0, %v1869
    %1871 = vmatprep.mubr.f32.mxu0 %v1452
    %1872 = vmatmul.mubr.f32.gmra.mxu0 %v1451
    %v1873 = vpop.f32.mrf.mxu0
    %v1874 = vadd.f32 0.0, %v1873
    %v1875 = vpop.f32.mrf.mxu0
    %v1876 = vadd.f32 0.0, %v1875
    %1877 = vmatprep.mubr.f32.mxu0 %v1455
    %1878 = vmatmul.mubr.f32.gmra.mxu0 %v1454
    %v1879 = vpop.f32.mrf.mxu0
    %v1880 = vadd.f32 0.0, %v1879
    %v1881 = vpop.f32.mrf.mxu0
    %v1882 = vadd.f32 0.0, %v1881
    %1883 = vmatprep.mubr.f32.mxu0 %v1458
    %1884 = vmatmul.mubr.f32.gmra.mxu0 %v1457
    %v1885 = vpop.f32.mrf.mxu0
    %v1886 = vadd.f32 0.0, %v1885
    %v1887 = vpop.f32.mrf.mxu0
    %v1888 = vadd.f32 0.0, %v1887
    %1889 = vmatprep.mubr.f32.mxu0 %v1461
    %1890 = vmatmul.mubr.f32.gmra.mxu0 %v1460
    %v1891 = vpop.f32.mrf.mxu0
    %v1892 = vadd.f32 0.0, %v1891
    %v1893 = vpop.f32.mrf.mxu0
    %v1894 = vadd.f32 0.0, %v1893
    %1895 = vmatprep.mubr.f32.mxu0 %v1464
    %1896 = vmatmul.mubr.f32.gmra.mxu0 %v1463
    %v1897 = vpop.f32.mrf.mxu0
    %v1898 = vadd.f32 0.0, %v1897
    %v1899 = vpop.f32.mrf.mxu0
    %v1900 = vadd.f32 0.0, %v1899
    %1901 = vmatprep.mubr.f32.mxu0 %v1467
    %1902 = vmatmul.mubr.f32.gmra.mxu0 %v1466
    %v1903 = vpop.f32.mrf.mxu0
    %v1904 = vadd.f32 0.0, %v1903
    %v1905 = vpop.f32.mrf.mxu0
    %v1906 = vadd.f32 0.0, %v1905
    %1907 = vdwg.mxu0
    %1908 = vmatprep.subr.mxu0 0.0
    %1909 = vmatpush1.msra.mxu0 0.0
    %1910 = vmatprep.subr.mxu0 %v1595
    %1911 = vmatpush1.msra.mxu0 %v1592
    %1912 = vmatprep.subr.mxu0 %v606
    %1913 = vmatpush1.msra.mxu0 %v605
    %1914 = vmatprep.subr.mxu0 %v602
    %1915 = vmatpush1.msra.mxu0 %v601
    %1916 = vmatprep.subr.mxu0 %v598
    %1917 = vmatpush1.msra.mxu0 %v597
    %1918 = vmatprep.subr.mxu0 %v594
    %1919 = vmatpush1.msra.mxu0 %v593
    %1920 = vmatprep.subr.mxu0 %v590
    %1921 = vmatpush1.msra.mxu0 %v589
    %1922 = vmatprep.subr.mxu0 %v586
    %1923 = vmatpush1.msra.mxu0 %v585
    %1924 = vmatprep.subr.mxu0 %v582
    %1925 = vmatpush1.msra.mxu0 %v581
    %1926 = vmatprep.subr.mxu0 %v578
    %1927 = vmatpush1.msra.mxu0 %v577
    %1928 = vmatprep.subr.mxu0 %v574
    %1929 = vmatpush1.msra.mxu0 %v573
    %1930 = vmatprep.subr.mxu0 %v570
    %1931 = vmatpush1.msra.mxu0 %v569
    %1932 = vmatprep.subr.mxu0 %v566
    %1933 = vmatpush1.msra.mxu0 %v565
    %1934 = vmatprep.subr.mxu0 %v562
    %1935 = vmatpush1.msra.mxu0 %v561
    %1936 = vmatprep.subr.mxu0 %v558
    %1937 = vmatpush1.msra.mxu0 %v557
    %1938 = vmatprep.subr.mxu0 %v554
    %1939 = vmatpush1.msra.mxu0 %v553
    %1940 = vmatprep.subr.mxu0 0.0
    %1941 = vmatpush2.msra.mxu0 0.0
    %1942 = vmatprep.subr.mxu0 0.0
    %1943 = vmatpush2.msra.mxu0 0.0
    %1944 = vmatprep.subr.mxu0 0.0
    %1945 = vmatpush2.msra.mxu0 0.0
    %1946 = vmatprep.subr.mxu0 0.0
    %1947 = vmatpush2.msra.mxu0 0.0
    %1948 = vmatprep.subr.mxu0 0.0
    %1949 = vmatpush2.msra.mxu0 0.0
    %1950 = vmatprep.subr.mxu0 0.0
    %1951 = vmatpush2.msra.mxu0 0.0
    %1952 = vmatprep.subr.mxu0 0.0
    %1953 = vmatpush2.msra.mxu0 0.0
    %1954 = vmatprep.subr.mxu0 0.0
    %1955 = vmatpush2.msra.mxu0 0.0
    %1956 = vmatprep.subr.mxu0 0.0
    %1957 = vmatpush2.msra.mxu0 0.0
    %1958 = vmatprep.subr.mxu0 0.0
    %1959 = vmatpush2.msra.mxu0 0.0
    %1960 = vmatprep.subr.mxu0 0.0
    %1961 = vmatpush2.msra.mxu0 0.0
    %1962 = vmatprep.subr.mxu0 0.0
    %1963 = vmatpush2.msra.mxu0 0.0
    %1964 = vmatprep.subr.mxu0 0.0
    %1965 = vmatpush2.msra.mxu0 0.0
    %1966 = vmatprep.subr.mxu0 0.0
    %1967 = vmatpush2.msra.mxu0 0.0
    %1968 = vmatprep.subr.mxu0 0.0
    %1969 = vmatpush2.msra.mxu0 0.0
    %1970 = vmatprep.subr.mxu0 0.0
    %1971 = vmatpush2.msra.mxu0 0.0
    %1972 = vmatprep.mubr.f32.mxu0 0.0
    %1973 = vmatmul.mubr.f32.gmra.mxu0 %v1471
    %v1974 = vpop.f32.mrf.mxu0
    %v1975 = vadd.f32 %v1670, %v1974
    %v1976 = vpop.f32.mrf.mxu0
    %v1977 = vadd.f32 %v1672, %v1976
    %1978 = vmatprep.mubr.f32.mxu0 0.0
    %1979 = vmatmul.mubr.f32.gmra.mxu0 %v1474
    %v1980 = vpop.f32.mrf.mxu0
    %v1981 = vadd.f32 %v1676, %v1980
    %v1982 = vpop.f32.mrf.mxu0
    %v1983 = vadd.f32 %v1678, %v1982
    %1984 = vmatprep.mubr.f32.mxu0 0.0
    %1985 = vmatmul.mubr.f32.gmra.mxu0 %v1477
    %v1986 = vpop.f32.mrf.mxu0
    %v1987 = vadd.f32 %v1682, %v1986
    %v1988 = vpop.f32.mrf.mxu0
    %v1989 = vadd.f32 %v1684, %v1988
    %1990 = vmatprep.mubr.f32.mxu0 0.0
    %1991 = vmatmul.mubr.f32.gmra.mxu0 %v1480
    %v1992 = vpop.f32.mrf.mxu0
    %v1993 = vadd.f32 %v1688, %v1992
    %v1994 = vpop.f32.mrf.mxu0
    %v1995 = vadd.f32 %v1690, %v1994
    %1996 = vmatprep.mubr.f32.mxu0 0.0
    %1997 = vmatmul.mubr.f32.gmra.mxu0 %v1483
    %v1998 = vpop.f32.mrf.mxu0
    %v1999 = vadd.f32 %v1694, %v1998
    %v2000 = vpop.f32.mrf.mxu0
    %v2001 = vadd.f32 %v1696, %v2000
    %2002 = vmatprep.mubr.f32.mxu0 0.0
    %2003 = vmatmul.mubr.f32.gmra.mxu0 %v1486
    %v2004 = vpop.f32.mrf.mxu0
    %v2005 = vadd.f32 %v1700, %v2004
    %v2006 = vpop.f32.mrf.mxu0
    %v2007 = vadd.f32 %v1702, %v2006
    %2008 = vmatprep.mubr.f32.mxu0 0.0
    %2009 = vmatmul.mubr.f32.gmra.mxu0 %v1489
    %v2010 = vpop.f32.mrf.mxu0
    %v2011 = vadd.f32 %v1706, %v2010
    %v2012 = vpop.f32.mrf.mxu0
    %v2013 = vadd.f32 %v1708, %v2012
    %2014 = vmatprep.mubr.f32.mxu0 0.0
    %2015 = vmatmul.mubr.f32.gmra.mxu0 %v1492
    %v2016 = vpop.f32.mrf.mxu0
    %v2017 = vadd.f32 %v1712, %v2016
    %v2018 = vpop.f32.mrf.mxu0
    %v2019 = vadd.f32 %v1714, %v2018
    %2020 = vmatprep.mubr.f32.mxu0 0.0
    %2021 = vmatmul.mubr.f32.gmra.mxu0 %v1495
    %v2022 = vpop.f32.mrf.mxu0
    %v2023 = vadd.f32 %v1718, %v2022
    %v2024 = vpop.f32.mrf.mxu0
    %v2025 = vadd.f32 %v1720, %v2024
    %2026 = vmatprep.mubr.f32.mxu0 0.0
    %2027 = vmatmul.mubr.f32.gmra.mxu0 %v1498
    %v2028 = vpop.f32.mrf.mxu0
    %v2029 = vadd.f32 %v1724, %v2028
    %v2030 = vpop.f32.mrf.mxu0
    %v2031 = vadd.f32 %v1726, %v2030
    %2032 = vmatprep.mubr.f32.mxu0 0.0
    %2033 = vmatmul.mubr.f32.gmra.mxu0 %v1501
    %v2034 = vpop.f32.mrf.mxu0
    %v2035 = vadd.f32 %v1730, %v2034
    %v2036 = vpop.f32.mrf.mxu0
    %v2037 = vadd.f32 %v1732, %v2036
    %2038 = vmatprep.mubr.f32.mxu0 0.0
    %2039 = vmatmul.mubr.f32.gmra.mxu0 %v1504
    %v2040 = vpop.f32.mrf.mxu0
    %v2041 = vadd.f32 %v1736, %v2040
    %v2042 = vpop.f32.mrf.mxu0
    %v2043 = vadd.f32 %v1738, %v2042
    %2044 = vmatprep.mubr.f32.mxu0 0.0
    %2045 = vmatmul.mubr.f32.gmra.mxu0 %v1507
    %v2046 = vpop.f32.mrf.mxu0
    %v2047 = vadd.f32 %v1742, %v2046
    %v2048 = vpop.f32.mrf.mxu0
    %v2049 = vadd.f32 %v1744, %v2048
    %2050 = vmatprep.mubr.f32.mxu0 0.0
    %2051 = vmatmul.mubr.f32.gmra.mxu0 %v1510
    %v2052 = vpop.f32.mrf.mxu0
    %v2053 = vadd.f32 %v1748, %v2052
    %v2054 = vpop.f32.mrf.mxu0
    %v2055 = vadd.f32 %v1750, %v2054
    %2056 = vmatprep.mubr.f32.mxu0 0.0
    %2057 = vmatmul.mubr.f32.gmra.mxu0 %v1513
    %v2058 = vpop.f32.mrf.mxu0
    %v2059 = vadd.f32 %v1754, %v2058
    %v2060 = vpop.f32.mrf.mxu0
    %v2061 = vadd.f32 %v1756, %v2060
    %2062 = vmatprep.mubr.f32.mxu0 0.0
    %2063 = vmatmul.mubr.f32.gmra.mxu0 %v1516
    %v2064 = vpop.f32.mrf.mxu0
    %v2065 = vadd.f32 %v1760, %v2064
    %v2066 = vpop.f32.mrf.mxu0
    %v2067 = vadd.f32 %v1762, %v2066
    %2068 = vmatprep.mubr.f32.mxu0 0.0
    %2069 = vmatmul.mubr.f32.gmra.mxu0 %v1519
    %v2070 = vpop.f32.mrf.mxu0
    %v2071 = vadd.f32 %v1766, %v2070
    %v2072 = vpop.f32.mrf.mxu0
    %v2073 = vadd.f32 %v1768, %v2072
    %2074 = vmatprep.mubr.f32.mxu0 0.0
    %2075 = vmatmul.mubr.f32.gmra.mxu0 %v1522
    %v2076 = vpop.f32.mrf.mxu0
    %v2077 = vadd.f32 %v1772, %v2076
    %v2078 = vpop.f32.mrf.mxu0
    %v2079 = vadd.f32 %v1774, %v2078
    %2080 = vmatprep.mubr.f32.mxu0 0.0
    %2081 = vmatmul.mubr.f32.gmra.mxu0 %v1525
    %v2082 = vpop.f32.mrf.mxu0
    %v2083 = vadd.f32 %v1778, %v2082
    %v2084 = vpop.f32.mrf.mxu0
    %v2085 = vadd.f32 %v1780, %v2084
    %2086 = vmatprep.mubr.f32.mxu0 0.0
    %2087 = vmatmul.mubr.f32.gmra.mxu0 %v1528
    %v2088 = vpop.f32.mrf.mxu0
    %v2089 = vadd.f32 %v1784, %v2088
    %v2090 = vpop.f32.mrf.mxu0
    %v2091 = vadd.f32 %v1786, %v2090
    %2092 = vmatprep.mubr.f32.mxu0 0.0
    %2093 = vmatmul.mubr.f32.gmra.mxu0 %v1531
    %v2094 = vpop.f32.mrf.mxu0
    %v2095 = vadd.f32 %v1790, %v2094
    %v2096 = vpop.f32.mrf.mxu0
    %v2097 = vadd.f32 %v1792, %v2096
    %2098 = vmatprep.mubr.f32.mxu0 0.0
    %2099 = vmatmul.mubr.f32.gmra.mxu0 %v1534
    %v2100 = vpop.f32.mrf.mxu0
    %v2101 = vadd.f32 %v1796, %v2100
    %v2102 = vpop.f32.mrf.mxu0
    %v2103 = vadd.f32 %v1798, %v2102
    %2104 = vmatprep.mubr.f32.mxu0 0.0
    %2105 = vmatmul.mubr.f32.gmra.mxu0 %v1537
    %v2106 = vpop.f32.mrf.mxu0
    %v2107 = vadd.f32 %v1802, %v2106
    %v2108 = vpop.f32.mrf.mxu0
    %v2109 = vadd.f32 %v1804, %v2108
    %2110 = vmatprep.mubr.f32.mxu0 0.0
    %2111 = vmatmul.mubr.f32.gmra.mxu0 %v1540
    %v2112 = vpop.f32.mrf.mxu0
    %v2113 = vadd.f32 %v1808, %v2112
    %v2114 = vpop.f32.mrf.mxu0
    %v2115 = vadd.f32 %v1810, %v2114
    %2116 = vmatprep.mubr.f32.mxu0 0.0
    %2117 = vmatmul.mubr.f32.gmra.mxu0 %v1543
    %v2118 = vpop.f32.mrf.mxu0
    %v2119 = vadd.f32 %v1814, %v2118
    %v2120 = vpop.f32.mrf.mxu0
    %v2121 = vadd.f32 %v1816, %v2120
    %2122 = vmatprep.mubr.f32.mxu0 0.0
    %2123 = vmatmul.mubr.f32.gmra.mxu0 %v1546
    %v2124 = vpop.f32.mrf.mxu0
    %v2125 = vadd.f32 %v1820, %v2124
    %v2126 = vpop.f32.mrf.mxu0
    %v2127 = vadd.f32 %v1822, %v2126
    %2128 = vmatprep.mubr.f32.mxu0 0.0
    %2129 = vmatmul.mubr.f32.gmra.mxu0 %v1549
    %v2130 = vpop.f32.mrf.mxu0
    %v2131 = vadd.f32 %v1826, %v2130
    %v2132 = vpop.f32.mrf.mxu0
    %v2133 = vadd.f32 %v1828, %v2132
    %2134 = vmatprep.mubr.f32.mxu0 0.0
    %2135 = vmatmul.mubr.f32.gmra.mxu0 %v1552
    %v2136 = vpop.f32.mrf.mxu0
    %v2137 = vadd.f32 %v1832, %v2136
    %v2138 = vpop.f32.mrf.mxu0
    %v2139 = vadd.f32 %v1834, %v2138
    %2140 = vmatprep.mubr.f32.mxu0 0.0
    %2141 = vmatmul.mubr.f32.gmra.mxu0 %v1555
    %v2142 = vpop.f32.mrf.mxu0
    %v2143 = vadd.f32 %v1838, %v2142
    %v2144 = vpop.f32.mrf.mxu0
    %v2145 = vadd.f32 %v1840, %v2144
    %2146 = vmatprep.mubr.f32.mxu0 0.0
    %2147 = vmatmul.mubr.f32.gmra.mxu0 %v1558
    %v2148 = vpop.f32.mrf.mxu0
    %v2149 = vadd.f32 %v1844, %v2148
    %v2150 = vpop.f32.mrf.mxu0
    %v2151 = vadd.f32 %v1846, %v2150
    %2152 = vmatprep.mubr.f32.mxu0 0.0
    %2153 = vmatmul.mubr.f32.gmra.mxu0 %v1561
    %v2154 = vpop.f32.mrf.mxu0
    %v2155 = vadd.f32 %v1850, %v2154
    %v2156 = vpop.f32.mrf.mxu0
    %v2157 = vadd.f32 %v1852, %v2156
    %2158 = vmatprep.mubr.f32.mxu0 0.0
    %2159 = vmatmul.mubr.f32.gmra.mxu0 %v1564
    %v2160 = vpop.f32.mrf.mxu0
    %v2161 = vadd.f32 %v1856, %v2160
    %v2162 = vpop.f32.mrf.mxu0
    %v2163 = vadd.f32 %v1858, %v2162
    %2164 = vmatprep.mubr.f32.mxu0 0.0
    %2165 = vmatmul.mubr.f32.gmra.mxu0 %v1567
    %v2166 = vpop.f32.mrf.mxu0
    %v2167 = vadd.f32 %v1862, %v2166
    %v2168 = vpop.f32.mrf.mxu0
    %v2169 = vadd.f32 %v1864, %v2168
    %2170 = vmatprep.mubr.f32.mxu0 0.0
    %2171 = vmatmul.mubr.f32.gmra.mxu0 %v1570
    %v2172 = vpop.f32.mrf.mxu0
    %v2173 = vadd.f32 %v1868, %v2172
    %v2174 = vpop.f32.mrf.mxu0
    %v2175 = vadd.f32 %v1870, %v2174
    %2176 = vmatprep.mubr.f32.mxu0 0.0
    %2177 = vmatmul.mubr.f32.gmra.mxu0 %v1573
    %v2178 = vpop.f32.mrf.mxu0
    %v2179 = vadd.f32 %v1874, %v2178
    %v2180 = vpop.f32.mrf.mxu0
    %v2181 = vadd.f32 %v1876, %v2180
    %2182 = vmatprep.mubr.f32.mxu0 0.0
    %2183 = vmatmul.mubr.f32.gmra.mxu0 %v1576
    %v2184 = vpop.f32.mrf.mxu0
    %v2185 = vadd.f32 %v1880, %v2184
    %v2186 = vpop.f32.mrf.mxu0
    %v2187 = vadd.f32 %v1882, %v2186
    %2188 = vmatprep.mubr.f32.mxu0 0.0
    %2189 = vmatmul.mubr.f32.gmra.mxu0 %v1579
    %v2190 = vpop.f32.mrf.mxu0
    %v2191 = vadd.f32 %v1886, %v2190
    %v2192 = vpop.f32.mrf.mxu0
    %v2193 = vadd.f32 %v1888, %v2192
    %2194 = vmatprep.mubr.f32.mxu0 0.0
    %2195 = vmatmul.mubr.f32.gmra.mxu0 %v1582
    %v2196 = vpop.f32.mrf.mxu0
    %v2197 = vadd.f32 %v1892, %v2196
    %v2198 = vpop.f32.mrf.mxu0
    %v2199 = vadd.f32 %v1894, %v2198
    %2200 = vmatprep.mubr.f32.mxu0 0.0
    %2201 = vmatmul.mubr.f32.gmra.mxu0 %v1585
    %v2202 = vpop.f32.mrf.mxu0
    %v2203 = vadd.f32 %v1898, %v2202
    %v2204 = vpop.f32.mrf.mxu0
    %v2205 = vadd.f32 %v1900, %v2204
    %2206 = vmatprep.mubr.f32.mxu0 0.0
    %2207 = vmatmul.mubr.f32.gmra.mxu0 %v1588
    %v2208 = vpop.f32.mrf.mxu0
    %v2209 = vadd.f32 %v1904, %v2208
    %v2210 = vpop.f32.mrf.mxu0
    %v2211 = vadd.f32 %v1906, %v2210
    %2212 = vdwg.mxu0
    %2213 = vmatprep.subr.mxu0 %v488
    %2214 = vmatpush1.msra.mxu0 %v487
    %2215 = vmatprep.subr.mxu0 %v484
    %2216 = vmatpush1.msra.mxu0 %v483
    %2217 = vmatprep.subr.mxu0 %v480
    %2218 = vmatpush1.msra.mxu0 %v479
    %2219 = vmatprep.subr.mxu0 %v476
    %2220 = vmatpush1.msra.mxu0 %v475
    %2221 = vmatprep.subr.mxu0 %v472
    %2222 = vmatpush1.msra.mxu0 %v471
    %2223 = vmatprep.subr.mxu0 %v468
    %2224 = vmatpush1.msra.mxu0 %v467
    %2225 = vmatprep.subr.mxu0 %v464
    %2226 = vmatpush1.msra.mxu0 %v463
    %2227 = vmatprep.subr.mxu0 %v460
    %2228 = vmatpush1.msra.mxu0 %v459
    %2229 = vmatprep.subr.mxu0 %v456
    %2230 = vmatpush1.msra.mxu0 %v455
    %2231 = vmatprep.subr.mxu0 %v452
    %2232 = vmatpush1.msra.mxu0 %v451
    %2233 = vmatprep.subr.mxu0 %v448
    %2234 = vmatpush1.msra.mxu0 %v447
    %2235 = vmatprep.subr.mxu0 %v444
    %2236 = vmatpush1.msra.mxu0 %v443
    %2237 = vmatprep.subr.mxu0 %v440
    %2238 = vmatpush1.msra.mxu0 %v439
    %2239 = vmatprep.subr.mxu0 %v436
    %2240 = vmatpush1.msra.mxu0 %v435
    %2241 = vmatprep.subr.mxu0 %v432
    %2242 = vmatpush1.msra.mxu0 %v431
    %2243 = vmatprep.subr.mxu0 %v428
    %2244 = vmatpush1.msra.mxu0 %v427
    %2245 = vmatprep.subr.mxu0 %v552
    %2246 = vmatpush2.msra.mxu0 %v551
    %2247 = vmatprep.subr.mxu0 %v548
    %2248 = vmatpush2.msra.mxu0 %v547
    %2249 = vmatprep.subr.mxu0 %v544
    %2250 = vmatpush2.msra.mxu0 %v543
    %2251 = vmatprep.subr.mxu0 %v540
    %2252 = vmatpush2.msra.mxu0 %v539
    %2253 = vmatprep.subr.mxu0 %v536
    %2254 = vmatpush2.msra.mxu0 %v535
    %2255 = vmatprep.subr.mxu0 %v532
    %2256 = vmatpush2.msra.mxu0 %v531
    %2257 = vmatprep.subr.mxu0 %v528
    %2258 = vmatpush2.msra.mxu0 %v527
    %2259 = vmatprep.subr.mxu0 %v524
    %2260 = vmatpush2.msra.mxu0 %v523
    %2261 = vmatprep.subr.mxu0 %v520
    %2262 = vmatpush2.msra.mxu0 %v519
    %2263 = vmatprep.subr.mxu0 %v516
    %2264 = vmatpush2.msra.mxu0 %v515
    %2265 = vmatprep.subr.mxu0 %v512
    %2266 = vmatpush2.msra.mxu0 %v511
    %2267 = vmatprep.subr.mxu0 %v508
    %2268 = vmatpush2.msra.mxu0 %v507
    %2269 = vmatprep.subr.mxu0 %v504
    %2270 = vmatpush2.msra.mxu0 %v503
    %2271 = vmatprep.subr.mxu0 %v500
    %2272 = vmatpush2.msra.mxu0 %v499
    %2273 = vmatprep.subr.mxu0 %v496
    %2274 = vmatpush2.msra.mxu0 %v495
    %2275 = vmatprep.subr.mxu0 %v492
    %2276 = vmatpush2.msra.mxu0 %v491
    %2277 = vmatprep.mubr.f32.mxu0 %v1160
    %2278 = vmatmul.mubr.f32.gmra.mxu0 %v1158
    %v2279 = vpop.f32.mrf.mxu0
    %v2280 = vadd.f32 0.0, %v2279
    %v2281 = vpop.f32.mrf.mxu0
    %v2282 = vadd.f32 0.0, %v2281
    %2283 = vmatprep.mubr.f32.mxu0 %v1166
    %2284 = vmatmul.mubr.f32.gmra.mxu0 %v1164
    %v2285 = vpop.f32.mrf.mxu0
    %v2286 = vadd.f32 0.0, %v2285
    %v2287 = vpop.f32.mrf.mxu0
    %v2288 = vadd.f32 0.0, %v2287
    %2289 = vmatprep.mubr.f32.mxu0 %v1172
    %2290 = vmatmul.mubr.f32.gmra.mxu0 %v1170
    %v2291 = vpop.f32.mrf.mxu0
    %v2292 = vadd.f32 0.0, %v2291
    %v2293 = vpop.f32.mrf.mxu0
    %v2294 = vadd.f32 0.0, %v2293
    %2295 = vmatprep.mubr.f32.mxu0 %v1178
    %2296 = vmatmul.mubr.f32.gmra.mxu0 %v1176
    %v2297 = vpop.f32.mrf.mxu0
    %v2298 = vadd.f32 0.0, %v2297
    %v2299 = vpop.f32.mrf.mxu0
    %v2300 = vadd.f32 0.0, %v2299
    %2301 = vmatprep.mubr.f32.mxu0 %v1184
    %2302 = vmatmul.mubr.f32.gmra.mxu0 %v1182
    %v2303 = vpop.f32.mrf.mxu0
    %v2304 = vadd.f32 0.0, %v2303
    %v2305 = vpop.f32.mrf.mxu0
    %v2306 = vadd.f32 0.0, %v2305
    %2307 = vmatprep.mubr.f32.mxu0 %v1190
    %2308 = vmatmul.mubr.f32.gmra.mxu0 %v1188
    %v2309 = vpop.f32.mrf.mxu0
    %v2310 = vadd.f32 0.0, %v2309
    %v2311 = vpop.f32.mrf.mxu0
    %v2312 = vadd.f32 0.0, %v2311
    %2313 = vmatprep.mubr.f32.mxu0 %v1196
    %2314 = vmatmul.mubr.f32.gmra.mxu0 %v1194
    %v2315 = vpop.f32.mrf.mxu0
    %v2316 = vadd.f32 0.0, %v2315
    %v2317 = vpop.f32.mrf.mxu0
    %v2318 = vadd.f32 0.0, %v2317
    %2319 = vmatprep.mubr.f32.mxu0 %v1202
    %2320 = vmatmul.mubr.f32.gmra.mxu0 %v1200
    %v2321 = vpop.f32.mrf.mxu0
    %v2322 = vadd.f32 0.0, %v2321
    %v2323 = vpop.f32.mrf.mxu0
    %v2324 = vadd.f32 0.0, %v2323
    %2325 = vmatprep.mubr.f32.mxu0 %v1208
    %2326 = vmatmul.mubr.f32.gmra.mxu0 %v1206
    %v2327 = vpop.f32.mrf.mxu0
    %v2328 = vadd.f32 0.0, %v2327
    %v2329 = vpop.f32.mrf.mxu0
    %v2330 = vadd.f32 0.0, %v2329
    %2331 = vmatprep.mubr.f32.mxu0 %v1214
    %2332 = vmatmul.mubr.f32.gmra.mxu0 %v1212
    %v2333 = vpop.f32.mrf.mxu0
    %v2334 = vadd.f32 0.0, %v2333
    %v2335 = vpop.f32.mrf.mxu0
    %v2336 = vadd.f32 0.0, %v2335
    %2337 = vmatprep.mubr.f32.mxu0 %v1220
    %2338 = vmatmul.mubr.f32.gmra.mxu0 %v1218
    %v2339 = vpop.f32.mrf.mxu0
    %v2340 = vadd.f32 0.0, %v2339
    %v2341 = vpop.f32.mrf.mxu0
    %v2342 = vadd.f32 0.0, %v2341
    %2343 = vmatprep.mubr.f32.mxu0 %v1226
    %2344 = vmatmul.mubr.f32.gmra.mxu0 %v1224
    %v2345 = vpop.f32.mrf.mxu0
    %v2346 = vadd.f32 0.0, %v2345
    %v2347 = vpop.f32.mrf.mxu0
    %v2348 = vadd.f32 0.0, %v2347
    %2349 = vmatprep.mubr.f32.mxu0 %v1232
    %2350 = vmatmul.mubr.f32.gmra.mxu0 %v1230
    %v2351 = vpop.f32.mrf.mxu0
    %v2352 = vadd.f32 0.0, %v2351
    %v2353 = vpop.f32.mrf.mxu0
    %v2354 = vadd.f32 0.0, %v2353
    %2355 = vmatprep.mubr.f32.mxu0 %v1238
    %2356 = vmatmul.mubr.f32.gmra.mxu0 %v1236
    %v2357 = vpop.f32.mrf.mxu0
    %v2358 = vadd.f32 0.0, %v2357
    %v2359 = vpop.f32.mrf.mxu0
    %v2360 = vadd.f32 0.0, %v2359
    %2361 = vmatprep.mubr.f32.mxu0 %v1244
    %2362 = vmatmul.mubr.f32.gmra.mxu0 %v1242
    %v2363 = vpop.f32.mrf.mxu0
    %v2364 = vadd.f32 0.0, %v2363
    %v2365 = vpop.f32.mrf.mxu0
    %v2366 = vadd.f32 0.0, %v2365
    %2367 = vmatprep.mubr.f32.mxu0 %v1250
    %2368 = vmatmul.mubr.f32.gmra.mxu0 %v1248
    %v2369 = vpop.f32.mrf.mxu0
    %v2370 = vadd.f32 0.0, %v2369
    %v2371 = vpop.f32.mrf.mxu0
    %v2372 = vadd.f32 0.0, %v2371
    %2373 = vmatprep.mubr.f32.mxu0 %v1398
    %2374 = vmatmul.mubr.f32.gmra.mxu0 %v1397
    %v2375 = vpop.f32.mrf.mxu0
    %v2376 = vadd.f32 0.0, %v2375
    %v2377 = vpop.f32.mrf.mxu0
    %v2378 = vadd.f32 0.0, %v2377
    %2379 = vmatprep.mubr.f32.mxu0 %v1401
    %2380 = vmatmul.mubr.f32.gmra.mxu0 %v1400
    %v2381 = vpop.f32.mrf.mxu0
    %v2382 = vadd.f32 0.0, %v2381
    %v2383 = vpop.f32.mrf.mxu0
    %v2384 = vadd.f32 0.0, %v2383
    %2385 = vmatprep.mubr.f32.mxu0 %v1404
    %2386 = vmatmul.mubr.f32.gmra.mxu0 %v1403
    %v2387 = vpop.f32.mrf.mxu0
    %v2388 = vadd.f32 0.0, %v2387
    %v2389 = vpop.f32.mrf.mxu0
    %v2390 = vadd.f32 0.0, %v2389
    %2391 = vmatprep.mubr.f32.mxu0 %v1407
    %2392 = vmatmul.mubr.f32.gmra.mxu0 %v1406
    %v2393 = vpop.f32.mrf.mxu0
    %v2394 = vadd.f32 0.0, %v2393
    %v2395 = vpop.f32.mrf.mxu0
    %v2396 = vadd.f32 0.0, %v2395
    %2397 = vmatprep.mubr.f32.mxu0 %v1410
    %2398 = vmatmul.mubr.f32.gmra.mxu0 %v1409
    %v2399 = vpop.f32.mrf.mxu0
    %v2400 = vadd.f32 0.0, %v2399
    %v2401 = vpop.f32.mrf.mxu0
    %v2402 = vadd.f32 0.0, %v2401
    %2403 = vmatprep.mubr.f32.mxu0 %v1413
    %2404 = vmatmul.mubr.f32.gmra.mxu0 %v1412
    %v2405 = vpop.f32.mrf.mxu0
    %v2406 = vadd.f32 0.0, %v2405
    %v2407 = vpop.f32.mrf.mxu0
    %v2408 = vadd.f32 0.0, %v2407
    %2409 = vmatprep.mubr.f32.mxu0 %v1416
    %2410 = vmatmul.mubr.f32.gmra.mxu0 %v1415
    %v2411 = vpop.f32.mrf.mxu0
    %v2412 = vadd.f32 0.0, %v2411
    %v2413 = vpop.f32.mrf.mxu0
    %v2414 = vadd.f32 0.0, %v2413
    %2415 = vmatprep.mubr.f32.mxu0 %v1419
    %2416 = vmatmul.mubr.f32.gmra.mxu0 %v1418
    %v2417 = vpop.f32.mrf.mxu0
    %v2418 = vadd.f32 0.0, %v2417
    %v2419 = vpop.f32.mrf.mxu0
    %v2420 = vadd.f32 0.0, %v2419
    %2421 = vmatprep.mubr.f32.mxu0 %v1422
    %2422 = vmatmul.mubr.f32.gmra.mxu0 %v1421
    %v2423 = vpop.f32.mrf.mxu0
    %v2424 = vadd.f32 0.0, %v2423
    %v2425 = vpop.f32.mrf.mxu0
    %v2426 = vadd.f32 0.0, %v2425
    %2427 = vmatprep.mubr.f32.mxu0 %v1425
    %2428 = vmatmul.mubr.f32.gmra.mxu0 %v1424
    %v2429 = vpop.f32.mrf.mxu0
    %v2430 = vadd.f32 0.0, %v2429
    %v2431 = vpop.f32.mrf.mxu0
    %v2432 = vadd.f32 0.0, %v2431
    %2433 = vmatprep.mubr.f32.mxu0 %v1428
    %2434 = vmatmul.mubr.f32.gmra.mxu0 %v1427
    %v2435 = vpop.f32.mrf.mxu0
    %v2436 = vadd.f32 0.0, %v2435
    %v2437 = vpop.f32.mrf.mxu0
    %v2438 = vadd.f32 0.0, %v2437
    %2439 = vmatprep.mubr.f32.mxu0 %v1431
    %2440 = vmatmul.mubr.f32.gmra.mxu0 %v1430
    %v2441 = vpop.f32.mrf.mxu0
    %v2442 = vadd.f32 0.0, %v2441
    %v2443 = vpop.f32.mrf.mxu0
    %v2444 = vadd.f32 0.0, %v2443
    %2445 = vmatprep.mubr.f32.mxu0 %v1434
    %2446 = vmatmul.mubr.f32.gmra.mxu0 %v1433
    %v2447 = vpop.f32.mrf.mxu0
    %v2448 = vadd.f32 0.0, %v2447
    %v2449 = vpop.f32.mrf.mxu0
    %v2450 = vadd.f32 0.0, %v2449
    %2451 = vmatprep.mubr.f32.mxu0 %v1437
    %2452 = vmatmul.mubr.f32.gmra.mxu0 %v1436
    %v2453 = vpop.f32.mrf.mxu0
    %v2454 = vadd.f32 0.0, %v2453
    %v2455 = vpop.f32.mrf.mxu0
    %v2456 = vadd.f32 0.0, %v2455
    %2457 = vmatprep.mubr.f32.mxu0 %v1440
    %2458 = vmatmul.mubr.f32.gmra.mxu0 %v1439
    %v2459 = vpop.f32.mrf.mxu0
    %v2460 = vadd.f32 0.0, %v2459
    %v2461 = vpop.f32.mrf.mxu0
    %v2462 = vadd.f32 0.0, %v2461
    %2463 = vmatprep.mubr.f32.mxu0 %v1443
    %2464 = vmatmul.mubr.f32.gmra.mxu0 %v1442
    %v2465 = vpop.f32.mrf.mxu0
    %v2466 = vadd.f32 0.0, %v2465
    %v2467 = vpop.f32.mrf.mxu0
    %v2468 = vadd.f32 0.0, %v2467
    %2469 = vmatprep.mubr.f32.mxu0 %v1446
    %2470 = vmatmul.mubr.f32.gmra.mxu0 %v1445
    %v2471 = vpop.f32.mrf.mxu0
    %v2472 = vadd.f32 0.0, %v2471
    %v2473 = vpop.f32.mrf.mxu0
    %v2474 = vadd.f32 0.0, %v2473
    %2475 = vmatprep.mubr.f32.mxu0 %v1449
    %2476 = vmatmul.mubr.f32.gmra.mxu0 %v1448
    %v2477 = vpop.f32.mrf.mxu0
    %v2478 = vadd.f32 0.0, %v2477
    %v2479 = vpop.f32.mrf.mxu0
    %v2480 = vadd.f32 0.0, %v2479
    %2481 = vmatprep.mubr.f32.mxu0 %v1452
    %2482 = vmatmul.mubr.f32.gmra.mxu0 %v1451
    %v2483 = vpop.f32.mrf.mxu0
    %v2484 = vadd.f32 0.0, %v2483
    %v2485 = vpop.f32.mrf.mxu0
    %v2486 = vadd.f32 0.0, %v2485
    %2487 = vmatprep.mubr.f32.mxu0 %v1455
    %2488 = vmatmul.mubr.f32.gmra.mxu0 %v1454
    %v2489 = vpop.f32.mrf.mxu0
    %v2490 = vadd.f32 0.0, %v2489
    %v2491 = vpop.f32.mrf.mxu0
    %v2492 = vadd.f32 0.0, %v2491
    %2493 = vmatprep.mubr.f32.mxu0 %v1458
    %2494 = vmatmul.mubr.f32.gmra.mxu0 %v1457
    %v2495 = vpop.f32.mrf.mxu0
    %v2496 = vadd.f32 0.0, %v2495
    %v2497 = vpop.f32.mrf.mxu0
    %v2498 = vadd.f32 0.0, %v2497
    %2499 = vmatprep.mubr.f32.mxu0 %v1461
    %2500 = vmatmul.mubr.f32.gmra.mxu0 %v1460
    %v2501 = vpop.f32.mrf.mxu0
    %v2502 = vadd.f32 0.0, %v2501
    %v2503 = vpop.f32.mrf.mxu0
    %v2504 = vadd.f32 0.0, %v2503
    %2505 = vmatprep.mubr.f32.mxu0 %v1464
    %2506 = vmatmul.mubr.f32.gmra.mxu0 %v1463
    %v2507 = vpop.f32.mrf.mxu0
    %v2508 = vadd.f32 0.0, %v2507
    %v2509 = vpop.f32.mrf.mxu0
    %v2510 = vadd.f32 0.0, %v2509
    %2511 = vmatprep.mubr.f32.mxu0 %v1467
    %2512 = vmatmul.mubr.f32.gmra.mxu0 %v1466
    %v2513 = vpop.f32.mrf.mxu0
    %v2514 = vadd.f32 0.0, %v2513
    %v2515 = vpop.f32.mrf.mxu0
    %v2516 = vadd.f32 0.0, %v2515
    %2517 = vdwg.mxu0
    %2518 = vmatprep.subr.mxu0 0.0
    %2519 = vmatpush1.msra.mxu0 0.0
    %2520 = vmatprep.subr.mxu0 %v1601
    %2521 = vmatpush1.msra.mxu0 %v1598
    %2522 = vmatprep.subr.mxu0 %v608
    %2523 = vmatpush1.msra.mxu0 %v607
    %2524 = vmatprep.subr.mxu0 %v604
    %2525 = vmatpush1.msra.mxu0 %v603
    %2526 = vmatprep.subr.mxu0 %v600
    %2527 = vmatpush1.msra.mxu0 %v599
    %2528 = vmatprep.subr.mxu0 %v596
    %2529 = vmatpush1.msra.mxu0 %v595
    %2530 = vmatprep.subr.mxu0 %v592
    %2531 = vmatpush1.msra.mxu0 %v591
    %2532 = vmatprep.subr.mxu0 %v588
    %2533 = vmatpush1.msra.mxu0 %v587
    %2534 = vmatprep.subr.mxu0 %v584
    %2535 = vmatpush1.msra.mxu0 %v583
    %2536 = vmatprep.subr.mxu0 %v580
    %2537 = vmatpush1.msra.mxu0 %v579
    %2538 = vmatprep.subr.mxu0 %v576
    %2539 = vmatpush1.msra.mxu0 %v575
    %2540 = vmatprep.subr.mxu0 %v572
    %2541 = vmatpush1.msra.mxu0 %v571
    %2542 = vmatprep.subr.mxu0 %v568
    %2543 = vmatpush1.msra.mxu0 %v567
    %2544 = vmatprep.subr.mxu0 %v564
    %2545 = vmatpush1.msra.mxu0 %v563
    %2546 = vmatprep.subr.mxu0 %v560
    %2547 = vmatpush1.msra.mxu0 %v559
    %2548 = vmatprep.subr.mxu0 %v556
    %2549 = vmatpush1.msra.mxu0 %v555
    %2550 = vmatprep.subr.mxu0 0.0
    %2551 = vmatpush2.msra.mxu0 0.0
    %2552 = vmatprep.subr.mxu0 0.0
    %2553 = vmatpush2.msra.mxu0 0.0
    %2554 = vmatprep.subr.mxu0 0.0
    %2555 = vmatpush2.msra.mxu0 0.0
    %2556 = vmatprep.subr.mxu0 0.0
    %2557 = vmatpush2.msra.mxu0 0.0
    %2558 = vmatprep.subr.mxu0 0.0
    %2559 = vmatpush2.msra.mxu0 0.0
    %2560 = vmatprep.subr.mxu0 0.0
    %2561 = vmatpush2.msra.mxu0 0.0
    %2562 = vmatprep.subr.mxu0 0.0
    %2563 = vmatpush2.msra.mxu0 0.0
    %2564 = vmatprep.subr.mxu0 0.0
    %2565 = vmatpush2.msra.mxu0 0.0
    %2566 = vmatprep.subr.mxu0 0.0
    %2567 = vmatpush2.msra.mxu0 0.0
    %2568 = vmatprep.subr.mxu0 0.0
    %2569 = vmatpush2.msra.mxu0 0.0
    %2570 = vmatprep.subr.mxu0 0.0
    %2571 = vmatpush2.msra.mxu0 0.0
    %2572 = vmatprep.subr.mxu0 0.0
    %2573 = vmatpush2.msra.mxu0 0.0
    %2574 = vmatprep.subr.mxu0 0.0
    %2575 = vmatpush2.msra.mxu0 0.0
    %2576 = vmatprep.subr.mxu0 0.0
    %2577 = vmatpush2.msra.mxu0 0.0
    %2578 = vmatprep.subr.mxu0 0.0
    %2579 = vmatpush2.msra.mxu0 0.0
    %2580 = vmatprep.subr.mxu0 0.0
    %2581 = vmatpush2.msra.mxu0 0.0
    %2582 = vmatprep.mubr.f32.mxu0 0.0
    %2583 = vmatmul.mubr.f32.gmra.mxu0 %v1471
    %v2584 = vpop.f32.mrf.mxu0
    %v2585 = vadd.f32 %v2280, %v2584
    %v2586 = vpop.f32.mrf.mxu0
    %v2587 = vadd.f32 %v2282, %v2586
    %2588 = vmatprep.mubr.f32.mxu0 0.0
    %2589 = vmatmul.mubr.f32.gmra.mxu0 %v1474
    %v2590 = vpop.f32.mrf.mxu0
    %v2591 = vadd.f32 %v2286, %v2590
    %v2592 = vpop.f32.mrf.mxu0
    %v2593 = vadd.f32 %v2288, %v2592
    %2594 = vmatprep.mubr.f32.mxu0 0.0
    %2595 = vmatmul.mubr.f32.gmra.mxu0 %v1477
    %v2596 = vpop.f32.mrf.mxu0
    %v2597 = vadd.f32 %v2292, %v2596
    %v2598 = vpop.f32.mrf.mxu0
    %v2599 = vadd.f32 %v2294, %v2598
    %2600 = vmatprep.mubr.f32.mxu0 0.0
    %2601 = vmatmul.mubr.f32.gmra.mxu0 %v1480
    %v2602 = vpop.f32.mrf.mxu0
    %v2603 = vadd.f32 %v2298, %v2602
    %v2604 = vpop.f32.mrf.mxu0
    %v2605 = vadd.f32 %v2300, %v2604
    %2606 = vmatprep.mubr.f32.mxu0 0.0
    %2607 = vmatmul.mubr.f32.gmra.mxu0 %v1483
    %v2608 = vpop.f32.mrf.mxu0
    %v2609 = vadd.f32 %v2304, %v2608
    %v2610 = vpop.f32.mrf.mxu0
    %v2611 = vadd.f32 %v2306, %v2610
    %2612 = vmatprep.mubr.f32.mxu0 0.0
    %2613 = vmatmul.mubr.f32.gmra.mxu0 %v1486
    %v2614 = vpop.f32.mrf.mxu0
    %v2615 = vadd.f32 %v2310, %v2614
    %v2616 = vpop.f32.mrf.mxu0
    %v2617 = vadd.f32 %v2312, %v2616
    %2618 = vmatprep.mubr.f32.mxu0 0.0
    %2619 = vmatmul.mubr.f32.gmra.mxu0 %v1489
    %v2620 = vpop.f32.mrf.mxu0
    %v2621 = vadd.f32 %v2316, %v2620
    %v2622 = vpop.f32.mrf.mxu0
    %v2623 = vadd.f32 %v2318, %v2622
    %2624 = vmatprep.mubr.f32.mxu0 0.0
    %2625 = vmatmul.mubr.f32.gmra.mxu0 %v1492
    %v2626 = vpop.f32.mrf.mxu0
    %v2627 = vadd.f32 %v2322, %v2626
    %v2628 = vpop.f32.mrf.mxu0
    %v2629 = vadd.f32 %v2324, %v2628
    %2630 = vmatprep.mubr.f32.mxu0 0.0
    %2631 = vmatmul.mubr.f32.gmra.mxu0 %v1495
    %v2632 = vpop.f32.mrf.mxu0
    %v2633 = vadd.f32 %v2328, %v2632
    %v2634 = vpop.f32.mrf.mxu0
    %v2635 = vadd.f32 %v2330, %v2634
    %2636 = vmatprep.mubr.f32.mxu0 0.0
    %2637 = vmatmul.mubr.f32.gmra.mxu0 %v1498
    %v2638 = vpop.f32.mrf.mxu0
    %v2639 = vadd.f32 %v2334, %v2638
    %v2640 = vpop.f32.mrf.mxu0
    %v2641 = vadd.f32 %v2336, %v2640
    %2642 = vmatprep.mubr.f32.mxu0 0.0
    %2643 = vmatmul.mubr.f32.gmra.mxu0 %v1501
    %v2644 = vpop.f32.mrf.mxu0
    %v2645 = vadd.f32 %v2340, %v2644
    %v2646 = vpop.f32.mrf.mxu0
    %v2647 = vadd.f32 %v2342, %v2646
    %2648 = vmatprep.mubr.f32.mxu0 0.0
    %2649 = vmatmul.mubr.f32.gmra.mxu0 %v1504
    %v2650 = vpop.f32.mrf.mxu0
    %v2651 = vadd.f32 %v2346, %v2650
    %v2652 = vpop.f32.mrf.mxu0
    %v2653 = vadd.f32 %v2348, %v2652
    %2654 = vmatprep.mubr.f32.mxu0 0.0
    %2655 = vmatmul.mubr.f32.gmra.mxu0 %v1507
    %v2656 = vpop.f32.mrf.mxu0
    %v2657 = vadd.f32 %v2352, %v2656
    %v2658 = vpop.f32.mrf.mxu0
    %v2659 = vadd.f32 %v2354, %v2658
    %2660 = vmatprep.mubr.f32.mxu0 0.0
    %2661 = vmatmul.mubr.f32.gmra.mxu0 %v1510
    %v2662 = vpop.f32.mrf.mxu0
    %v2663 = vadd.f32 %v2358, %v2662
    %v2664 = vpop.f32.mrf.mxu0
    %v2665 = vadd.f32 %v2360, %v2664
    %2666 = vmatprep.mubr.f32.mxu0 0.0
    %2667 = vmatmul.mubr.f32.gmra.mxu0 %v1513
    %v2668 = vpop.f32.mrf.mxu0
    %v2669 = vadd.f32 %v2364, %v2668
    %v2670 = vpop.f32.mrf.mxu0
    %v2671 = vadd.f32 %v2366, %v2670
    %2672 = vmatprep.mubr.f32.mxu0 0.0
    %2673 = vmatmul.mubr.f32.gmra.mxu0 %v1516
    %v2674 = vpop.f32.mrf.mxu0
    %v2675 = vadd.f32 %v2370, %v2674
    %v2676 = vpop.f32.mrf.mxu0
    %v2677 = vadd.f32 %v2372, %v2676
    %2678 = vmatprep.mubr.f32.mxu0 0.0
    %2679 = vmatmul.mubr.f32.gmra.mxu0 %v1519
    %v2680 = vpop.f32.mrf.mxu0
    %v2681 = vadd.f32 %v2376, %v2680
    %v2682 = vpop.f32.mrf.mxu0
    %v2683 = vadd.f32 %v2378, %v2682
    %2684 = vmatprep.mubr.f32.mxu0 0.0
    %2685 = vmatmul.mubr.f32.gmra.mxu0 %v1522
    %v2686 = vpop.f32.mrf.mxu0
    %v2687 = vadd.f32 %v2382, %v2686
    %v2688 = vpop.f32.mrf.mxu0
    %v2689 = vadd.f32 %v2384, %v2688
    %2690 = vmatprep.mubr.f32.mxu0 0.0
    %2691 = vmatmul.mubr.f32.gmra.mxu0 %v1525
    %v2692 = vpop.f32.mrf.mxu0
    %v2693 = vadd.f32 %v2388, %v2692
    %v2694 = vpop.f32.mrf.mxu0
    %v2695 = vadd.f32 %v2390, %v2694
    %2696 = vmatprep.mubr.f32.mxu0 0.0
    %2697 = vmatmul.mubr.f32.gmra.mxu0 %v1528
    %v2698 = vpop.f32.mrf.mxu0
    %v2699 = vadd.f32 %v2394, %v2698
    %v2700 = vpop.f32.mrf.mxu0
    %v2701 = vadd.f32 %v2396, %v2700
    %2702 = vmatprep.mubr.f32.mxu0 0.0
    %2703 = vmatmul.mubr.f32.gmra.mxu0 %v1531
    %v2704 = vpop.f32.mrf.mxu0
    %v2705 = vadd.f32 %v2400, %v2704
    %v2706 = vpop.f32.mrf.mxu0
    %v2707 = vadd.f32 %v2402, %v2706
    %2708 = vmatprep.mubr.f32.mxu0 0.0
    %2709 = vmatmul.mubr.f32.gmra.mxu0 %v1534
    %v2710 = vpop.f32.mrf.mxu0
    %v2711 = vadd.f32 %v2406, %v2710
    %v2712 = vpop.f32.mrf.mxu0
    %v2713 = vadd.f32 %v2408, %v2712
    %2714 = vmatprep.mubr.f32.mxu0 0.0
    %2715 = vmatmul.mubr.f32.gmra.mxu0 %v1537
    %v2716 = vpop.f32.mrf.mxu0
    %v2717 = vadd.f32 %v2412, %v2716
    %v2718 = vpop.f32.mrf.mxu0
    %v2719 = vadd.f32 %v2414, %v2718
    %2720 = vmatprep.mubr.f32.mxu0 0.0
    %2721 = vmatmul.mubr.f32.gmra.mxu0 %v1540
    %v2722 = vpop.f32.mrf.mxu0
    %v2723 = vadd.f32 %v2418, %v2722
    %v2724 = vpop.f32.mrf.mxu0
    %v2725 = vadd.f32 %v2420, %v2724
    %2726 = vmatprep.mubr.f32.mxu0 0.0
    %2727 = vmatmul.mubr.f32.gmra.mxu0 %v1543
    %v2728 = vpop.f32.mrf.mxu0
    %v2729 = vadd.f32 %v2424, %v2728
    %v2730 = vpop.f32.mrf.mxu0
    %v2731 = vadd.f32 %v2426, %v2730
    %2732 = vmatprep.mubr.f32.mxu0 0.0
    %2733 = vmatmul.mubr.f32.gmra.mxu0 %v1546
    %v2734 = vpop.f32.mrf.mxu0
    %v2735 = vadd.f32 %v2430, %v2734
    %v2736 = vpop.f32.mrf.mxu0
    %v2737 = vadd.f32 %v2432, %v2736
    %2738 = vmatprep.mubr.f32.mxu0 0.0
    %2739 = vmatmul.mubr.f32.gmra.mxu0 %v1549
    %v2740 = vpop.f32.mrf.mxu0
    %v2741 = vadd.f32 %v2436, %v2740
    %v2742 = vpop.f32.mrf.mxu0
    %v2743 = vadd.f32 %v2438, %v2742
    %2744 = vmatprep.mubr.f32.mxu0 0.0
    %2745 = vmatmul.mubr.f32.gmra.mxu0 %v1552
    %v2746 = vpop.f32.mrf.mxu0
    %v2747 = vadd.f32 %v2442, %v2746
    %v2748 = vpop.f32.mrf.mxu0
    %v2749 = vadd.f32 %v2444, %v2748
    %2750 = vmatprep.mubr.f32.mxu0 0.0
    %2751 = vmatmul.mubr.f32.gmra.mxu0 %v1555
    %v2752 = vpop.f32.mrf.mxu0
    %v2753 = vadd.f32 %v2448, %v2752
    %v2754 = vpop.f32.mrf.mxu0
    %v2755 = vadd.f32 %v2450, %v2754
    %2756 = vmatprep.mubr.f32.mxu0 0.0
    %2757 = vmatmul.mubr.f32.gmra.mxu0 %v1558
    %v2758 = vpop.f32.mrf.mxu0
    %v2759 = vadd.f32 %v2454, %v2758
    %v2760 = vpop.f32.mrf.mxu0
    %v2761 = vadd.f32 %v2456, %v2760
    %2762 = vmatprep.mubr.f32.mxu0 0.0
    %2763 = vmatmul.mubr.f32.gmra.mxu0 %v1561
    %v2764 = vpop.f32.mrf.mxu0
    %v2765 = vadd.f32 %v2460, %v2764
    %v2766 = vpop.f32.mrf.mxu0
    %v2767 = vadd.f32 %v2462, %v2766
    %2768 = vmatprep.mubr.f32.mxu0 0.0
    %2769 = vmatmul.mubr.f32.gmra.mxu0 %v1564
    %v2770 = vpop.f32.mrf.mxu0
    %v2771 = vadd.f32 %v2466, %v2770
    %v2772 = vpop.f32.mrf.mxu0
    %v2773 = vadd.f32 %v2468, %v2772
    %2774 = vmatprep.mubr.f32.mxu0 0.0
    %2775 = vmatmul.mubr.f32.gmra.mxu0 %v1567
    %v2776 = vpop.f32.mrf.mxu0
    %v2777 = vadd.f32 %v2472, %v2776
    %v2778 = vpop.f32.mrf.mxu0
    %v2779 = vadd.f32 %v2474, %v2778
    %2780 = vmatprep.mubr.f32.mxu0 0.0
    %2781 = vmatmul.mubr.f32.gmra.mxu0 %v1570
    %v2782 = vpop.f32.mrf.mxu0
    %v2783 = vadd.f32 %v2478, %v2782
    %v2784 = vpop.f32.mrf.mxu0
    %v2785 = vadd.f32 %v2480, %v2784
    %2786 = vmatprep.mubr.f32.mxu0 0.0
    %2787 = vmatmul.mubr.f32.gmra.mxu0 %v1573
    %v2788 = vpop.f32.mrf.mxu0
    %v2789 = vadd.f32 %v2484, %v2788
    %v2790 = vpop.f32.mrf.mxu0
    %v2791 = vadd.f32 %v2486, %v2790
    %2792 = vmatprep.mubr.f32.mxu0 0.0
    %2793 = vmatmul.mubr.f32.gmra.mxu0 %v1576
    %v2794 = vpop.f32.mrf.mxu0
    %v2795 = vadd.f32 %v2490, %v2794
    %v2796 = vpop.f32.mrf.mxu0
    %v2797 = vadd.f32 %v2492, %v2796
    %2798 = vmatprep.mubr.f32.mxu0 0.0
    %2799 = vmatmul.mubr.f32.gmra.mxu0 %v1579
    %v2800 = vpop.f32.mrf.mxu0
    %v2801 = vadd.f32 %v2496, %v2800
    %v2802 = vpop.f32.mrf.mxu0
    %v2803 = vadd.f32 %v2498, %v2802
    %2804 = vmatprep.mubr.f32.mxu0 0.0
    %2805 = vmatmul.mubr.f32.gmra.mxu0 %v1582
    %v2806 = vpop.f32.mrf.mxu0
    %v2807 = vadd.f32 %v2502, %v2806
    %v2808 = vpop.f32.mrf.mxu0
    %v2809 = vadd.f32 %v2504, %v2808
    %2810 = vmatprep.mubr.f32.mxu0 0.0
    %2811 = vmatmul.mubr.f32.gmra.mxu0 %v1585
    %v2812 = vpop.f32.mrf.mxu0
    %v2813 = vadd.f32 %v2508, %v2812
    %v2814 = vpop.f32.mrf.mxu0
    %v2815 = vadd.f32 %v2510, %v2814
    %2816 = vmatprep.mubr.f32.mxu0 0.0
    %2817 = vmatmul.mubr.f32.gmra.mxu0 %v1588
    %v2818 = vpop.f32.mrf.mxu0
    %v2819 = vadd.f32 %v2514, %v2818
    %v2820 = vpop.f32.mrf.mxu0
    %v2821 = vadd.f32 %v2516, %v2820
    %2822 = vdwg.mxu0
    %v2824 = vsel %vm173, %v615, 0
    %v2827 = vsel %vm173, %v618, 0
    %v2830 = vsel %vm173, %v621, 0
    %v2833 = vsel %vm173, %v624, 0
    %v2836 = vsel %vm173, %v627, 0
    %v2839 = vsel %vm173, %v630, 0
    %v2842 = vsel %vm173, %v633, 0
    %v2845 = vsel %vm173, %v636, 0
    %v2848 = vsel %vm173, %v639, 0
    %v2851 = vsel %vm173, %v642, 0
    %v2854 = vsel %vm173, %v645, 0
    %v2857 = vsel %vm173, %v648, 0
    %v2860 = vsel %vm173, %v651, 0
    %v2863 = vsel %vm173, %v654, 0
    %v2866 = vsel %vm173, %v657, 0
    %v2869 = vsel %vm173, %v660, 0
    %v2872 = vsel %vm173, %v663, 0
    %v2875 = vsel %vm173, %v666, 0
    %v2878 = vsel %vm173, %v669, 0
    %v2881 = vsel %vm173, %v672, 0
    %v2884 = vsel %vm173, %v675, 0
    %v2887 = vsel %vm173, %v678, 0
    %v2890 = vsel %vm173, %v681, 0
    %v2893 = vsel %vm173, %v684, 0
    %v2896 = vsel %vm173, %v687, 0
    %v2899 = vsel %vm173, %v690, 0
    %v2902 = vsel %vm173, %v693, 0
    %v2905 = vsel %vm173, %v696, 0
    %v2908 = vsel %vm173, %v699, 0
    %v2911 = vsel %vm173, %v702, 0
    %v2914 = vsel %vm173, %v705, 0
    %v2917 = vsel %vm173, %v708, 0
    %v2920 = vsel %vm173, %v711, 0
    %v2923 = vsel %vm173, %v714, 0
    %v2926 = vsel %vm173, %v717, 0
    %v2929 = vsel %vm173, %v720, 0
    %v2932 = vsel %vm173, %v723, 0
    %v2935 = vsel %vm173, %v726, 0
    %v2938 = vsel %vm173, %v729, 0
    %v2941 = vsel %vm173, %v732, 0
    %v2944 = vsel %vm173, %v735, 0
    %v2947 = vsel %vm173, %v738, 0
    %v2950 = vsel %vm173, %v741, 0
    %v2953 = vsel %vm173, %v744, 0
    %v2956 = vsel %vm173, %v747, 0
    %2958 = vmatprep.subr.mxu0 %v2067
    %2959 = vmatpush1.msra.mxu0 %v2065
    %2960 = vmatprep.subr.mxu0 %v2061
    %2961 = vmatpush1.msra.mxu0 %v2059
    %2962 = vmatprep.subr.mxu0 %v2055
    %2963 = vmatpush1.msra.mxu0 %v2053
    %2964 = vmatprep.subr.mxu0 %v2049
    %2965 = vmatpush1.msra.mxu0 %v2047
    %2966 = vmatprep.subr.mxu0 %v2043
    %2967 = vmatpush1.msra.mxu0 %v2041
    %2968 = vmatprep.subr.mxu0 %v2037
    %2969 = vmatpush1.msra.mxu0 %v2035
    %2970 = vmatprep.subr.mxu0 %v2031
    %2971 = vmatpush1.msra.mxu0 %v2029
    %2972 = vmatprep.subr.mxu0 %v2025
    %2973 = vmatpush1.msra.mxu0 %v2023
    %2974 = vmatprep.subr.mxu0 %v2019
    %2975 = vmatpush1.msra.mxu0 %v2017
    %2976 = vmatprep.subr.mxu0 %v2013
    %2977 = vmatpush1.msra.mxu0 %v2011
    %2978 = vmatprep.subr.mxu0 %v2007
    %2979 = vmatpush1.msra.mxu0 %v2005
    %2980 = vmatprep.subr.mxu0 %v2001
    %2981 = vmatpush1.msra.mxu0 %v1999
    %2982 = vmatprep.subr.mxu0 %v1995
    %2983 = vmatpush1.msra.mxu0 %v1993
    %2984 = vmatprep.subr.mxu0 %v1989
    %2985 = vmatpush1.msra.mxu0 %v1987
    %2986 = vmatprep.subr.mxu0 %v1983
    %2987 = vmatpush1.msra.mxu0 %v1981
    %2988 = vmatprep.subr.mxu0 %v1977
    %2989 = vmatpush1.msra.mxu0 %v1975
    %2990 = vmatprep.subr.mxu0 %v2163
    %2991 = vmatpush2.msra.mxu0 %v2161
    %2992 = vmatprep.subr.mxu0 %v2157
    %2993 = vmatpush2.msra.mxu0 %v2155
    %2994 = vmatprep.subr.mxu0 %v2151
    %2995 = vmatpush2.msra.mxu0 %v2149
    %2996 = vmatprep.subr.mxu0 %v2145
    %2997 = vmatpush2.msra.mxu0 %v2143
    %2998 = vmatprep.subr.mxu0 %v2139
    %2999 = vmatpush2.msra.mxu0 %v2137
    %3000 = vmatprep.subr.mxu0 %v2133
    %3001 = vmatpush2.msra.mxu0 %v2131
    %3002 = vmatprep.subr.mxu0 %v2127
    %3003 = vmatpush2.msra.mxu0 %v2125
    %3004 = vmatprep.subr.mxu0 %v2121
    %3005 = vmatpush2.msra.mxu0 %v2119
    %3006 = vmatprep.subr.mxu0 %v2115
    %3007 = vmatpush2.msra.mxu0 %v2113
    %3008 = vmatprep.subr.mxu0 %v2109
    %3009 = vmatpush2.msra.mxu0 %v2107
    %3010 = vmatprep.subr.mxu0 %v2103
    %3011 = vmatpush2.msra.mxu0 %v2101
    %3012 = vmatprep.subr.mxu0 %v2097
    %3013 = vmatpush2.msra.mxu0 %v2095
    %3014 = vmatprep.subr.mxu0 %v2091
    %3015 = vmatpush2.msra.mxu0 %v2089
    %3016 = vmatprep.subr.mxu0 %v2085
    %3017 = vmatpush2.msra.mxu0 %v2083
    %3018 = vmatprep.subr.mxu0 %v2079
    %3019 = vmatpush2.msra.mxu0 %v2077
    %3020 = vmatprep.subr.mxu0 %v2073
    %3021 = vmatpush2.msra.mxu0 %v2071
    %3022 = vmatprep.mubr.f32.mxu0 %v614
    %3023 = vmatmul.mubr.f32.gmra.mxu0 %v613
    %v3024 = vpop.f32.mrf.mxu0
    %v3025 = vadd.f32 0.0, %v3024
    %v3026 = vpop.f32.mrf.mxu0
    %v3027 = vadd.f32 0.0, %v3026
    %3028 = vmatprep.mubr.f32.mxu0 %v617
    %3029 = vmatmul.mubr.f32.gmra.mxu0 %v616
    %v3030 = vpop.f32.mrf.mxu0
    %v3031 = vadd.f32 0.0, %v3030
    %v3032 = vpop.f32.mrf.mxu0
    %v3033 = vadd.f32 0.0, %v3032
    %3034 = vmatprep.mubr.f32.mxu0 %v620
    %3035 = vmatmul.mubr.f32.gmra.mxu0 %v619
    %v3036 = vpop.f32.mrf.mxu0
    %v3037 = vadd.f32 0.0, %v3036
    %v3038 = vpop.f32.mrf.mxu0
    %v3039 = vadd.f32 0.0, %v3038
    %3040 = vmatprep.mubr.f32.mxu0 %v623
    %3041 = vmatmul.mubr.f32.gmra.mxu0 %v622
    %v3042 = vpop.f32.mrf.mxu0
    %v3043 = vadd.f32 0.0, %v3042
    %v3044 = vpop.f32.mrf.mxu0
    %v3045 = vadd.f32 0.0, %v3044
    %3046 = vmatprep.mubr.f32.mxu0 %v626
    %3047 = vmatmul.mubr.f32.gmra.mxu0 %v625
    %v3048 = vpop.f32.mrf.mxu0
    %v3049 = vadd.f32 0.0, %v3048
    %v3050 = vpop.f32.mrf.mxu0
    %v3051 = vadd.f32 0.0, %v3050
    %3052 = vmatprep.mubr.f32.mxu0 %v629
    %3053 = vmatmul.mubr.f32.gmra.mxu0 %v628
    %v3054 = vpop.f32.mrf.mxu0
    %v3055 = vadd.f32 0.0, %v3054
    %v3056 = vpop.f32.mrf.mxu0
    %v3057 = vadd.f32 0.0, %v3056
    %3058 = vmatprep.mubr.f32.mxu0 %v632
    %3059 = vmatmul.mubr.f32.gmra.mxu0 %v631
    %v3060 = vpop.f32.mrf.mxu0
    %v3061 = vadd.f32 0.0, %v3060
    %v3062 = vpop.f32.mrf.mxu0
    %v3063 = vadd.f32 0.0, %v3062
    %3064 = vmatprep.mubr.f32.mxu0 %v635
    %3065 = vmatmul.mubr.f32.gmra.mxu0 %v634
    %v3066 = vpop.f32.mrf.mxu0
    %v3067 = vadd.f32 0.0, %v3066
    %v3068 = vpop.f32.mrf.mxu0
    %v3069 = vadd.f32 0.0, %v3068
    %3070 = vmatprep.mubr.f32.mxu0 %v638
    %3071 = vmatmul.mubr.f32.gmra.mxu0 %v637
    %v3072 = vpop.f32.mrf.mxu0
    %v3073 = vadd.f32 0.0, %v3072
    %v3074 = vpop.f32.mrf.mxu0
    %v3075 = vadd.f32 0.0, %v3074
    %3076 = vmatprep.mubr.f32.mxu0 %v641
    %3077 = vmatmul.mubr.f32.gmra.mxu0 %v640
    %v3078 = vpop.f32.mrf.mxu0
    %v3079 = vadd.f32 0.0, %v3078
    %v3080 = vpop.f32.mrf.mxu0
    %v3081 = vadd.f32 0.0, %v3080
    %3082 = vmatprep.mubr.f32.mxu0 %v644
    %3083 = vmatmul.mubr.f32.gmra.mxu0 %v643
    %v3084 = vpop.f32.mrf.mxu0
    %v3085 = vadd.f32 0.0, %v3084
    %v3086 = vpop.f32.mrf.mxu0
    %v3087 = vadd.f32 0.0, %v3086
    %3088 = vmatprep.mubr.f32.mxu0 %v647
    %3089 = vmatmul.mubr.f32.gmra.mxu0 %v646
    %v3090 = vpop.f32.mrf.mxu0
    %v3091 = vadd.f32 0.0, %v3090
    %v3092 = vpop.f32.mrf.mxu0
    %v3093 = vadd.f32 0.0, %v3092
    %3094 = vmatprep.mubr.f32.mxu0 %v650
    %3095 = vmatmul.mubr.f32.gmra.mxu0 %v649
    %v3096 = vpop.f32.mrf.mxu0
    %v3097 = vadd.f32 0.0, %v3096
    %v3098 = vpop.f32.mrf.mxu0
    %v3099 = vadd.f32 0.0, %v3098
    %3100 = vmatprep.mubr.f32.mxu0 %v653
    %3101 = vmatmul.mubr.f32.gmra.mxu0 %v652
    %v3102 = vpop.f32.mrf.mxu0
    %v3103 = vadd.f32 0.0, %v3102
    %v3104 = vpop.f32.mrf.mxu0
    %v3105 = vadd.f32 0.0, %v3104
    %3106 = vmatprep.mubr.f32.mxu0 %v656
    %3107 = vmatmul.mubr.f32.gmra.mxu0 %v655
    %v3108 = vpop.f32.mrf.mxu0
    %v3109 = vadd.f32 0.0, %v3108
    %v3110 = vpop.f32.mrf.mxu0
    %v3111 = vadd.f32 0.0, %v3110
    %3112 = vmatprep.mubr.f32.mxu0 %v659
    %3113 = vmatmul.mubr.f32.gmra.mxu0 %v658
    %v3114 = vpop.f32.mrf.mxu0
    %v3115 = vadd.f32 0.0, %v3114
    %v3116 = vpop.f32.mrf.mxu0
    %v3117 = vadd.f32 0.0, %v3116
    %3118 = vmatprep.mubr.f32.mxu0 %v662
    %3119 = vmatmul.mubr.f32.gmra.mxu0 %v661
    %v3120 = vpop.f32.mrf.mxu0
    %v3121 = vadd.f32 0.0, %v3120
    %v3122 = vpop.f32.mrf.mxu0
    %v3123 = vadd.f32 0.0, %v3122
    %3124 = vmatprep.mubr.f32.mxu0 %v665
    %3125 = vmatmul.mubr.f32.gmra.mxu0 %v664
    %v3126 = vpop.f32.mrf.mxu0
    %v3127 = vadd.f32 0.0, %v3126
    %v3128 = vpop.f32.mrf.mxu0
    %v3129 = vadd.f32 0.0, %v3128
    %3130 = vmatprep.mubr.f32.mxu0 %v668
    %3131 = vmatmul.mubr.f32.gmra.mxu0 %v667
    %v3132 = vpop.f32.mrf.mxu0
    %v3133 = vadd.f32 0.0, %v3132
    %v3134 = vpop.f32.mrf.mxu0
    %v3135 = vadd.f32 0.0, %v3134
    %3136 = vmatprep.mubr.f32.mxu0 %v671
    %3137 = vmatmul.mubr.f32.gmra.mxu0 %v670
    %v3138 = vpop.f32.mrf.mxu0
    %v3139 = vadd.f32 0.0, %v3138
    %v3140 = vpop.f32.mrf.mxu0
    %v3141 = vadd.f32 0.0, %v3140
    %3142 = vmatprep.mubr.f32.mxu0 %v674
    %3143 = vmatmul.mubr.f32.gmra.mxu0 %v673
    %v3144 = vpop.f32.mrf.mxu0
    %v3145 = vadd.f32 0.0, %v3144
    %v3146 = vpop.f32.mrf.mxu0
    %v3147 = vadd.f32 0.0, %v3146
    %3148 = vmatprep.mubr.f32.mxu0 %v677
    %3149 = vmatmul.mubr.f32.gmra.mxu0 %v676
    %v3150 = vpop.f32.mrf.mxu0
    %v3151 = vadd.f32 0.0, %v3150
    %v3152 = vpop.f32.mrf.mxu0
    %v3153 = vadd.f32 0.0, %v3152
    %3154 = vmatprep.mubr.f32.mxu0 %v680
    %3155 = vmatmul.mubr.f32.gmra.mxu0 %v679
    %v3156 = vpop.f32.mrf.mxu0
    %v3157 = vadd.f32 0.0, %v3156
    %v3158 = vpop.f32.mrf.mxu0
    %v3159 = vadd.f32 0.0, %v3158
    %3160 = vmatprep.mubr.f32.mxu0 %v683
    %3161 = vmatmul.mubr.f32.gmra.mxu0 %v682
    %v3162 = vpop.f32.mrf.mxu0
    %v3163 = vadd.f32 0.0, %v3162
    %v3164 = vpop.f32.mrf.mxu0
    %v3165 = vadd.f32 0.0, %v3164
    %3166 = vmatprep.mubr.f32.mxu0 %v686
    %3167 = vmatmul.mubr.f32.gmra.mxu0 %v685
    %v3168 = vpop.f32.mrf.mxu0
    %v3169 = vadd.f32 0.0, %v3168
    %v3170 = vpop.f32.mrf.mxu0
    %v3171 = vadd.f32 0.0, %v3170
    %3172 = vmatprep.mubr.f32.mxu0 %v689
    %3173 = vmatmul.mubr.f32.gmra.mxu0 %v688
    %v3174 = vpop.f32.mrf.mxu0
    %v3175 = vadd.f32 0.0, %v3174
    %v3176 = vpop.f32.mrf.mxu0
    %v3177 = vadd.f32 0.0, %v3176
    %3178 = vmatprep.mubr.f32.mxu0 %v692
    %3179 = vmatmul.mubr.f32.gmra.mxu0 %v691
    %v3180 = vpop.f32.mrf.mxu0
    %v3181 = vadd.f32 0.0, %v3180
    %v3182 = vpop.f32.mrf.mxu0
    %v3183 = vadd.f32 0.0, %v3182
    %3184 = vmatprep.mubr.f32.mxu0 %v695
    %3185 = vmatmul.mubr.f32.gmra.mxu0 %v694
    %v3186 = vpop.f32.mrf.mxu0
    %v3187 = vadd.f32 0.0, %v3186
    %v3188 = vpop.f32.mrf.mxu0
    %v3189 = vadd.f32 0.0, %v3188
    %3190 = vmatprep.mubr.f32.mxu0 %v698
    %3191 = vmatmul.mubr.f32.gmra.mxu0 %v697
    %v3192 = vpop.f32.mrf.mxu0
    %v3193 = vadd.f32 0.0, %v3192
    %v3194 = vpop.f32.mrf.mxu0
    %v3195 = vadd.f32 0.0, %v3194
    %3196 = vmatprep.mubr.f32.mxu0 %v701
    %3197 = vmatmul.mubr.f32.gmra.mxu0 %v700
    %v3198 = vpop.f32.mrf.mxu0
    %v3199 = vadd.f32 0.0, %v3198
    %v3200 = vpop.f32.mrf.mxu0
    %v3201 = vadd.f32 0.0, %v3200
    %3202 = vmatprep.mubr.f32.mxu0 %v704
    %3203 = vmatmul.mubr.f32.gmra.mxu0 %v703
    %v3204 = vpop.f32.mrf.mxu0
    %v3205 = vadd.f32 0.0, %v3204
    %v3206 = vpop.f32.mrf.mxu0
    %v3207 = vadd.f32 0.0, %v3206
    %3208 = vmatprep.mubr.f32.mxu0 %v707
    %3209 = vmatmul.mubr.f32.gmra.mxu0 %v706
    %v3210 = vpop.f32.mrf.mxu0
    %v3211 = vadd.f32 0.0, %v3210
    %v3212 = vpop.f32.mrf.mxu0
    %v3213 = vadd.f32 0.0, %v3212
    %3214 = vmatprep.mubr.f32.mxu0 %v710
    %3215 = vmatmul.mubr.f32.gmra.mxu0 %v709
    %v3216 = vpop.f32.mrf.mxu0
    %v3217 = vadd.f32 0.0, %v3216
    %v3218 = vpop.f32.mrf.mxu0
    %v3219 = vadd.f32 0.0, %v3218
    %3220 = vmatprep.mubr.f32.mxu0 %v713
    %3221 = vmatmul.mubr.f32.gmra.mxu0 %v712
    %v3222 = vpop.f32.mrf.mxu0
    %v3223 = vadd.f32 0.0, %v3222
    %v3224 = vpop.f32.mrf.mxu0
    %v3225 = vadd.f32 0.0, %v3224
    %3226 = vmatprep.mubr.f32.mxu0 %v716
    %3227 = vmatmul.mubr.f32.gmra.mxu0 %v715
    %v3228 = vpop.f32.mrf.mxu0
    %v3229 = vadd.f32 0.0, %v3228
    %v3230 = vpop.f32.mrf.mxu0
    %v3231 = vadd.f32 0.0, %v3230
    %3232 = vmatprep.mubr.f32.mxu0 %v719
    %3233 = vmatmul.mubr.f32.gmra.mxu0 %v718
    %v3234 = vpop.f32.mrf.mxu0
    %v3235 = vadd.f32 0.0, %v3234
    %v3236 = vpop.f32.mrf.mxu0
    %v3237 = vadd.f32 0.0, %v3236
    %3238 = vmatprep.mubr.f32.mxu0 %v722
    %3239 = vmatmul.mubr.f32.gmra.mxu0 %v721
    %v3240 = vpop.f32.mrf.mxu0
    %v3241 = vadd.f32 0.0, %v3240
    %v3242 = vpop.f32.mrf.mxu0
    %v3243 = vadd.f32 0.0, %v3242
    %3244 = vmatprep.mubr.f32.mxu0 %v725
    %3245 = vmatmul.mubr.f32.gmra.mxu0 %v724
    %v3246 = vpop.f32.mrf.mxu0
    %v3247 = vadd.f32 0.0, %v3246
    %v3248 = vpop.f32.mrf.mxu0
    %v3249 = vadd.f32 0.0, %v3248
    %3250 = vmatprep.mubr.f32.mxu0 %v728
    %3251 = vmatmul.mubr.f32.gmra.mxu0 %v727
    %v3252 = vpop.f32.mrf.mxu0
    %v3253 = vadd.f32 0.0, %v3252
    %v3254 = vpop.f32.mrf.mxu0
    %v3255 = vadd.f32 0.0, %v3254
    %3256 = vmatprep.mubr.f32.mxu0 %v731
    %3257 = vmatmul.mubr.f32.gmra.mxu0 %v730
    %v3258 = vpop.f32.mrf.mxu0
    %v3259 = vadd.f32 0.0, %v3258
    %v3260 = vpop.f32.mrf.mxu0
    %v3261 = vadd.f32 0.0, %v3260
    %3262 = vmatprep.mubr.f32.mxu0 %v734
    %3263 = vmatmul.mubr.f32.gmra.mxu0 %v733
    %v3264 = vpop.f32.mrf.mxu0
    %v3265 = vadd.f32 0.0, %v3264
    %v3266 = vpop.f32.mrf.mxu0
    %v3267 = vadd.f32 0.0, %v3266
    %3268 = vmatprep.mubr.f32.mxu0 %v737
    %3269 = vmatmul.mubr.f32.gmra.mxu0 %v736
    %v3270 = vpop.f32.mrf.mxu0
    %v3271 = vadd.f32 0.0, %v3270
    %v3272 = vpop.f32.mrf.mxu0
    %v3273 = vadd.f32 0.0, %v3272
    %3274 = vmatprep.mubr.f32.mxu0 %v740
    %3275 = vmatmul.mubr.f32.gmra.mxu0 %v739
    %v3276 = vpop.f32.mrf.mxu0
    %v3277 = vadd.f32 0.0, %v3276
    %v3278 = vpop.f32.mrf.mxu0
    %v3279 = vadd.f32 0.0, %v3278
    %3280 = vmatprep.mubr.f32.mxu0 %v743
    %3281 = vmatmul.mubr.f32.gmra.mxu0 %v742
    %v3282 = vpop.f32.mrf.mxu0
    %v3283 = vadd.f32 0.0, %v3282
    %v3284 = vpop.f32.mrf.mxu0
    %v3285 = vadd.f32 0.0, %v3284
    %3286 = vmatprep.mubr.f32.mxu0 %v746
    %3287 = vmatmul.mubr.f32.gmra.mxu0 %v745
    %v3288 = vpop.f32.mrf.mxu0
    %v3289 = vadd.f32 0.0, %v3288
    %v3290 = vpop.f32.mrf.mxu0
    %v3291 = vadd.f32 0.0, %v3290
    %3292 = vdwg.mxu0
    %3293 = vmatprep.subr.mxu0 0.0
    %3294 = vmatpush1.msra.mxu0 0.0
    %3295 = vmatprep.subr.mxu0 0.0
    %3296 = vmatpush1.msra.mxu0 0.0
    %3297 = vmatprep.subr.mxu0 0.0
    %3298 = vmatpush1.msra.mxu0 0.0
    %3299 = vmatprep.subr.mxu0 0.0
    %3300 = vmatpush1.msra.mxu0 0.0
    %3301 = vmatprep.subr.mxu0 0.0
    %3302 = vmatpush1.msra.mxu0 0.0
    %3303 = vmatprep.subr.mxu0 0.0
    %3304 = vmatpush1.msra.mxu0 0.0
    %3305 = vmatprep.subr.mxu0 0.0
    %3306 = vmatpush1.msra.mxu0 0.0
    %3307 = vmatprep.subr.mxu0 0.0
    %3308 = vmatpush1.msra.mxu0 0.0
    %3309 = vmatprep.subr.mxu0 %v2211
    %3310 = vmatpush1.msra.mxu0 %v2209
    %3311 = vmatprep.subr.mxu0 %v2205
    %3312 = vmatpush1.msra.mxu0 %v2203
    %3313 = vmatprep.subr.mxu0 %v2199
    %3314 = vmatpush1.msra.mxu0 %v2197
    %3315 = vmatprep.subr.mxu0 %v2193
    %3316 = vmatpush1.msra.mxu0 %v2191
    %3317 = vmatprep.subr.mxu0 %v2187
    %3318 = vmatpush1.msra.mxu0 %v2185
    %3319 = vmatprep.subr.mxu0 %v2181
    %3320 = vmatpush1.msra.mxu0 %v2179
    %3321 = vmatprep.subr.mxu0 %v2175
    %3322 = vmatpush1.msra.mxu0 %v2173
    %3323 = vmatprep.subr.mxu0 %v2169
    %3324 = vmatpush1.msra.mxu0 %v2167
    %3325 = vmatprep.subr.mxu0 0.0
    %3326 = vmatpush2.msra.mxu0 0.0
    %3327 = vmatprep.subr.mxu0 0.0
    %3328 = vmatpush2.msra.mxu0 0.0
    %3329 = vmatprep.subr.mxu0 0.0
    %3330 = vmatpush2.msra.mxu0 0.0
    %3331 = vmatprep.subr.mxu0 0.0
    %3332 = vmatpush2.msra.mxu0 0.0
    %3333 = vmatprep.subr.mxu0 0.0
    %3334 = vmatpush2.msra.mxu0 0.0
    %3335 = vmatprep.subr.mxu0 0.0
    %3336 = vmatpush2.msra.mxu0 0.0
    %3337 = vmatprep.subr.mxu0 0.0
    %3338 = vmatpush2.msra.mxu0 0.0
    %3339 = vmatprep.subr.mxu0 0.0
    %3340 = vmatpush2.msra.mxu0 0.0
    %3341 = vmatprep.subr.mxu0 0.0
    %3342 = vmatpush2.msra.mxu0 0.0
    %3343 = vmatprep.subr.mxu0 0.0
    %3344 = vmatpush2.msra.mxu0 0.0
    %3345 = vmatprep.subr.mxu0 0.0
    %3346 = vmatpush2.msra.mxu0 0.0
    %3347 = vmatprep.subr.mxu0 0.0
    %3348 = vmatpush2.msra.mxu0 0.0
    %3349 = vmatprep.subr.mxu0 0.0
    %3350 = vmatpush2.msra.mxu0 0.0
    %3351 = vmatprep.subr.mxu0 0.0
    %3352 = vmatpush2.msra.mxu0 0.0
    %3353 = vmatprep.subr.mxu0 0.0
    %3354 = vmatpush2.msra.mxu0 0.0
    %3355 = vmatprep.subr.mxu0 0.0
    %3356 = vmatpush2.msra.mxu0 0.0
    %3357 = vmatprep.mubr.f32.mxu0 0.0
    %3358 = vmatmul.mubr.f32.gmra.mxu0 %v2824
    %v3359 = vpop.f32.mrf.mxu0
    %v3360 = vadd.f32 %v3025, %v3359
    %v3361 = vpop.f32.mrf.mxu0
    %v3362 = vadd.f32 %v3027, %v3361
    %3363 = vmatprep.mubr.f32.mxu0 0.0
    %3364 = vmatmul.mubr.f32.gmra.mxu0 %v2827
    %v3365 = vpop.f32.mrf.mxu0
    %v3366 = vadd.f32 %v3031, %v3365
    %v3367 = vpop.f32.mrf.mxu0
    %v3368 = vadd.f32 %v3033, %v3367
    %3369 = vmatprep.mubr.f32.mxu0 0.0
    %3370 = vmatmul.mubr.f32.gmra.mxu0 %v2830
    %v3371 = vpop.f32.mrf.mxu0
    %v3372 = vadd.f32 %v3037, %v3371
    %v3373 = vpop.f32.mrf.mxu0
    %v3374 = vadd.f32 %v3039, %v3373
    %3375 = vmatprep.mubr.f32.mxu0 0.0
    %3376 = vmatmul.mubr.f32.gmra.mxu0 %v2833
    %v3377 = vpop.f32.mrf.mxu0
    %v3378 = vadd.f32 %v3043, %v3377
    %v3379 = vpop.f32.mrf.mxu0
    %v3380 = vadd.f32 %v3045, %v3379
    %3381 = vmatprep.mubr.f32.mxu0 0.0
    %3382 = vmatmul.mubr.f32.gmra.mxu0 %v2836
    %v3383 = vpop.f32.mrf.mxu0
    %v3384 = vadd.f32 %v3049, %v3383
    %v3385 = vpop.f32.mrf.mxu0
    %v3386 = vadd.f32 %v3051, %v3385
    %3387 = vmatprep.mubr.f32.mxu0 0.0
    %3388 = vmatmul.mubr.f32.gmra.mxu0 %v2839
    %v3389 = vpop.f32.mrf.mxu0
    %v3390 = vadd.f32 %v3055, %v3389
    %v3391 = vpop.f32.mrf.mxu0
    %v3392 = vadd.f32 %v3057, %v3391
    %3393 = vmatprep.mubr.f32.mxu0 0.0
    %3394 = vmatmul.mubr.f32.gmra.mxu0 %v2842
    %v3395 = vpop.f32.mrf.mxu0
    %v3396 = vadd.f32 %v3061, %v3395
    %v3397 = vpop.f32.mrf.mxu0
    %v3398 = vadd.f32 %v3063, %v3397
    %3399 = vmatprep.mubr.f32.mxu0 0.0
    %3400 = vmatmul.mubr.f32.gmra.mxu0 %v2845
    %v3401 = vpop.f32.mrf.mxu0
    %v3402 = vadd.f32 %v3067, %v3401
    %v3403 = vpop.f32.mrf.mxu0
    %v3404 = vadd.f32 %v3069, %v3403
    %3405 = vmatprep.mubr.f32.mxu0 0.0
    %3406 = vmatmul.mubr.f32.gmra.mxu0 %v2848
    %v3407 = vpop.f32.mrf.mxu0
    %v3408 = vadd.f32 %v3073, %v3407
    %v3409 = vpop.f32.mrf.mxu0
    %v3410 = vadd.f32 %v3075, %v3409
    %3411 = vmatprep.mubr.f32.mxu0 0.0
    %3412 = vmatmul.mubr.f32.gmra.mxu0 %v2851
    %v3413 = vpop.f32.mrf.mxu0
    %v3414 = vadd.f32 %v3079, %v3413
    %v3415 = vpop.f32.mrf.mxu0
    %v3416 = vadd.f32 %v3081, %v3415
    %3417 = vmatprep.mubr.f32.mxu0 0.0
    %3418 = vmatmul.mubr.f32.gmra.mxu0 %v2854
    %v3419 = vpop.f32.mrf.mxu0
    %v3420 = vadd.f32 %v3085, %v3419
    %v3421 = vpop.f32.mrf.mxu0
    %v3422 = vadd.f32 %v3087, %v3421
    %3423 = vmatprep.mubr.f32.mxu0 0.0
    %3424 = vmatmul.mubr.f32.gmra.mxu0 %v2857
    %v3425 = vpop.f32.mrf.mxu0
    %v3426 = vadd.f32 %v3091, %v3425
    %v3427 = vpop.f32.mrf.mxu0
    %v3428 = vadd.f32 %v3093, %v3427
    %3429 = vmatprep.mubr.f32.mxu0 0.0
    %3430 = vmatmul.mubr.f32.gmra.mxu0 %v2860
    %v3431 = vpop.f32.mrf.mxu0
    %v3432 = vadd.f32 %v3097, %v3431
    %v3433 = vpop.f32.mrf.mxu0
    %v3434 = vadd.f32 %v3099, %v3433
    %3435 = vmatprep.mubr.f32.mxu0 0.0
    %3436 = vmatmul.mubr.f32.gmra.mxu0 %v2863
    %v3437 = vpop.f32.mrf.mxu0
    %v3438 = vadd.f32 %v3103, %v3437
    %v3439 = vpop.f32.mrf.mxu0
    %v3440 = vadd.f32 %v3105, %v3439
    %3441 = vmatprep.mubr.f32.mxu0 0.0
    %3442 = vmatmul.mubr.f32.gmra.mxu0 %v2866
    %v3443 = vpop.f32.mrf.mxu0
    %v3444 = vadd.f32 %v3109, %v3443
    %v3445 = vpop.f32.mrf.mxu0
    %v3446 = vadd.f32 %v3111, %v3445
    %3447 = vmatprep.mubr.f32.mxu0 0.0
    %3448 = vmatmul.mubr.f32.gmra.mxu0 %v2869
    %v3449 = vpop.f32.mrf.mxu0
    %v3450 = vadd.f32 %v3115, %v3449
    %v3451 = vpop.f32.mrf.mxu0
    %v3452 = vadd.f32 %v3117, %v3451
    %3453 = vmatprep.mubr.f32.mxu0 0.0
    %3454 = vmatmul.mubr.f32.gmra.mxu0 %v2872
    %v3455 = vpop.f32.mrf.mxu0
    %v3456 = vadd.f32 %v3121, %v3455
    %v3457 = vpop.f32.mrf.mxu0
    %v3458 = vadd.f32 %v3123, %v3457
    %3459 = vmatprep.mubr.f32.mxu0 0.0
    %3460 = vmatmul.mubr.f32.gmra.mxu0 %v2875
    %v3461 = vpop.f32.mrf.mxu0
    %v3462 = vadd.f32 %v3127, %v3461
    %v3463 = vpop.f32.mrf.mxu0
    %v3464 = vadd.f32 %v3129, %v3463
    %3465 = vmatprep.mubr.f32.mxu0 0.0
    %3466 = vmatmul.mubr.f32.gmra.mxu0 %v2878
    %v3467 = vpop.f32.mrf.mxu0
    %v3468 = vadd.f32 %v3133, %v3467
    %v3469 = vpop.f32.mrf.mxu0
    %v3470 = vadd.f32 %v3135, %v3469
    %3471 = vmatprep.mubr.f32.mxu0 0.0
    %3472 = vmatmul.mubr.f32.gmra.mxu0 %v2881
    %v3473 = vpop.f32.mrf.mxu0
    %v3474 = vadd.f32 %v3139, %v3473
    %v3475 = vpop.f32.mrf.mxu0
    %v3476 = vadd.f32 %v3141, %v3475
    %3477 = vmatprep.mubr.f32.mxu0 0.0
    %3478 = vmatmul.mubr.f32.gmra.mxu0 %v2884
    %v3479 = vpop.f32.mrf.mxu0
    %v3480 = vadd.f32 %v3145, %v3479
    %v3481 = vpop.f32.mrf.mxu0
    %v3482 = vadd.f32 %v3147, %v3481
    %3483 = vmatprep.mubr.f32.mxu0 0.0
    %3484 = vmatmul.mubr.f32.gmra.mxu0 %v2887
    %v3485 = vpop.f32.mrf.mxu0
    %v3486 = vadd.f32 %v3151, %v3485
    %v3487 = vpop.f32.mrf.mxu0
    %v3488 = vadd.f32 %v3153, %v3487
    %3489 = vmatprep.mubr.f32.mxu0 0.0
    %3490 = vmatmul.mubr.f32.gmra.mxu0 %v2890
    %v3491 = vpop.f32.mrf.mxu0
    %v3492 = vadd.f32 %v3157, %v3491
    %v3493 = vpop.f32.mrf.mxu0
    %v3494 = vadd.f32 %v3159, %v3493
    %3495 = vmatprep.mubr.f32.mxu0 0.0
    %3496 = vmatmul.mubr.f32.gmra.mxu0 %v2893
    %v3497 = vpop.f32.mrf.mxu0
    %v3498 = vadd.f32 %v3163, %v3497
    %v3499 = vpop.f32.mrf.mxu0
    %v3500 = vadd.f32 %v3165, %v3499
    %3501 = vmatprep.mubr.f32.mxu0 0.0
    %3502 = vmatmul.mubr.f32.gmra.mxu0 %v2896
    %v3503 = vpop.f32.mrf.mxu0
    %v3504 = vadd.f32 %v3169, %v3503
    %v3505 = vpop.f32.mrf.mxu0
    %v3506 = vadd.f32 %v3171, %v3505
    %3507 = vmatprep.mubr.f32.mxu0 0.0
    %3508 = vmatmul.mubr.f32.gmra.mxu0 %v2899
    %v3509 = vpop.f32.mrf.mxu0
    %v3510 = vadd.f32 %v3175, %v3509
    %v3511 = vpop.f32.mrf.mxu0
    %v3512 = vadd.f32 %v3177, %v3511
    %3513 = vmatprep.mubr.f32.mxu0 0.0
    %3514 = vmatmul.mubr.f32.gmra.mxu0 %v2902
    %v3515 = vpop.f32.mrf.mxu0
    %v3516 = vadd.f32 %v3181, %v3515
    %v3517 = vpop.f32.mrf.mxu0
    %v3518 = vadd.f32 %v3183, %v3517
    %3519 = vmatprep.mubr.f32.mxu0 0.0
    %3520 = vmatmul.mubr.f32.gmra.mxu0 %v2905
    %v3521 = vpop.f32.mrf.mxu0
    %v3522 = vadd.f32 %v3187, %v3521
    %v3523 = vpop.f32.mrf.mxu0
    %v3524 = vadd.f32 %v3189, %v3523
    %3525 = vmatprep.mubr.f32.mxu0 0.0
    %3526 = vmatmul.mubr.f32.gmra.mxu0 %v2908
    %v3527 = vpop.f32.mrf.mxu0
    %v3528 = vadd.f32 %v3193, %v3527
    %v3529 = vpop.f32.mrf.mxu0
    %v3530 = vadd.f32 %v3195, %v3529
    %3531 = vmatprep.mubr.f32.mxu0 0.0
    %3532 = vmatmul.mubr.f32.gmra.mxu0 %v2911
    %v3533 = vpop.f32.mrf.mxu0
    %v3534 = vadd.f32 %v3199, %v3533
    %v3535 = vpop.f32.mrf.mxu0
    %v3536 = vadd.f32 %v3201, %v3535
    %3537 = vmatprep.mubr.f32.mxu0 0.0
    %3538 = vmatmul.mubr.f32.gmra.mxu0 %v2914
    %v3539 = vpop.f32.mrf.mxu0
    %v3540 = vadd.f32 %v3205, %v3539
    %v3541 = vpop.f32.mrf.mxu0
    %v3542 = vadd.f32 %v3207, %v3541
    %3543 = vmatprep.mubr.f32.mxu0 0.0
    %3544 = vmatmul.mubr.f32.gmra.mxu0 %v2917
    %v3545 = vpop.f32.mrf.mxu0
    %v3546 = vadd.f32 %v3211, %v3545
    %v3547 = vpop.f32.mrf.mxu0
    %v3548 = vadd.f32 %v3213, %v3547
    %3549 = vmatprep.mubr.f32.mxu0 0.0
    %3550 = vmatmul.mubr.f32.gmra.mxu0 %v2920
    %v3551 = vpop.f32.mrf.mxu0
    %v3552 = vadd.f32 %v3217, %v3551
    %v3553 = vpop.f32.mrf.mxu0
    %v3554 = vadd.f32 %v3219, %v3553
    %3555 = vmatprep.mubr.f32.mxu0 0.0
    %3556 = vmatmul.mubr.f32.gmra.mxu0 %v2923
    %v3557 = vpop.f32.mrf.mxu0
    %v3558 = vadd.f32 %v3223, %v3557
    %v3559 = vpop.f32.mrf.mxu0
    %v3560 = vadd.f32 %v3225, %v3559
    %3561 = vmatprep.mubr.f32.mxu0 0.0
    %3562 = vmatmul.mubr.f32.gmra.mxu0 %v2926
    %v3563 = vpop.f32.mrf.mxu0
    %v3564 = vadd.f32 %v3229, %v3563
    %v3565 = vpop.f32.mrf.mxu0
    %v3566 = vadd.f32 %v3231, %v3565
    %3567 = vmatprep.mubr.f32.mxu0 0.0
    %3568 = vmatmul.mubr.f32.gmra.mxu0 %v2929
    %v3569 = vpop.f32.mrf.mxu0
    %v3570 = vadd.f32 %v3235, %v3569
    %v3571 = vpop.f32.mrf.mxu0
    %v3572 = vadd.f32 %v3237, %v3571
    %3573 = vmatprep.mubr.f32.mxu0 0.0
    %3574 = vmatmul.mubr.f32.gmra.mxu0 %v2932
    %v3575 = vpop.f32.mrf.mxu0
    %v3576 = vadd.f32 %v3241, %v3575
    %v3577 = vpop.f32.mrf.mxu0
    %v3578 = vadd.f32 %v3243, %v3577
    %3579 = vmatprep.mubr.f32.mxu0 0.0
    %3580 = vmatmul.mubr.f32.gmra.mxu0 %v2935
    %v3581 = vpop.f32.mrf.mxu0
    %v3582 = vadd.f32 %v3247, %v3581
    %v3583 = vpop.f32.mrf.mxu0
    %v3584 = vadd.f32 %v3249, %v3583
    %3585 = vmatprep.mubr.f32.mxu0 0.0
    %3586 = vmatmul.mubr.f32.gmra.mxu0 %v2938
    %v3587 = vpop.f32.mrf.mxu0
    %v3588 = vadd.f32 %v3253, %v3587
    %v3589 = vpop.f32.mrf.mxu0
    %v3590 = vadd.f32 %v3255, %v3589
    %3591 = vmatprep.mubr.f32.mxu0 0.0
    %3592 = vmatmul.mubr.f32.gmra.mxu0 %v2941
    %v3593 = vpop.f32.mrf.mxu0
    %v3594 = vadd.f32 %v3259, %v3593
    %v3595 = vpop.f32.mrf.mxu0
    %v3596 = vadd.f32 %v3261, %v3595
    %3597 = vmatprep.mubr.f32.mxu0 0.0
    %3598 = vmatmul.mubr.f32.gmra.mxu0 %v2944
    %v3599 = vpop.f32.mrf.mxu0
    %v3600 = vadd.f32 %v3265, %v3599
    %v3601 = vpop.f32.mrf.mxu0
    %v3602 = vadd.f32 %v3267, %v3601
    %3603 = vmatprep.mubr.f32.mxu0 0.0
    %3604 = vmatmul.mubr.f32.gmra.mxu0 %v2947
    %v3605 = vpop.f32.mrf.mxu0
    %v3606 = vadd.f32 %v3271, %v3605
    %v3607 = vpop.f32.mrf.mxu0
    %v3608 = vadd.f32 %v3273, %v3607
    %3609 = vmatprep.mubr.f32.mxu0 0.0
    %3610 = vmatmul.mubr.f32.gmra.mxu0 %v2950
    %v3611 = vpop.f32.mrf.mxu0
    %v3612 = vadd.f32 %v3277, %v3611
    %v3613 = vpop.f32.mrf.mxu0
    %v3614 = vadd.f32 %v3279, %v3613
    %3615 = vmatprep.mubr.f32.mxu0 0.0
    %3616 = vmatmul.mubr.f32.gmra.mxu0 %v2953
    %v3617 = vpop.f32.mrf.mxu0
    %v3618 = vadd.f32 %v3283, %v3617
    %v3619 = vpop.f32.mrf.mxu0
    %v3620 = vadd.f32 %v3285, %v3619
    %3621 = vmatprep.mubr.f32.mxu0 0.0
    %3622 = vmatmul.mubr.f32.gmra.mxu0 %v2956
    %v3623 = vpop.f32.mrf.mxu0
    %v3624 = vadd.f32 %v3289, %v3623
    %v3625 = vpop.f32.mrf.mxu0
    %v3626 = vadd.f32 %v3291, %v3625
    %3627 = vdwg.mxu0
    %3628 = vmatprep.subr.mxu0 %v2677
    %3629 = vmatpush1.msra.mxu0 %v2675
    %3630 = vmatprep.subr.mxu0 %v2671
    %3631 = vmatpush1.msra.mxu0 %v2669
    %3632 = vmatprep.subr.mxu0 %v2665
    %3633 = vmatpush1.msra.mxu0 %v2663
    %3634 = vmatprep.subr.mxu0 %v2659
    %3635 = vmatpush1.msra.mxu0 %v2657
    %3636 = vmatprep.subr.mxu0 %v2653
    %3637 = vmatpush1.msra.mxu0 %v2651
    %3638 = vmatprep.subr.mxu0 %v2647
    %3639 = vmatpush1.msra.mxu0 %v2645
    %3640 = vmatprep.subr.mxu0 %v2641
    %3641 = vmatpush1.msra.mxu0 %v2639
    %3642 = vmatprep.subr.mxu0 %v2635
    %3643 = vmatpush1.msra.mxu0 %v2633
    %3644 = vmatprep.subr.mxu0 %v2629
    %3645 = vmatpush1.msra.mxu0 %v2627
    %3646 = vmatprep.subr.mxu0 %v2623
    %3647 = vmatpush1.msra.mxu0 %v2621
    %3648 = vmatprep.subr.mxu0 %v2617
    %3649 = vmatpush1.msra.mxu0 %v2615
    %3650 = vmatprep.subr.mxu0 %v2611
    %3651 = vmatpush1.msra.mxu0 %v2609
    %3652 = vmatprep.subr.mxu0 %v2605
    %3653 = vmatpush1.msra.mxu0 %v2603
    %3654 = vmatprep.subr.mxu0 %v2599
    %3655 = vmatpush1.msra.mxu0 %v2597
    %3656 = vmatprep.subr.mxu0 %v2593
    %3657 = vmatpush1.msra.mxu0 %v2591
    %3658 = vmatprep.subr.mxu0 %v2587
    %3659 = vmatpush1.msra.mxu0 %v2585
    %3660 = vmatprep.subr.mxu0 %v2773
    %3661 = vmatpush2.msra.mxu0 %v2771
    %3662 = vmatprep.subr.mxu0 %v2767
    %3663 = vmatpush2.msra.mxu0 %v2765
    %3664 = vmatprep.subr.mxu0 %v2761
    %3665 = vmatpush2.msra.mxu0 %v2759
    %3666 = vmatprep.subr.mxu0 %v2755
    %3667 = vmatpush2.msra.mxu0 %v2753
    %3668 = vmatprep.subr.mxu0 %v2749
    %3669 = vmatpush2.msra.mxu0 %v2747
    %3670 = vmatprep.subr.mxu0 %v2743
    %3671 = vmatpush2.msra.mxu0 %v2741
    %3672 = vmatprep.subr.mxu0 %v2737
    %3673 = vmatpush2.msra.mxu0 %v2735
    %3674 = vmatprep.subr.mxu0 %v2731
    %3675 = vmatpush2.msra.mxu0 %v2729
    %3676 = vmatprep.subr.mxu0 %v2725
    %3677 = vmatpush2.msra.mxu0 %v2723
    %3678 = vmatprep.subr.mxu0 %v2719
    %3679 = vmatpush2.msra.mxu0 %v2717
    %3680 = vmatprep.subr.mxu0 %v2713
    %3681 = vmatpush2.msra.mxu0 %v2711
    %3682 = vmatprep.subr.mxu0 %v2707
    %3683 = vmatpush2.msra.mxu0 %v2705
    %3684 = vmatprep.subr.mxu0 %v2701
    %3685 = vmatpush2.msra.mxu0 %v2699
    %3686 = vmatprep.subr.mxu0 %v2695
    %3687 = vmatpush2.msra.mxu0 %v2693
    %3688 = vmatprep.subr.mxu0 %v2689
    %3689 = vmatpush2.msra.mxu0 %v2687
    %3690 = vmatprep.subr.mxu0 %v2683
    %3691 = vmatpush2.msra.mxu0 %v2681
    %3692 = vmatprep.mubr.f32.mxu0 %v614
    %3693 = vmatmul.mubr.f32.gmra.mxu0 %v613
    %v3694 = vpop.f32.mrf.mxu0
    %v3695 = vadd.f32 0.0, %v3694
    %v3696 = vpop.f32.mrf.mxu0
    %v3697 = vadd.f32 0.0, %v3696
    %3698 = vmatprep.mubr.f32.mxu0 %v617
    %3699 = vmatmul.mubr.f32.gmra.mxu0 %v616
    %v3700 = vpop.f32.mrf.mxu0
    %v3701 = vadd.f32 0.0, %v3700
    %v3702 = vpop.f32.mrf.mxu0
    %v3703 = vadd.f32 0.0, %v3702
    %3704 = vmatprep.mubr.f32.mxu0 %v620
    %3705 = vmatmul.mubr.f32.gmra.mxu0 %v619
    %v3706 = vpop.f32.mrf.mxu0
    %v3707 = vadd.f32 0.0, %v3706
    %v3708 = vpop.f32.mrf.mxu0
    %v3709 = vadd.f32 0.0, %v3708
    %3710 = vmatprep.mubr.f32.mxu0 %v623
    %3711 = vmatmul.mubr.f32.gmra.mxu0 %v622
    %v3712 = vpop.f32.mrf.mxu0
    %v3713 = vadd.f32 0.0, %v3712
    %v3714 = vpop.f32.mrf.mxu0
    %v3715 = vadd.f32 0.0, %v3714
    %3716 = vmatprep.mubr.f32.mxu0 %v626
    %3717 = vmatmul.mubr.f32.gmra.mxu0 %v625
    %v3718 = vpop.f32.mrf.mxu0
    %v3719 = vadd.f32 0.0, %v3718
    %v3720 = vpop.f32.mrf.mxu0
    %v3721 = vadd.f32 0.0, %v3720
    %3722 = vmatprep.mubr.f32.mxu0 %v629
    %3723 = vmatmul.mubr.f32.gmra.mxu0 %v628
    %v3724 = vpop.f32.mrf.mxu0
    %v3725 = vadd.f32 0.0, %v3724
    %v3726 = vpop.f32.mrf.mxu0
    %v3727 = vadd.f32 0.0, %v3726
    %3728 = vmatprep.mubr.f32.mxu0 %v632
    %3729 = vmatmul.mubr.f32.gmra.mxu0 %v631
    %v3730 = vpop.f32.mrf.mxu0
    %v3731 = vadd.f32 0.0, %v3730
    %v3732 = vpop.f32.mrf.mxu0
    %v3733 = vadd.f32 0.0, %v3732
    %3734 = vmatprep.mubr.f32.mxu0 %v635
    %3735 = vmatmul.mubr.f32.gmra.mxu0 %v634
    %v3736 = vpop.f32.mrf.mxu0
    %v3737 = vadd.f32 0.0, %v3736
    %v3738 = vpop.f32.mrf.mxu0
    %v3739 = vadd.f32 0.0, %v3738
    %3740 = vmatprep.mubr.f32.mxu0 %v638
    %3741 = vmatmul.mubr.f32.gmra.mxu0 %v637
    %v3742 = vpop.f32.mrf.mxu0
    %v3743 = vadd.f32 0.0, %v3742
    %v3744 = vpop.f32.mrf.mxu0
    %v3745 = vadd.f32 0.0, %v3744
    %3746 = vmatprep.mubr.f32.mxu0 %v641
    %3747 = vmatmul.mubr.f32.gmra.mxu0 %v640
    %v3748 = vpop.f32.mrf.mxu0
    %v3749 = vadd.f32 0.0, %v3748
    %v3750 = vpop.f32.mrf.mxu0
    %v3751 = vadd.f32 0.0, %v3750
    %3752 = vmatprep.mubr.f32.mxu0 %v644
    %3753 = vmatmul.mubr.f32.gmra.mxu0 %v643
    %v3754 = vpop.f32.mrf.mxu0
    %v3755 = vadd.f32 0.0, %v3754
    %v3756 = vpop.f32.mrf.mxu0
    %v3757 = vadd.f32 0.0, %v3756
    %3758 = vmatprep.mubr.f32.mxu0 %v647
    %3759 = vmatmul.mubr.f32.gmra.mxu0 %v646
    %v3760 = vpop.f32.mrf.mxu0
    %v3761 = vadd.f32 0.0, %v3760
    %v3762 = vpop.f32.mrf.mxu0
    %v3763 = vadd.f32 0.0, %v3762
    %3764 = vmatprep.mubr.f32.mxu0 %v650
    %3765 = vmatmul.mubr.f32.gmra.mxu0 %v649
    %v3766 = vpop.f32.mrf.mxu0
    %v3767 = vadd.f32 0.0, %v3766
    %v3768 = vpop.f32.mrf.mxu0
    %v3769 = vadd.f32 0.0, %v3768
    %3770 = vmatprep.mubr.f32.mxu0 %v653
    %3771 = vmatmul.mubr.f32.gmra.mxu0 %v652
    %v3772 = vpop.f32.mrf.mxu0
    %v3773 = vadd.f32 0.0, %v3772
    %v3774 = vpop.f32.mrf.mxu0
    %v3775 = vadd.f32 0.0, %v3774
    %3776 = vmatprep.mubr.f32.mxu0 %v656
    %3777 = vmatmul.mubr.f32.gmra.mxu0 %v655
    %v3778 = vpop.f32.mrf.mxu0
    %v3779 = vadd.f32 0.0, %v3778
    %v3780 = vpop.f32.mrf.mxu0
    %v3781 = vadd.f32 0.0, %v3780
    %3782 = vmatprep.mubr.f32.mxu0 %v659
    %3783 = vmatmul.mubr.f32.gmra.mxu0 %v658
    %v3784 = vpop.f32.mrf.mxu0
    %v3785 = vadd.f32 0.0, %v3784
    %v3786 = vpop.f32.mrf.mxu0
    %v3787 = vadd.f32 0.0, %v3786
    %3788 = vmatprep.mubr.f32.mxu0 %v662
    %3789 = vmatmul.mubr.f32.gmra.mxu0 %v661
    %v3790 = vpop.f32.mrf.mxu0
    %v3791 = vadd.f32 0.0, %v3790
    %v3792 = vpop.f32.mrf.mxu0
    %v3793 = vadd.f32 0.0, %v3792
    %3794 = vmatprep.mubr.f32.mxu0 %v665
    %3795 = vmatmul.mubr.f32.gmra.mxu0 %v664
    %v3796 = vpop.f32.mrf.mxu0
    %v3797 = vadd.f32 0.0, %v3796
    %v3798 = vpop.f32.mrf.mxu0
    %v3799 = vadd.f32 0.0, %v3798
    %3800 = vmatprep.mubr.f32.mxu0 %v668
    %3801 = vmatmul.mubr.f32.gmra.mxu0 %v667
    %v3802 = vpop.f32.mrf.mxu0
    %v3803 = vadd.f32 0.0, %v3802
    %v3804 = vpop.f32.mrf.mxu0
    %v3805 = vadd.f32 0.0, %v3804
    %3806 = vmatprep.mubr.f32.mxu0 %v671
    %3807 = vmatmul.mubr.f32.gmra.mxu0 %v670
    %v3808 = vpop.f32.mrf.mxu0
    %v3809 = vadd.f32 0.0, %v3808
    %v3810 = vpop.f32.mrf.mxu0
    %v3811 = vadd.f32 0.0, %v3810
    %3812 = vmatprep.mubr.f32.mxu0 %v674
    %3813 = vmatmul.mubr.f32.gmra.mxu0 %v673
    %v3814 = vpop.f32.mrf.mxu0
    %v3815 = vadd.f32 0.0, %v3814
    %v3816 = vpop.f32.mrf.mxu0
    %v3817 = vadd.f32 0.0, %v3816
    %3818 = vmatprep.mubr.f32.mxu0 %v677
    %3819 = vmatmul.mubr.f32.gmra.mxu0 %v676
    %v3820 = vpop.f32.mrf.mxu0
    %v3821 = vadd.f32 0.0, %v3820
    %v3822 = vpop.f32.mrf.mxu0
    %v3823 = vadd.f32 0.0, %v3822
    %3824 = vmatprep.mubr.f32.mxu0 %v680
    %3825 = vmatmul.mubr.f32.gmra.mxu0 %v679
    %v3826 = vpop.f32.mrf.mxu0
    %v3827 = vadd.f32 0.0, %v3826
    %v3828 = vpop.f32.mrf.mxu0
    %v3829 = vadd.f32 0.0, %v3828
    %3830 = vmatprep.mubr.f32.mxu0 %v683
    %3831 = vmatmul.mubr.f32.gmra.mxu0 %v682
    %v3832 = vpop.f32.mrf.mxu0
    %v3833 = vadd.f32 0.0, %v3832
    %v3834 = vpop.f32.mrf.mxu0
    %v3835 = vadd.f32 0.0, %v3834
    %3836 = vmatprep.mubr.f32.mxu0 %v686
    %3837 = vmatmul.mubr.f32.gmra.mxu0 %v685
    %v3838 = vpop.f32.mrf.mxu0
    %v3839 = vadd.f32 0.0, %v3838
    %v3840 = vpop.f32.mrf.mxu0
    %v3841 = vadd.f32 0.0, %v3840
    %3842 = vmatprep.mubr.f32.mxu0 %v689
    %3843 = vmatmul.mubr.f32.gmra.mxu0 %v688
    %v3844 = vpop.f32.mrf.mxu0
    %v3845 = vadd.f32 0.0, %v3844
    %v3846 = vpop.f32.mrf.mxu0
    %v3847 = vadd.f32 0.0, %v3846
    %3848 = vmatprep.mubr.f32.mxu0 %v692
    %3849 = vmatmul.mubr.f32.gmra.mxu0 %v691
    %v3850 = vpop.f32.mrf.mxu0
    %v3851 = vadd.f32 0.0, %v3850
    %v3852 = vpop.f32.mrf.mxu0
    %v3853 = vadd.f32 0.0, %v3852
    %3854 = vmatprep.mubr.f32.mxu0 %v695
    %3855 = vmatmul.mubr.f32.gmra.mxu0 %v694
    %v3856 = vpop.f32.mrf.mxu0
    %v3857 = vadd.f32 0.0, %v3856
    %v3858 = vpop.f32.mrf.mxu0
    %v3859 = vadd.f32 0.0, %v3858
    %3860 = vmatprep.mubr.f32.mxu0 %v698
    %3861 = vmatmul.mubr.f32.gmra.mxu0 %v697
    %v3862 = vpop.f32.mrf.mxu0
    %v3863 = vadd.f32 0.0, %v3862
    %v3864 = vpop.f32.mrf.mxu0
    %v3865 = vadd.f32 0.0, %v3864
    %3866 = vmatprep.mubr.f32.mxu0 %v701
    %3867 = vmatmul.mubr.f32.gmra.mxu0 %v700
    %v3868 = vpop.f32.mrf.mxu0
    %v3869 = vadd.f32 0.0, %v3868
    %v3870 = vpop.f32.mrf.mxu0
    %v3871 = vadd.f32 0.0, %v3870
    %3872 = vmatprep.mubr.f32.mxu0 %v704
    %3873 = vmatmul.mubr.f32.gmra.mxu0 %v703
    %v3874 = vpop.f32.mrf.mxu0
    %v3875 = vadd.f32 0.0, %v3874
    %v3876 = vpop.f32.mrf.mxu0
    %v3877 = vadd.f32 0.0, %v3876
    %3878 = vmatprep.mubr.f32.mxu0 %v707
    %3879 = vmatmul.mubr.f32.gmra.mxu0 %v706
    %v3880 = vpop.f32.mrf.mxu0
    %v3881 = vadd.f32 0.0, %v3880
    %v3882 = vpop.f32.mrf.mxu0
    %v3883 = vadd.f32 0.0, %v3882
    %3884 = vmatprep.mubr.f32.mxu0 %v710
    %3885 = vmatmul.mubr.f32.gmra.mxu0 %v709
    %v3886 = vpop.f32.mrf.mxu0
    %v3887 = vadd.f32 0.0, %v3886
    %v3888 = vpop.f32.mrf.mxu0
    %v3889 = vadd.f32 0.0, %v3888
    %3890 = vmatprep.mubr.f32.mxu0 %v713
    %3891 = vmatmul.mubr.f32.gmra.mxu0 %v712
    %v3892 = vpop.f32.mrf.mxu0
    %v3893 = vadd.f32 0.0, %v3892
    %v3894 = vpop.f32.mrf.mxu0
    %v3895 = vadd.f32 0.0, %v3894
    %3896 = vmatprep.mubr.f32.mxu0 %v716
    %3897 = vmatmul.mubr.f32.gmra.mxu0 %v715
    %v3898 = vpop.f32.mrf.mxu0
    %v3899 = vadd.f32 0.0, %v3898
    %v3900 = vpop.f32.mrf.mxu0
    %v3901 = vadd.f32 0.0, %v3900
    %3902 = vmatprep.mubr.f32.mxu0 %v719
    %3903 = vmatmul.mubr.f32.gmra.mxu0 %v718
    %v3904 = vpop.f32.mrf.mxu0
    %v3905 = vadd.f32 0.0, %v3904
    %v3906 = vpop.f32.mrf.mxu0
    %v3907 = vadd.f32 0.0, %v3906
    %3908 = vmatprep.mubr.f32.mxu0 %v722
    %3909 = vmatmul.mubr.f32.gmra.mxu0 %v721
    %v3910 = vpop.f32.mrf.mxu0
    %v3911 = vadd.f32 0.0, %v3910
    %v3912 = vpop.f32.mrf.mxu0
    %v3913 = vadd.f32 0.0, %v3912
    %3914 = vmatprep.mubr.f32.mxu0 %v725
    %3915 = vmatmul.mubr.f32.gmra.mxu0 %v724
    %v3916 = vpop.f32.mrf.mxu0
    %v3917 = vadd.f32 0.0, %v3916
    %v3918 = vpop.f32.mrf.mxu0
    %v3919 = vadd.f32 0.0, %v3918
    %3920 = vmatprep.mubr.f32.mxu0 %v728
    %3921 = vmatmul.mubr.f32.gmra.mxu0 %v727
    %v3922 = vpop.f32.mrf.mxu0
    %v3923 = vadd.f32 0.0, %v3922
    %v3924 = vpop.f32.mrf.mxu0
    %v3925 = vadd.f32 0.0, %v3924
    %3926 = vmatprep.mubr.f32.mxu0 %v731
    %3927 = vmatmul.mubr.f32.gmra.mxu0 %v730
    %v3928 = vpop.f32.mrf.mxu0
    %v3929 = vadd.f32 0.0, %v3928
    %v3930 = vpop.f32.mrf.mxu0
    %v3931 = vadd.f32 0.0, %v3930
    %3932 = vmatprep.mubr.f32.mxu0 %v734
    %3933 = vmatmul.mubr.f32.gmra.mxu0 %v733
    %v3934 = vpop.f32.mrf.mxu0
    %v3935 = vadd.f32 0.0, %v3934
    %v3936 = vpop.f32.mrf.mxu0
    %v3937 = vadd.f32 0.0, %v3936
    %3938 = vmatprep.mubr.f32.mxu0 %v737
    %3939 = vmatmul.mubr.f32.gmra.mxu0 %v736
    %v3940 = vpop.f32.mrf.mxu0
    %v3941 = vadd.f32 0.0, %v3940
    %v3942 = vpop.f32.mrf.mxu0
    %v3943 = vadd.f32 0.0, %v3942
    %3944 = vmatprep.mubr.f32.mxu0 %v740
    %3945 = vmatmul.mubr.f32.gmra.mxu0 %v739
    %v3946 = vpop.f32.mrf.mxu0
    %v3947 = vadd.f32 0.0, %v3946
    %v3948 = vpop.f32.mrf.mxu0
    %v3949 = vadd.f32 0.0, %v3948
    %3950 = vmatprep.mubr.f32.mxu0 %v743
    %3951 = vmatmul.mubr.f32.gmra.mxu0 %v742
    %v3952 = vpop.f32.mrf.mxu0
    %v3953 = vadd.f32 0.0, %v3952
    %v3954 = vpop.f32.mrf.mxu0
    %v3955 = vadd.f32 0.0, %v3954
    %3956 = vmatprep.mubr.f32.mxu0 %v746
    %3957 = vmatmul.mubr.f32.gmra.mxu0 %v745
    %v3958 = vpop.f32.mrf.mxu0
    %v3959 = vadd.f32 0.0, %v3958
    %v3960 = vpop.f32.mrf.mxu0
    %v3961 = vadd.f32 0.0, %v3960
    %3962 = vdwg.mxu0
    %3963 = vmatprep.subr.mxu0 0.0
    %3964 = vmatpush1.msra.mxu0 0.0
    %3965 = vmatprep.subr.mxu0 0.0
    %3966 = vmatpush1.msra.mxu0 0.0
    %3967 = vmatprep.subr.mxu0 0.0
    %3968 = vmatpush1.msra.mxu0 0.0
    %3969 = vmatprep.subr.mxu0 0.0
    %3970 = vmatpush1.msra.mxu0 0.0
    %3971 = vmatprep.subr.mxu0 0.0
    %3972 = vmatpush1.msra.mxu0 0.0
    %3973 = vmatprep.subr.mxu0 0.0
    %3974 = vmatpush1.msra.mxu0 0.0
    %3975 = vmatprep.subr.mxu0 0.0
    %3976 = vmatpush1.msra.mxu0 0.0
    %3977 = vmatprep.subr.mxu0 0.0
    %3978 = vmatpush1.msra.mxu0 0.0
    %3979 = vmatprep.subr.mxu0 %v2821
    %3980 = vmatpush1.msra.mxu0 %v2819
    %3981 = vmatprep.subr.mxu0 %v2815
    %3982 = vmatpush1.msra.mxu0 %v2813
    %3983 = vmatprep.subr.mxu0 %v2809
    %3984 = vmatpush1.msra.mxu0 %v2807
    %3985 = vmatprep.subr.mxu0 %v2803
    %3986 = vmatpush1.msra.mxu0 %v2801
    %3987 = vmatprep.subr.mxu0 %v2797
    %3988 = vmatpush1.msra.mxu0 %v2795
    %3989 = vmatprep.subr.mxu0 %v2791
    %3990 = vmatpush1.msra.mxu0 %v2789
    %3991 = vmatprep.subr.mxu0 %v2785
    %3992 = vmatpush1.msra.mxu0 %v2783
    %3993 = vmatprep.subr.mxu0 %v2779
    %3994 = vmatpush1.msra.mxu0 %v2777
    %3995 = vmatprep.subr.mxu0 0.0
    %3996 = vmatpush2.msra.mxu0 0.0
    %3997 = vmatprep.subr.mxu0 0.0
    %3998 = vmatpush2.msra.mxu0 0.0
    %3999 = vmatprep.subr.mxu0 0.0
    %4000 = vmatpush2.msra.mxu0 0.0
    %4001 = vmatprep.subr.mxu0 0.0
    %4002 = vmatpush2.msra.mxu0 0.0
    %4003 = vmatprep.subr.mxu0 0.0
    %4004 = vmatpush2.msra.mxu0 0.0
    %4005 = vmatprep.subr.mxu0 0.0
    %4006 = vmatpush2.msra.mxu0 0.0
    %4007 = vmatprep.subr.mxu0 0.0
    %4008 = vmatpush2.msra.mxu0 0.0
    %4009 = vmatprep.subr.mxu0 0.0
    %4010 = vmatpush2.msra.mxu0 0.0
    %4011 = vmatprep.subr.mxu0 0.0
    %4012 = vmatpush2.msra.mxu0 0.0
    %4013 = vmatprep.subr.mxu0 0.0
    %4014 = vmatpush2.msra.mxu0 0.0
    %4015 = vmatprep.subr.mxu0 0.0
    %4016 = vmatpush2.msra.mxu0 0.0
    %4017 = vmatprep.subr.mxu0 0.0
    %4018 = vmatpush2.msra.mxu0 0.0
    %4019 = vmatprep.subr.mxu0 0.0
    %4020 = vmatpush2.msra.mxu0 0.0
    %4021 = vmatprep.subr.mxu0 0.0
    %4022 = vmatpush2.msra.mxu0 0.0
    %4023 = vmatprep.subr.mxu0 0.0
    %4024 = vmatpush2.msra.mxu0 0.0
    %4025 = vmatprep.subr.mxu0 0.0
    %4026 = vmatpush2.msra.mxu0 0.0
    %4027 = vmatprep.mubr.f32.mxu0 0.0
    %4028 = vmatmul.mubr.f32.gmra.mxu0 %v2824
    %v4029 = vpop.f32.mrf.mxu0
    %v4030 = vadd.f32 %v3695, %v4029
    %v4031 = vpop.f32.mrf.mxu0
    %v4032 = vadd.f32 %v3697, %v4031
    %4033 = vmatprep.mubr.f32.mxu0 0.0
    %4034 = vmatmul.mubr.f32.gmra.mxu0 %v2827
    %v4035 = vpop.f32.mrf.mxu0
    %v4036 = vadd.f32 %v3701, %v4035
    %v4037 = vpop.f32.mrf.mxu0
    %v4038 = vadd.f32 %v3703, %v4037
    %4039 = vmatprep.mubr.f32.mxu0 0.0
    %4040 = vmatmul.mubr.f32.gmra.mxu0 %v2830
    %v4041 = vpop.f32.mrf.mxu0
    %v4042 = vadd.f32 %v3707, %v4041
    %v4043 = vpop.f32.mrf.mxu0
    %v4044 = vadd.f32 %v3709, %v4043
    %4045 = vmatprep.mubr.f32.mxu0 0.0
    %4046 = vmatmul.mubr.f32.gmra.mxu0 %v2833
    %v4047 = vpop.f32.mrf.mxu0
    %v4048 = vadd.f32 %v3713, %v4047
    %v4049 = vpop.f32.mrf.mxu0
    %v4050 = vadd.f32 %v3715, %v4049
    %4051 = vmatprep.mubr.f32.mxu0 0.0
    %4052 = vmatmul.mubr.f32.gmra.mxu0 %v2836
    %v4053 = vpop.f32.mrf.mxu0
    %v4054 = vadd.f32 %v3719, %v4053
    %v4055 = vpop.f32.mrf.mxu0
    %v4056 = vadd.f32 %v3721, %v4055
    %4057 = vmatprep.mubr.f32.mxu0 0.0
    %4058 = vmatmul.mubr.f32.gmra.mxu0 %v2839
    %v4059 = vpop.f32.mrf.mxu0
    %v4060 = vadd.f32 %v3725, %v4059
    %v4061 = vpop.f32.mrf.mxu0
    %v4062 = vadd.f32 %v3727, %v4061
    %4063 = vmatprep.mubr.f32.mxu0 0.0
    %4064 = vmatmul.mubr.f32.gmra.mxu0 %v2842
    %v4065 = vpop.f32.mrf.mxu0
    %v4066 = vadd.f32 %v3731, %v4065
    %v4067 = vpop.f32.mrf.mxu0
    %v4068 = vadd.f32 %v3733, %v4067
    %4069 = vmatprep.mubr.f32.mxu0 0.0
    %4070 = vmatmul.mubr.f32.gmra.mxu0 %v2845
    %v4071 = vpop.f32.mrf.mxu0
    %v4072 = vadd.f32 %v3737, %v4071
    %v4073 = vpop.f32.mrf.mxu0
    %v4074 = vadd.f32 %v3739, %v4073
    %4075 = vmatprep.mubr.f32.mxu0 0.0
    %4076 = vmatmul.mubr.f32.gmra.mxu0 %v2848
    %v4077 = vpop.f32.mrf.mxu0
    %v4078 = vadd.f32 %v3743, %v4077
    %v4079 = vpop.f32.mrf.mxu0
    %v4080 = vadd.f32 %v3745, %v4079
    %4081 = vmatprep.mubr.f32.mxu0 0.0
    %4082 = vmatmul.mubr.f32.gmra.mxu0 %v2851
    %v4083 = vpop.f32.mrf.mxu0
    %v4084 = vadd.f32 %v3749, %v4083
    %v4085 = vpop.f32.mrf.mxu0
    %v4086 = vadd.f32 %v3751, %v4085
    %4087 = vmatprep.mubr.f32.mxu0 0.0
    %4088 = vmatmul.mubr.f32.gmra.mxu0 %v2854
    %v4089 = vpop.f32.mrf.mxu0
    %v4090 = vadd.f32 %v3755, %v4089
    %v4091 = vpop.f32.mrf.mxu0
    %v4092 = vadd.f32 %v3757, %v4091
    %4093 = vmatprep.mubr.f32.mxu0 0.0
    %4094 = vmatmul.mubr.f32.gmra.mxu0 %v2857
    %v4095 = vpop.f32.mrf.mxu0
    %v4096 = vadd.f32 %v3761, %v4095
    %v4097 = vpop.f32.mrf.mxu0
    %v4098 = vadd.f32 %v3763, %v4097
    %4099 = vmatprep.mubr.f32.mxu0 0.0
    %4100 = vmatmul.mubr.f32.gmra.mxu0 %v2860
    %v4101 = vpop.f32.mrf.mxu0
    %v4102 = vadd.f32 %v3767, %v4101
    %v4103 = vpop.f32.mrf.mxu0
    %v4104 = vadd.f32 %v3769, %v4103
    %4105 = vmatprep.mubr.f32.mxu0 0.0
    %4106 = vmatmul.mubr.f32.gmra.mxu0 %v2863
    %v4107 = vpop.f32.mrf.mxu0
    %v4108 = vadd.f32 %v3773, %v4107
    %v4109 = vpop.f32.mrf.mxu0
    %v4110 = vadd.f32 %v3775, %v4109
    %4111 = vmatprep.mubr.f32.mxu0 0.0
    %4112 = vmatmul.mubr.f32.gmra.mxu0 %v2866
    %v4113 = vpop.f32.mrf.mxu0
    %v4114 = vadd.f32 %v3779, %v4113
    %v4115 = vpop.f32.mrf.mxu0
    %v4116 = vadd.f32 %v3781, %v4115
    %4117 = vmatprep.mubr.f32.mxu0 0.0
    %4118 = vmatmul.mubr.f32.gmra.mxu0 %v2869
    %v4119 = vpop.f32.mrf.mxu0
    %v4120 = vadd.f32 %v3785, %v4119
    %v4121 = vpop.f32.mrf.mxu0
    %v4122 = vadd.f32 %v3787, %v4121
    %4123 = vmatprep.mubr.f32.mxu0 0.0
    %4124 = vmatmul.mubr.f32.gmra.mxu0 %v2872
    %v4125 = vpop.f32.mrf.mxu0
    %v4126 = vadd.f32 %v3791, %v4125
    %v4127 = vpop.f32.mrf.mxu0
    %v4128 = vadd.f32 %v3793, %v4127
    %4129 = vmatprep.mubr.f32.mxu0 0.0
    %4130 = vmatmul.mubr.f32.gmra.mxu0 %v2875
    %v4131 = vpop.f32.mrf.mxu0
    %v4132 = vadd.f32 %v3797, %v4131
    %v4133 = vpop.f32.mrf.mxu0
    %v4134 = vadd.f32 %v3799, %v4133
    %4135 = vmatprep.mubr.f32.mxu0 0.0
    %4136 = vmatmul.mubr.f32.gmra.mxu0 %v2878
    %v4137 = vpop.f32.mrf.mxu0
    %v4138 = vadd.f32 %v3803, %v4137
    %v4139 = vpop.f32.mrf.mxu0
    %v4140 = vadd.f32 %v3805, %v4139
    %4141 = vmatprep.mubr.f32.mxu0 0.0
    %4142 = vmatmul.mubr.f32.gmra.mxu0 %v2881
    %v4143 = vpop.f32.mrf.mxu0
    %v4144 = vadd.f32 %v3809, %v4143
    %v4145 = vpop.f32.mrf.mxu0
    %v4146 = vadd.f32 %v3811, %v4145
    %4147 = vmatprep.mubr.f32.mxu0 0.0
    %4148 = vmatmul.mubr.f32.gmra.mxu0 %v2884
    %v4149 = vpop.f32.mrf.mxu0
    %v4150 = vadd.f32 %v3815, %v4149
    %v4151 = vpop.f32.mrf.mxu0
    %v4152 = vadd.f32 %v3817, %v4151
    %4153 = vmatprep.mubr.f32.mxu0 0.0
    %4154 = vmatmul.mubr.f32.gmra.mxu0 %v2887
    %v4155 = vpop.f32.mrf.mxu0
    %v4156 = vadd.f32 %v3821, %v4155
    %v4157 = vpop.f32.mrf.mxu0
    %v4158 = vadd.f32 %v3823, %v4157
    %4159 = vmatprep.mubr.f32.mxu0 0.0
    %4160 = vmatmul.mubr.f32.gmra.mxu0 %v2890
    %v4161 = vpop.f32.mrf.mxu0
    %v4162 = vadd.f32 %v3827, %v4161
    %v4163 = vpop.f32.mrf.mxu0
    %v4164 = vadd.f32 %v3829, %v4163
    %4165 = vmatprep.mubr.f32.mxu0 0.0
    %4166 = vmatmul.mubr.f32.gmra.mxu0 %v2893
    %v4167 = vpop.f32.mrf.mxu0
    %v4168 = vadd.f32 %v3833, %v4167
    %v4169 = vpop.f32.mrf.mxu0
    %v4170 = vadd.f32 %v3835, %v4169
    %4171 = vmatprep.mubr.f32.mxu0 0.0
    %4172 = vmatmul.mubr.f32.gmra.mxu0 %v2896
    %v4173 = vpop.f32.mrf.mxu0
    %v4174 = vadd.f32 %v3839, %v4173
    %v4175 = vpop.f32.mrf.mxu0
    %v4176 = vadd.f32 %v3841, %v4175
    %4177 = vmatprep.mubr.f32.mxu0 0.0
    %4178 = vmatmul.mubr.f32.gmra.mxu0 %v2899
    %v4179 = vpop.f32.mrf.mxu0
    %v4180 = vadd.f32 %v3845, %v4179
    %v4181 = vpop.f32.mrf.mxu0
    %v4182 = vadd.f32 %v3847, %v4181
    %4183 = vmatprep.mubr.f32.mxu0 0.0
    %4184 = vmatmul.mubr.f32.gmra.mxu0 %v2902
    %v4185 = vpop.f32.mrf.mxu0
    %v4186 = vadd.f32 %v3851, %v4185
    %v4187 = vpop.f32.mrf.mxu0
    %v4188 = vadd.f32 %v3853, %v4187
    %4189 = vmatprep.mubr.f32.mxu0 0.0
    %4190 = vmatmul.mubr.f32.gmra.mxu0 %v2905
    %v4191 = vpop.f32.mrf.mxu0
    %v4192 = vadd.f32 %v3857, %v4191
    %v4193 = vpop.f32.mrf.mxu0
    %v4194 = vadd.f32 %v3859, %v4193
    %4195 = vmatprep.mubr.f32.mxu0 0.0
    %4196 = vmatmul.mubr.f32.gmra.mxu0 %v2908
    %v4197 = vpop.f32.mrf.mxu0
    %v4198 = vadd.f32 %v3863, %v4197
    %v4199 = vpop.f32.mrf.mxu0
    %v4200 = vadd.f32 %v3865, %v4199
    %4201 = vmatprep.mubr.f32.mxu0 0.0
    %4202 = vmatmul.mubr.f32.gmra.mxu0 %v2911
    %v4203 = vpop.f32.mrf.mxu0
    %v4204 = vadd.f32 %v3869, %v4203
    %v4205 = vpop.f32.mrf.mxu0
    %v4206 = vadd.f32 %v3871, %v4205
    %4207 = vmatprep.mubr.f32.mxu0 0.0
    %4208 = vmatmul.mubr.f32.gmra.mxu0 %v2914
    %v4209 = vpop.f32.mrf.mxu0
    %v4210 = vadd.f32 %v3875, %v4209
    %v4211 = vpop.f32.mrf.mxu0
    %v4212 = vadd.f32 %v3877, %v4211
    %4213 = vmatprep.mubr.f32.mxu0 0.0
    %4214 = vmatmul.mubr.f32.gmra.mxu0 %v2917
    %v4215 = vpop.f32.mrf.mxu0
    %v4216 = vadd.f32 %v3881, %v4215
    %v4217 = vpop.f32.mrf.mxu0
    %v4218 = vadd.f32 %v3883, %v4217
    %4219 = vmatprep.mubr.f32.mxu0 0.0
    %4220 = vmatmul.mubr.f32.gmra.mxu0 %v2920
    %v4221 = vpop.f32.mrf.mxu0
    %v4222 = vadd.f32 %v3887, %v4221
    %v4223 = vpop.f32.mrf.mxu0
    %v4224 = vadd.f32 %v3889, %v4223
    %4225 = vmatprep.mubr.f32.mxu0 0.0
    %4226 = vmatmul.mubr.f32.gmra.mxu0 %v2923
    %v4227 = vpop.f32.mrf.mxu0
    %v4228 = vadd.f32 %v3893, %v4227
    %v4229 = vpop.f32.mrf.mxu0
    %v4230 = vadd.f32 %v3895, %v4229
    %4231 = vmatprep.mubr.f32.mxu0 0.0
    %4232 = vmatmul.mubr.f32.gmra.mxu0 %v2926
    %v4233 = vpop.f32.mrf.mxu0
    %v4234 = vadd.f32 %v3899, %v4233
    %v4235 = vpop.f32.mrf.mxu0
    %v4236 = vadd.f32 %v3901, %v4235
    %4237 = vmatprep.mubr.f32.mxu0 0.0
    %4238 = vmatmul.mubr.f32.gmra.mxu0 %v2929
    %v4239 = vpop.f32.mrf.mxu0
    %v4240 = vadd.f32 %v3905, %v4239
    %v4241 = vpop.f32.mrf.mxu0
    %v4242 = vadd.f32 %v3907, %v4241
    %4243 = vmatprep.mubr.f32.mxu0 0.0
    %4244 = vmatmul.mubr.f32.gmra.mxu0 %v2932
    %v4245 = vpop.f32.mrf.mxu0
    %v4246 = vadd.f32 %v3911, %v4245
    %v4247 = vpop.f32.mrf.mxu0
    %v4248 = vadd.f32 %v3913, %v4247
    %4249 = vmatprep.mubr.f32.mxu0 0.0
    %4250 = vmatmul.mubr.f32.gmra.mxu0 %v2935
    %v4251 = vpop.f32.mrf.mxu0
    %v4252 = vadd.f32 %v3917, %v4251
    %v4253 = vpop.f32.mrf.mxu0
    %v4254 = vadd.f32 %v3919, %v4253
    %4255 = vmatprep.mubr.f32.mxu0 0.0
    %4256 = vmatmul.mubr.f32.gmra.mxu0 %v2938
    %v4257 = vpop.f32.mrf.mxu0
    %v4258 = vadd.f32 %v3923, %v4257
    %v4259 = vpop.f32.mrf.mxu0
    %v4260 = vadd.f32 %v3925, %v4259
    %4261 = vmatprep.mubr.f32.mxu0 0.0
    %4262 = vmatmul.mubr.f32.gmra.mxu0 %v2941
    %v4263 = vpop.f32.mrf.mxu0
    %v4264 = vadd.f32 %v3929, %v4263
    %v4265 = vpop.f32.mrf.mxu0
    %v4266 = vadd.f32 %v3931, %v4265
    %4267 = vmatprep.mubr.f32.mxu0 0.0
    %4268 = vmatmul.mubr.f32.gmra.mxu0 %v2944
    %v4269 = vpop.f32.mrf.mxu0
    %v4270 = vadd.f32 %v3935, %v4269
    %v4271 = vpop.f32.mrf.mxu0
    %v4272 = vadd.f32 %v3937, %v4271
    %4273 = vmatprep.mubr.f32.mxu0 0.0
    %4274 = vmatmul.mubr.f32.gmra.mxu0 %v2947
    %v4275 = vpop.f32.mrf.mxu0
    %v4276 = vadd.f32 %v3941, %v4275
    %v4277 = vpop.f32.mrf.mxu0
    %v4278 = vadd.f32 %v3943, %v4277
    %4279 = vmatprep.mubr.f32.mxu0 0.0
    %4280 = vmatmul.mubr.f32.gmra.mxu0 %v2950
    %v4281 = vpop.f32.mrf.mxu0
    %v4282 = vadd.f32 %v3947, %v4281
    %v4283 = vpop.f32.mrf.mxu0
    %v4284 = vadd.f32 %v3949, %v4283
    %4285 = vmatprep.mubr.f32.mxu0 0.0
    %4286 = vmatmul.mubr.f32.gmra.mxu0 %v2953
    %v4287 = vpop.f32.mrf.mxu0
    %v4288 = vadd.f32 %v3953, %v4287
    %v4289 = vpop.f32.mrf.mxu0
    %v4290 = vadd.f32 %v3955, %v4289
    %4291 = vmatprep.mubr.f32.mxu0 0.0
    %4292 = vmatmul.mubr.f32.gmra.mxu0 %v2956
    %v4293 = vpop.f32.mrf.mxu0
    %v4294 = vadd.f32 %v3959, %v4293
    %v4295 = vpop.f32.mrf.mxu0
    %v4296 = vadd.f32 %v3961, %v4295
    %4297 = vdwg.mxu0
    %v4298 = vmul.f32 %v3360, %v3360
    %v4299 = vmul.f32 %v3362, %v3362
    %v4300 = vmul.f32 %v4030, %v4030
    %v4301 = vmul.f32 %v4032, %v4032
    %v4302 = vmul.f32 %v3366, %v3366
    %v4303 = vmul.f32 %v3368, %v3368
    %v4304 = vmul.f32 %v4036, %v4036
    %v4305 = vmul.f32 %v4038, %v4038
    %v4306 = vmul.f32 %v3372, %v3372
    %v4307 = vmul.f32 %v3374, %v3374
    %v4308 = vmul.f32 %v4042, %v4042
    %v4309 = vmul.f32 %v4044, %v4044
    %v4310 = vmul.f32 %v3378, %v3378
    %v4311 = vmul.f32 %v3380, %v3380
    %v4312 = vmul.f32 %v4048, %v4048
    %v4313 = vmul.f32 %v4050, %v4050
    %v4314 = vmul.f32 %v3384, %v3384
    %v4315 = vmul.f32 %v3386, %v3386
    %v4316 = vmul.f32 %v4054, %v4054
    %v4317 = vmul.f32 %v4056, %v4056
    %v4318 = vmul.f32 %v3390, %v3390
    %v4319 = vmul.f32 %v3392, %v3392
    %v4320 = vmul.f32 %v4060, %v4060
    %v4321 = vmul.f32 %v4062, %v4062
    %v4322 = vmul.f32 %v3396, %v3396
    %v4323 = vmul.f32 %v3398, %v3398
    %v4324 = vmul.f32 %v4066, %v4066
    %v4325 = vmul.f32 %v4068, %v4068
    %v4326 = vmul.f32 %v3402, %v3402
    %v4327 = vmul.f32 %v3404, %v3404
    %v4328 = vmul.f32 %v4072, %v4072
    %v4329 = vmul.f32 %v4074, %v4074
    %v4330 = vmul.f32 %v3408, %v3408
    %v4331 = vmul.f32 %v3410, %v3410
    %v4332 = vmul.f32 %v4078, %v4078
    %v4333 = vmul.f32 %v4080, %v4080
    %v4334 = vmul.f32 %v3414, %v3414
    %v4335 = vmul.f32 %v3416, %v3416
    %v4336 = vmul.f32 %v4084, %v4084
    %v4337 = vmul.f32 %v4086, %v4086
    %v4338 = vmul.f32 %v3420, %v3420
    %v4339 = vmul.f32 %v3422, %v3422
    %v4340 = vmul.f32 %v4090, %v4090
    %v4341 = vmul.f32 %v4092, %v4092
    %v4342 = vmul.f32 %v3426, %v3426
    %v4343 = vmul.f32 %v3428, %v3428
    %v4344 = vmul.f32 %v4096, %v4096
    %v4345 = vmul.f32 %v4098, %v4098
    %v4346 = vmul.f32 %v3432, %v3432
    %v4347 = vmul.f32 %v3434, %v3434
    %v4348 = vmul.f32 %v4102, %v4102
    %v4349 = vmul.f32 %v4104, %v4104
    %v4350 = vmul.f32 %v3438, %v3438
    %v4351 = vmul.f32 %v3440, %v3440
    %v4352 = vmul.f32 %v4108, %v4108
    %v4353 = vmul.f32 %v4110, %v4110
    %v4354 = vmul.f32 %v3444, %v3444
    %v4355 = vmul.f32 %v3446, %v3446
    %v4356 = vmul.f32 %v4114, %v4114
    %v4357 = vmul.f32 %v4116, %v4116
    %v4358 = vmul.f32 %v3450, %v3450
    %v4359 = vmul.f32 %v3452, %v3452
    %v4360 = vmul.f32 %v4120, %v4120
    %v4361 = vmul.f32 %v4122, %v4122
    %v4362 = vmul.f32 %v3456, %v3456
    %v4363 = vmul.f32 %v3458, %v3458
    %v4364 = vmul.f32 %v4126, %v4126
    %v4365 = vmul.f32 %v4128, %v4128
    %v4366 = vmul.f32 %v3462, %v3462
    %v4367 = vmul.f32 %v3464, %v3464
    %v4368 = vmul.f32 %v4132, %v4132
    %v4369 = vmul.f32 %v4134, %v4134
    %v4370 = vmul.f32 %v3360, %v3414
    %v4371 = vmul.f32 %v3362, %v3416
    %v4372 = vmul.f32 %v4030, %v4084
    %v4373 = vmul.f32 %v4032, %v4086
    %v4374 = vmul.f32 %v3366, %v3420
    %v4375 = vmul.f32 %v3368, %v3422
    %v4376 = vmul.f32 %v4036, %v4090
    %v4377 = vmul.f32 %v4038, %v4092
    %v4378 = vmul.f32 %v3372, %v3426
    %v4379 = vmul.f32 %v3374, %v3428
    %v4380 = vmul.f32 %v4042, %v4096
    %v4381 = vmul.f32 %v4044, %v4098
    %v4382 = vmul.f32 %v3378, %v3432
    %v4383 = vmul.f32 %v3380, %v3434
    %v4384 = vmul.f32 %v4048, %v4102
    %v4385 = vmul.f32 %v4050, %v4104
    %v4386 = vmul.f32 %v3384, %v3438
    %v4387 = vmul.f32 %v3386, %v3440
    %v4388 = vmul.f32 %v4054, %v4108
    %v4389 = vmul.f32 %v4056, %v4110
    %v4390 = vmul.f32 %v3390, %v3444
    %v4391 = vmul.f32 %v3392, %v3446
    %v4392 = vmul.f32 %v4060, %v4114
    %v4393 = vmul.f32 %v4062, %v4116
    %v4394 = vmul.f32 %v3396, %v3450
    %v4395 = vmul.f32 %v3398, %v3452
    %v4396 = vmul.f32 %v4066, %v4120
    %v4397 = vmul.f32 %v4068, %v4122
    %v4398 = vmul.f32 %v3402, %v3456
    %v4399 = vmul.f32 %v3404, %v3458
    %v4400 = vmul.f32 %v4072, %v4126
    %v4401 = vmul.f32 %v4074, %v4128
    %v4402 = vmul.f32 %v3408, %v3462
    %v4403 = vmul.f32 %v3410, %v3464
    %v4404 = vmul.f32 %v4078, %v4132
    %v4405 = vmul.f32 %v4080, %v4134
    %v4406 = vsub.f32 %v3468, %v4298
    %v4407 = vsub.f32 %v3470, %v4299
    %v4408 = vsub.f32 %v4138, %v4300
    %v4409 = vsub.f32 %v4140, %v4301
    %v4410 = vsub.f32 %v3474, %v4302
    %v4411 = vsub.f32 %v3476, %v4303
    %v4412 = vsub.f32 %v4144, %v4304
    %v4413 = vsub.f32 %v4146, %v4305
    %v4414 = vsub.f32 %v3480, %v4306
    %v4415 = vsub.f32 %v3482, %v4307
    %v4416 = vsub.f32 %v4150, %v4308
    %v4417 = vsub.f32 %v4152, %v4309
    %v4418 = vsub.f32 %v3486, %v4310
    %v4419 = vsub.f32 %v3488, %v4311
    %v4420 = vsub.f32 %v4156, %v4312
    %v4421 = vsub.f32 %v4158, %v4313
    %v4422 = vsub.f32 %v3492, %v4314
    %v4423 = vsub.f32 %v3494, %v4315
    %v4424 = vsub.f32 %v4162, %v4316
    %v4425 = vsub.f32 %v4164, %v4317
    %v4426 = vsub.f32 %v3498, %v4318
    %v4427 = vsub.f32 %v3500, %v4319
    %v4428 = vsub.f32 %v4168, %v4320
    %v4429 = vsub.f32 %v4170, %v4321
    %v4430 = vsub.f32 %v3504, %v4322
    %v4431 = vsub.f32 %v3506, %v4323
    %v4432 = vsub.f32 %v4174, %v4324
    %v4433 = vsub.f32 %v4176, %v4325
    %v4434 = vsub.f32 %v3510, %v4326
    %v4435 = vsub.f32 %v3512, %v4327
    %v4436 = vsub.f32 %v4180, %v4328
    %v4437 = vsub.f32 %v4182, %v4329
    %v4438 = vsub.f32 %v3516, %v4330
    %v4439 = vsub.f32 %v3518, %v4331
    %v4440 = vsub.f32 %v4186, %v4332
    %v4441 = vsub.f32 %v4188, %v4333
    %v4442 = vsub.f32 %v3522, %v4334
    %v4443 = vsub.f32 %v3524, %v4335
    %v4444 = vsub.f32 %v4192, %v4336
    %v4445 = vsub.f32 %v4194, %v4337
    %v4446 = vsub.f32 %v3528, %v4338
    %v4447 = vsub.f32 %v3530, %v4339
    %v4448 = vsub.f32 %v4198, %v4340
    %v4449 = vsub.f32 %v4200, %v4341
    %v4450 = vsub.f32 %v3534, %v4342
    %v4451 = vsub.f32 %v3536, %v4343
    %v4452 = vsub.f32 %v4204, %v4344
    %v4453 = vsub.f32 %v4206, %v4345
    %v4454 = vsub.f32 %v3540, %v4346
    %v4455 = vsub.f32 %v3542, %v4347
    %v4456 = vsub.f32 %v4210, %v4348
    %v4457 = vsub.f32 %v4212, %v4349
    %v4458 = vsub.f32 %v3546, %v4350
    %v4459 = vsub.f32 %v3548, %v4351
    %v4460 = vsub.f32 %v4216, %v4352
    %v4461 = vsub.f32 %v4218, %v4353
    %v4462 = vsub.f32 %v3552, %v4354
    %v4463 = vsub.f32 %v3554, %v4355
    %v4464 = vsub.f32 %v4222, %v4356
    %v4465 = vsub.f32 %v4224, %v4357
    %v4466 = vsub.f32 %v3558, %v4358
    %v4467 = vsub.f32 %v3560, %v4359
    %v4468 = vsub.f32 %v4228, %v4360
    %v4469 = vsub.f32 %v4230, %v4361
    %v4470 = vsub.f32 %v3564, %v4362
    %v4471 = vsub.f32 %v3566, %v4363
    %v4472 = vsub.f32 %v4234, %v4364
    %v4473 = vsub.f32 %v4236, %v4365
    %v4474 = vsub.f32 %v3570, %v4366
    %v4475 = vsub.f32 %v3572, %v4367
    %v4476 = vsub.f32 %v4240, %v4368
    %v4477 = vsub.f32 %v4242, %v4369
    %v4478 = vsub.f32 %v3576, %v4370
    %v4479 = vsub.f32 %v3578, %v4371
    %v4480 = vsub.f32 %v4246, %v4372
    %v4481 = vsub.f32 %v4248, %v4373
    %v4482 = vsub.f32 %v3582, %v4374
    %v4483 = vsub.f32 %v3584, %v4375
    %v4484 = vsub.f32 %v4252, %v4376
    %v4485 = vsub.f32 %v4254, %v4377
    %v4486 = vsub.f32 %v3588, %v4378
    %v4487 = vsub.f32 %v3590, %v4379
    %v4488 = vsub.f32 %v4258, %v4380
    %v4489 = vsub.f32 %v4260, %v4381
    %v4490 = vsub.f32 %v3594, %v4382
    %v4491 = vsub.f32 %v3596, %v4383
    %v4492 = vsub.f32 %v4264, %v4384
    %v4493 = vsub.f32 %v4266, %v4385
    %v4494 = vsub.f32 %v3600, %v4386
    %v4495 = vsub.f32 %v3602, %v4387
    %v4496 = vsub.f32 %v4270, %v4388
    %v4497 = vsub.f32 %v4272, %v4389
    %v4498 = vsub.f32 %v3606, %v4390
    %v4499 = vsub.f32 %v3608, %v4391
    %v4500 = vsub.f32 %v4276, %v4392
    %v4501 = vsub.f32 %v4278, %v4393
    %v4502 = vsub.f32 %v3612, %v4394
    %v4503 = vsub.f32 %v3614, %v4395
    %v4504 = vsub.f32 %v4282, %v4396
    %v4505 = vsub.f32 %v4284, %v4397
    %v4506 = vsub.f32 %v3618, %v4398
    %v4507 = vsub.f32 %v3620, %v4399
    %v4508 = vsub.f32 %v4288, %v4400
    %v4509 = vsub.f32 %v4290, %v4401
    %v4510 = vsub.f32 %v3624, %v4402
    %v4511 = vsub.f32 %v3626, %v4403
    %v4512 = vsub.f32 %v4294, %v4404
    %v4513 = vsub.f32 %v4296, %v4405
    %v4514 = vmul.f32 %v4478, 2.0
    %v4515 = vmul.f32 %v4479, 2.0
    %v4516 = vmul.f32 %v4480, 2.0
    %v4517 = vmul.f32 %v4481, 2.0
    %v4518 = vmul.f32 %v4482, 2.0
    %v4519 = vmul.f32 %v4483, 2.0
    %v4520 = vmul.f32 %v4484, 2.0
    %v4521 = vmul.f32 %v4485, 2.0
    %v4522 = vmul.f32 %v4486, 2.0
    %v4523 = vmul.f32 %v4487, 2.0
    %v4524 = vmul.f32 %v4488, 2.0
    %v4525 = vmul.f32 %v4489, 2.0
    %v4526 = vmul.f32 %v4490, 2.0
    %v4527 = vmul.f32 %v4491, 2.0
    %v4528 = vmul.f32 %v4492, 2.0
    %v4529 = vmul.f32 %v4493, 2.0
    %v4530 = vmul.f32 %v4494, 2.0
    %v4531 = vmul.f32 %v4495, 2.0
    %v4532 = vmul.f32 %v4496, 2.0
    %v4533 = vmul.f32 %v4497, 2.0
    %v4534 = vmul.f32 %v4498, 2.0
    %v4535 = vmul.f32 %v4499, 2.0
    %v4536 = vmul.f32 %v4500, 2.0
    %v4537 = vmul.f32 %v4501, 2.0
    %v4538 = vmul.f32 %v4502, 2.0
    %v4539 = vmul.f32 %v4503, 2.0
    %v4540 = vmul.f32 %v4504, 2.0
    %v4541 = vmul.f32 %v4505, 2.0
    %v4542 = vmul.f32 %v4506, 2.0
    %v4543 = vmul.f32 %v4507, 2.0
    %v4544 = vmul.f32 %v4508, 2.0
    %v4545 = vmul.f32 %v4509, 2.0
    %v4546 = vmul.f32 %v4510, 2.0
    %v4547 = vmul.f32 %v4511, 2.0
    %v4548 = vmul.f32 %v4512, 2.0
    %v4549 = vmul.f32 %v4513, 2.0
    %v4550 = vadd.f32 %v4514, 0.0009
    %v4551 = vadd.f32 %v4515, 0.0009
    %v4552 = vadd.f32 %v4516, 0.0009
    %v4553 = vadd.f32 %v4517, 0.0009
    %v4554 = vadd.f32 %v4518, 0.0009
    %v4555 = vadd.f32 %v4519, 0.0009
    %v4556 = vadd.f32 %v4520, 0.0009
    %v4557 = vadd.f32 %v4521, 0.0009
    %v4558 = vadd.f32 %v4522, 0.0009
    %v4559 = vadd.f32 %v4523, 0.0009
    %v4560 = vadd.f32 %v4524, 0.0009
    %v4561 = vadd.f32 %v4525, 0.0009
    %v4562 = vadd.f32 %v4526, 0.0009
    %v4563 = vadd.f32 %v4527, 0.0009
    %v4564 = vadd.f32 %v4528, 0.0009
    %v4565 = vadd.f32 %v4529, 0.0009
    %v4566 = vadd.f32 %v4530, 0.0009
    %v4567 = vadd.f32 %v4531, 0.0009
    %v4568 = vadd.f32 %v4532, 0.0009
    %v4569 = vadd.f32 %v4533, 0.0009
    %v4570 = vadd.f32 %v4534, 0.0009
    %v4571 = vadd.f32 %v4535, 0.0009
    %v4572 = vadd.f32 %v4536, 0.0009
    %v4573 = vadd.f32 %v4537, 0.0009
    %v4574 = vadd.f32 %v4538, 0.0009
    %v4575 = vadd.f32 %v4539, 0.0009
    %v4576 = vadd.f32 %v4540, 0.0009
    %v4577 = vadd.f32 %v4541, 0.0009
    %v4578 = vadd.f32 %v4542, 0.0009
    %v4579 = vadd.f32 %v4543, 0.0009
    %v4580 = vadd.f32 %v4544, 0.0009
    %v4581 = vadd.f32 %v4545, 0.0009
    %v4582 = vadd.f32 %v4546, 0.0009
    %v4583 = vadd.f32 %v4547, 0.0009
    %v4584 = vadd.f32 %v4548, 0.0009
    %v4585 = vadd.f32 %v4549, 0.0009
    %v4586 = vadd.f32 %v4406, %v4442
    %v4587 = vadd.f32 %v4407, %v4443
    %v4588 = vadd.f32 %v4408, %v4444
    %v4589 = vadd.f32 %v4409, %v4445
    %v4590 = vadd.f32 %v4410, %v4446
    %v4591 = vadd.f32 %v4411, %v4447
    %v4592 = vadd.f32 %v4412, %v4448
    %v4593 = vadd.f32 %v4413, %v4449
    %v4594 = vadd.f32 %v4414, %v4450
    %v4595 = vadd.f32 %v4415, %v4451
    %v4596 = vadd.f32 %v4416, %v4452
    %v4597 = vadd.f32 %v4417, %v4453
    %v4598 = vadd.f32 %v4418, %v4454
    %v4599 = vadd.f32 %v4419, %v4455
    %v4600 = vadd.f32 %v4420, %v4456
    %v4601 = vadd.f32 %v4421, %v4457
    %v4602 = vadd.f32 %v4422, %v4458
    %v4603 = vadd.f32 %v4423, %v4459
    %v4604 = vadd.f32 %v4424, %v4460
    %v4605 = vadd.f32 %v4425, %v4461
    %v4606 = vadd.f32 %v4426, %v4462
    %v4607 = vadd.f32 %v4427, %v4463
    %v4608 = vadd.f32 %v4428, %v4464
    %v4609 = vadd.f32 %v4429, %v4465
    %v4610 = vadd.f32 %v4430, %v4466
    %v4611 = vadd.f32 %v4431, %v4467
    %v4612 = vadd.f32 %v4432, %v4468
    %v4613 = vadd.f32 %v4433, %v4469
    %v4614 = vadd.f32 %v4434, %v4470
    %v4615 = vadd.f32 %v4435, %v4471
    %v4616 = vadd.f32 %v4436, %v4472
    %v4617 = vadd.f32 %v4437, %v4473
    %v4618 = vadd.f32 %v4438, %v4474
    %v4619 = vadd.f32 %v4439, %v4475
    %v4620 = vadd.f32 %v4440, %v4476
    %v4621 = vadd.f32 %v4441, %v4477
    %v4622 = vadd.f32 %v4586, 0.0009
    %v4623 = vadd.f32 %v4587, 0.0009
    %v4624 = vadd.f32 %v4588, 0.0009
    %v4625 = vadd.f32 %v4589, 0.0009
    %v4626 = vadd.f32 %v4590, 0.0009
    %v4627 = vadd.f32 %v4591, 0.0009
    %v4628 = vadd.f32 %v4592, 0.0009
    %v4629 = vadd.f32 %v4593, 0.0009
    %v4630 = vadd.f32 %v4594, 0.0009
    %v4631 = vadd.f32 %v4595, 0.0009
    %v4632 = vadd.f32 %v4596, 0.0009
    %v4633 = vadd.f32 %v4597, 0.0009
    %v4634 = vadd.f32 %v4598, 0.0009
    %v4635 = vadd.f32 %v4599, 0.0009
    %v4636 = vadd.f32 %v4600, 0.0009
    %v4637 = vadd.f32 %v4601, 0.0009
    %v4638 = vadd.f32 %v4602, 0.0009
    %v4639 = vadd.f32 %v4603, 0.0009
    %v4640 = vadd.f32 %v4604, 0.0009
    %v4641 = vadd.f32 %v4605, 0.0009
    %v4642 = vadd.f32 %v4606, 0.0009
    %v4643 = vadd.f32 %v4607, 0.0009
    %v4644 = vadd.f32 %v4608, 0.0009
    %v4645 = vadd.f32 %v4609, 0.0009
    %v4646 = vadd.f32 %v4610, 0.0009
    %v4647 = vadd.f32 %v4611, 0.0009
    %v4648 = vadd.f32 %v4612, 0.0009
    %v4649 = vadd.f32 %v4613, 0.0009
    %v4650 = vadd.f32 %v4614, 0.0009
    %v4651 = vadd.f32 %v4615, 0.0009
    %v4652 = vadd.f32 %v4616, 0.0009
    %v4653 = vadd.f32 %v4617, 0.0009
    %v4654 = vadd.f32 %v4618, 0.0009
    %v4655 = vadd.f32 %v4619, 0.0009
    %v4656 = vadd.f32 %v4620, 0.0009
    %v4657 = vadd.f32 %v4621, 0.0009
    %v4658 = vrcp.pop %v4622
    %v4659 = vrcp.pop %v4623
    %v4660 = vrcp.pop %v4624
    %v4661 = vrcp.pop %v4625
    %v4662 = vrcp.pop %v4626
    %v4663 = vrcp.pop %v4627
    %v4664 = vrcp.pop %v4628
    %v4665 = vrcp.pop %v4629
    %v4666 = vrcp.pop %v4630
    %v4667 = vrcp.pop %v4631
    %v4668 = vrcp.pop %v4632
    %v4669 = vrcp.pop %v4633
    %v4670 = vrcp.pop %v4634
    %v4671 = vrcp.pop %v4635
    %v4672 = vrcp.pop %v4636
    %v4673 = vrcp.pop %v4637
    %v4674 = vrcp.pop %v4638
    %v4675 = vrcp.pop %v4639
    %v4676 = vrcp.pop %v4640
    %v4677 = vrcp.pop %v4641
    %v4678 = vrcp.pop %v4642
    %v4679 = vrcp.pop %v4643
    %v4680 = vrcp.pop %v4644
    %v4681 = vrcp.pop %v4645
    %v4682 = vrcp.pop %v4646
    %v4683 = vrcp.pop %v4647
    %v4684 = vrcp.pop %v4648
    %v4685 = vrcp.pop %v4649
    %v4686 = vrcp.pop %v4650
    %v4687 = vrcp.pop %v4651
    %v4688 = vrcp.pop %v4652
    %v4689 = vrcp.pop %v4653
    %v4690 = vrcp.pop %v4654
    %v4691 = vrcp.pop %v4655
    %v4692 = vrcp.pop %v4656
    %v4693 = vrcp.pop %v4657
    %v4694 = vmul.f32 %v4550, %v4658
    %v4695 = vmul.f32 %v4551, %v4659
    %v4696 = vmul.f32 %v4552, %v4660
    %v4697 = vmul.f32 %v4553, %v4661
    %v4698 = vmul.f32 %v4554, %v4662
    %v4699 = vmul.f32 %v4555, %v4663
    %v4700 = vmul.f32 %v4556, %v4664
    %v4701 = vmul.f32 %v4557, %v4665
    %v4702 = vmul.f32 %v4558, %v4666
    %v4703 = vmul.f32 %v4559, %v4667
    %v4704 = vmul.f32 %v4560, %v4668
    %v4705 = vmul.f32 %v4561, %v4669
    %v4706 = vmul.f32 %v4562, %v4670
    %v4707 = vmul.f32 %v4563, %v4671
    %v4708 = vmul.f32 %v4564, %v4672
    %v4709 = vmul.f32 %v4565, %v4673
    %v4710 = vmul.f32 %v4566, %v4674
    %v4711 = vmul.f32 %v4567, %v4675
    %v4712 = vmul.f32 %v4568, %v4676
    %v4713 = vmul.f32 %v4569, %v4677
    %v4714 = vmul.f32 %v4570, %v4678
    %v4715 = vmul.f32 %v4571, %v4679
    %v4716 = vmul.f32 %v4572, %v4680
    %v4717 = vmul.f32 %v4573, %v4681
    %v4718 = vmul.f32 %v4574, %v4682
    %v4719 = vmul.f32 %v4575, %v4683
    %v4720 = vmul.f32 %v4576, %v4684
    %v4721 = vmul.f32 %v4577, %v4685
    %v4722 = vmul.f32 %v4578, %v4686
    %v4723 = vmul.f32 %v4579, %v4687
    %v4724 = vmul.f32 %v4580, %v4688
    %v4725 = vmul.f32 %v4581, %v4689
    %v4726 = vmul.f32 %v4582, %v4690
    %v4727 = vmul.f32 %v4583, %v4691
    %v4728 = vmul.f32 %v4584, %v4692
    %v4729 = vmul.f32 %v4585, %v4693
    %v4730 = vmul.f32 %v4370, 2.0
    %v4731 = vmul.f32 %v4371, 2.0
    %v4732 = vmul.f32 %v4372, 2.0
    %v4733 = vmul.f32 %v4373, 2.0
    %v4734 = vmul.f32 %v4374, 2.0
    %v4735 = vmul.f32 %v4375, 2.0
    %v4736 = vmul.f32 %v4376, 2.0
    %v4737 = vmul.f32 %v4377, 2.0
    %v4738 = vmul.f32 %v4378, 2.0
    %v4739 = vmul.f32 %v4379, 2.0
    %v4740 = vmul.f32 %v4380, 2.0
    %v4741 = vmul.f32 %v4381, 2.0
    %v4742 = vmul.f32 %v4382, 2.0
    %v4743 = vmul.f32 %v4383, 2.0
    %v4744 = vmul.f32 %v4384, 2.0
    %v4745 = vmul.f32 %v4385, 2.0
    %v4746 = vmul.f32 %v4386, 2.0
    %v4747 = vmul.f32 %v4387, 2.0
    %v4748 = vmul.f32 %v4388, 2.0
    %v4749 = vmul.f32 %v4389, 2.0
    %v4750 = vmul.f32 %v4390, 2.0
    %v4751 = vmul.f32 %v4391, 2.0
    %v4752 = vmul.f32 %v4392, 2.0
    %v4753 = vmul.f32 %v4393, 2.0
    %v4754 = vmul.f32 %v4394, 2.0
    %v4755 = vmul.f32 %v4395, 2.0
    %v4756 = vmul.f32 %v4396, 2.0
    %v4757 = vmul.f32 %v4397, 2.0
    %v4758 = vmul.f32 %v4398, 2.0
    %v4759 = vmul.f32 %v4399, 2.0
    %v4760 = vmul.f32 %v4400, 2.0
    %v4761 = vmul.f32 %v4401, 2.0
    %v4762 = vmul.f32 %v4402, 2.0
    %v4763 = vmul.f32 %v4403, 2.0
    %v4764 = vmul.f32 %v4404, 2.0
    %v4765 = vmul.f32 %v4405, 2.0
    %v4766 = vadd.f32 %v4730, 0.0001
    %v4767 = vadd.f32 %v4731, 0.0001
    %v4768 = vadd.f32 %v4732, 0.0001
    %v4769 = vadd.f32 %v4733, 0.0001
    %v4770 = vadd.f32 %v4734, 0.0001
    %v4771 = vadd.f32 %v4735, 0.0001
    %v4772 = vadd.f32 %v4736, 0.0001
    %v4773 = vadd.f32 %v4737, 0.0001
    %v4774 = vadd.f32 %v4738, 0.0001
    %v4775 = vadd.f32 %v4739, 0.0001
    %v4776 = vadd.f32 %v4740, 0.0001
    %v4777 = vadd.f32 %v4741, 0.0001
    %v4778 = vadd.f32 %v4742, 0.0001
    %v4779 = vadd.f32 %v4743, 0.0001
    %v4780 = vadd.f32 %v4744, 0.0001
    %v4781 = vadd.f32 %v4745, 0.0001
    %v4782 = vadd.f32 %v4746, 0.0001
    %v4783 = vadd.f32 %v4747, 0.0001
    %v4784 = vadd.f32 %v4748, 0.0001
    %v4785 = vadd.f32 %v4749, 0.0001
    %v4786 = vadd.f32 %v4750, 0.0001
    %v4787 = vadd.f32 %v4751, 0.0001
    %v4788 = vadd.f32 %v4752, 0.0001
    %v4789 = vadd.f32 %v4753, 0.0001
    %v4790 = vadd.f32 %v4754, 0.0001
    %v4791 = vadd.f32 %v4755, 0.0001
    %v4792 = vadd.f32 %v4756, 0.0001
    %v4793 = vadd.f32 %v4757, 0.0001
    %v4794 = vadd.f32 %v4758, 0.0001
    %v4795 = vadd.f32 %v4759, 0.0001
    %v4796 = vadd.f32 %v4760, 0.0001
    %v4797 = vadd.f32 %v4761, 0.0001
    %v4798 = vadd.f32 %v4762, 0.0001
    %v4799 = vadd.f32 %v4763, 0.0001
    %v4800 = vadd.f32 %v4764, 0.0001
    %v4801 = vadd.f32 %v4765, 0.0001
    %v4802 = vmul.f32 %v4766, %v4694
    %v4803 = vmul.f32 %v4767, %v4695
    %v4804 = vmul.f32 %v4768, %v4696
    %v4805 = vmul.f32 %v4769, %v4697
    %v4806 = vmul.f32 %v4770, %v4698
    %v4807 = vmul.f32 %v4771, %v4699
    %v4808 = vmul.f32 %v4772, %v4700
    %v4809 = vmul.f32 %v4773, %v4701
    %v4810 = vmul.f32 %v4774, %v4702
    %v4811 = vmul.f32 %v4775, %v4703
    %v4812 = vmul.f32 %v4776, %v4704
    %v4813 = vmul.f32 %v4777, %v4705
    %v4814 = vmul.f32 %v4778, %v4706
    %v4815 = vmul.f32 %v4779, %v4707
    %v4816 = vmul.f32 %v4780, %v4708
    %v4817 = vmul.f32 %v4781, %v4709
    %v4818 = vmul.f32 %v4782, %v4710
    %v4819 = vmul.f32 %v4783, %v4711
    %v4820 = vmul.f32 %v4784, %v4712
    %v4821 = vmul.f32 %v4785, %v4713
    %v4822 = vmul.f32 %v4786, %v4714
    %v4823 = vmul.f32 %v4787, %v4715
    %v4824 = vmul.f32 %v4788, %v4716
    %v4825 = vmul.f32 %v4789, %v4717
    %v4826 = vmul.f32 %v4790, %v4718
    %v4827 = vmul.f32 %v4791, %v4719
    %v4828 = vmul.f32 %v4792, %v4720
    %v4829 = vmul.f32 %v4793, %v4721
    %v4830 = vmul.f32 %v4794, %v4722
    %v4831 = vmul.f32 %v4795, %v4723
    %v4832 = vmul.f32 %v4796, %v4724
    %v4833 = vmul.f32 %v4797, %v4725
    %v4834 = vmul.f32 %v4798, %v4726
    %v4835 = vmul.f32 %v4799, %v4727
    %v4836 = vmul.f32 %v4800, %v4728
    %v4837 = vmul.f32 %v4801, %v4729
    %v4838 = vadd.f32 %v4298, %v4334
    %v4839 = vadd.f32 %v4299, %v4335
    %v4840 = vadd.f32 %v4300, %v4336
    %v4841 = vadd.f32 %v4301, %v4337
    %v4842 = vadd.f32 %v4302, %v4338
    %v4843 = vadd.f32 %v4303, %v4339
    %v4844 = vadd.f32 %v4304, %v4340
    %v4845 = vadd.f32 %v4305, %v4341
    %v4846 = vadd.f32 %v4306, %v4342
    %v4847 = vadd.f32 %v4307, %v4343
    %v4848 = vadd.f32 %v4308, %v4344
    %v4849 = vadd.f32 %v4309, %v4345
    %v4850 = vadd.f32 %v4310, %v4346
    %v4851 = vadd.f32 %v4311, %v4347
    %v4852 = vadd.f32 %v4312, %v4348
    %v4853 = vadd.f32 %v4313, %v4349
    %v4854 = vadd.f32 %v4314, %v4350
    %v4855 = vadd.f32 %v4315, %v4351
    %v4856 = vadd.f32 %v4316, %v4352
    %v4857 = vadd.f32 %v4317, %v4353
    %v4858 = vadd.f32 %v4318, %v4354
    %v4859 = vadd.f32 %v4319, %v4355
    %v4860 = vadd.f32 %v4320, %v4356
    %v4861 = vadd.f32 %v4321, %v4357
    %v4862 = vadd.f32 %v4322, %v4358
    %v4863 = vadd.f32 %v4323, %v4359
    %v4864 = vadd.f32 %v4324, %v4360
    %v4865 = vadd.f32 %v4325, %v4361
    %v4866 = vadd.f32 %v4326, %v4362
    %v4867 = vadd.f32 %v4327, %v4363
    %v4868 = vadd.f32 %v4328, %v4364
    %v4869 = vadd.f32 %v4329, %v4365
    %v4870 = vadd.f32 %v4330, %v4366
    %v4871 = vadd.f32 %v4331, %v4367
    %v4872 = vadd.f32 %v4332, %v4368
    %v4873 = vadd.f32 %v4333, %v4369
    %v4874 = vadd.f32 %v4838, 0.0001
    %v4875 = vadd.f32 %v4839, 0.0001
    %v4876 = vadd.f32 %v4840, 0.0001
    %v4877 = vadd.f32 %v4841, 0.0001
    %v4878 = vadd.f32 %v4842, 0.0001
    %v4879 = vadd.f32 %v4843, 0.0001
    %v4880 = vadd.f32 %v4844, 0.0001
    %v4881 = vadd.f32 %v4845, 0.0001
    %v4882 = vadd.f32 %v4846, 0.0001
    %v4883 = vadd.f32 %v4847, 0.0001
    %v4884 = vadd.f32 %v4848, 0.0001
    %v4885 = vadd.f32 %v4849, 0.0001
    %v4886 = vadd.f32 %v4850, 0.0001
    %v4887 = vadd.f32 %v4851, 0.0001
    %v4888 = vadd.f32 %v4852, 0.0001
    %v4889 = vadd.f32 %v4853, 0.0001
    %v4890 = vadd.f32 %v4854, 0.0001
    %v4891 = vadd.f32 %v4855, 0.0001
    %v4892 = vadd.f32 %v4856, 0.0001
    %v4893 = vadd.f32 %v4857, 0.0001
    %v4894 = vadd.f32 %v4858, 0.0001
    %v4895 = vadd.f32 %v4859, 0.0001
    %v4896 = vadd.f32 %v4860, 0.0001
    %v4897 = vadd.f32 %v4861, 0.0001
    %v4898 = vadd.f32 %v4862, 0.0001
    %v4899 = vadd.f32 %v4863, 0.0001
    %v4900 = vadd.f32 %v4864, 0.0001
    %v4901 = vadd.f32 %v4865, 0.0001
    %v4902 = vadd.f32 %v4866, 0.0001
    %v4903 = vadd.f32 %v4867, 0.0001
    %v4904 = vadd.f32 %v4868, 0.0001
    %v4905 = vadd.f32 %v4869, 0.0001
    %v4906 = vadd.f32 %v4870, 0.0001
    %v4907 = vadd.f32 %v4871, 0.0001
    %v4908 = vadd.f32 %v4872, 0.0001
    %v4909 = vadd.f32 %v4873, 0.0001
    %v4910 = vrcp.pop %v4874
    %v4911 = vrcp.pop %v4875
    %v4912 = vrcp.pop %v4876
    %v4913 = vrcp.pop %v4877
    %v4914 = vrcp.pop %v4878
    %v4915 = vrcp.pop %v4879
    %v4916 = vrcp.pop %v4880
    %v4917 = vrcp.pop %v4881
    %v4918 = vrcp.pop %v4882
    %v4919 = vrcp.pop %v4883
    %v4920 = vrcp.pop %v4884
    %v4921 = vrcp.pop %v4885
    %v4922 = vrcp.pop %v4886
    %v4923 = vrcp.pop %v4887
    %v4924 = vrcp.pop %v4888
    %v4925 = vrcp.pop %v4889
    %v4926 = vrcp.pop %v4890
    %v4927 = vrcp.pop %v4891
    %v4928 = vrcp.pop %v4892
    %v4929 = vrcp.pop %v4893
    %v4930 = vrcp.pop %v4894
    %v4931 = vrcp.pop %v4895
    %v4932 = vrcp.pop %v4896
    %v4933 = vrcp.pop %v4897
    %v4934 = vrcp.pop %v4898
    %v4935 = vrcp.pop %v4899
    %v4936 = vrcp.pop %v4900
    %v4937 = vrcp.pop %v4901
    %v4938 = vrcp.pop %v4902
    %v4939 = vrcp.pop %v4903
    %v4940 = vrcp.pop %v4904
    %v4941 = vrcp.pop %v4905
    %v4942 = vrcp.pop %v4906
    %v4943 = vrcp.pop %v4907
    %v4944 = vrcp.pop %v4908
    %v4945 = vrcp.pop %v4909
    %v4946 = vmul.f32 %v4802, %v4910
    %v4947 = vmul.f32 %v4803, %v4911
    %v4948 = vmul.f32 %v4804, %v4912
    %v4949 = vmul.f32 %v4805, %v4913
    %v4950 = vmul.f32 %v4806, %v4914
    %v4951 = vmul.f32 %v4807, %v4915
    %v4952 = vmul.f32 %v4808, %v4916
    %v4953 = vmul.f32 %v4809, %v4917
    %v4954 = vmul.f32 %v4810, %v4918
    %v4955 = vmul.f32 %v4811, %v4919
    %v4956 = vmul.f32 %v4812, %v4920
    %v4957 = vmul.f32 %v4813, %v4921
    %v4958 = vmul.f32 %v4814, %v4922
    %v4959 = vmul.f32 %v4815, %v4923
    %v4960 = vmul.f32 %v4816, %v4924
    %v4961 = vmul.f32 %v4817, %v4925
    %v4962 = vmul.f32 %v4818, %v4926
    %v4963 = vmul.f32 %v4819, %v4927
    %v4964 = vmul.f32 %v4820, %v4928
    %v4965 = vmul.f32 %v4821, %v4929
    %v4966 = vmul.f32 %v4822, %v4930
    %v4967 = vmul.f32 %v4823, %v4931
    %v4968 = vmul.f32 %v4824, %v4932
    %v4969 = vmul.f32 %v4825, %v4933
    %v4970 = vmul.f32 %v4826, %v4934
    %v4971 = vmul.f32 %v4827, %v4935
    %v4972 = vmul.f32 %v4828, %v4936
    %v4973 = vmul.f32 %v4829, %v4937
    %v4974 = vmul.f32 %v4830, %v4938
    %v4975 = vmul.f32 %v4831, %v4939
    %v4976 = vmul.f32 %v4832, %v4940
    %v4977 = vmul.f32 %v4833, %v4941
    %v4978 = vmul.f32 %v4834, %v4942
    %v4979 = vmul.f32 %v4835, %v4943
    %v4980 = vmul.f32 %v4836, %v4944
    %v4981 = vmul.f32 %v4837, %v4945
    %vm4982 = vcmask 130048
    %v4984 = vsel %vm4982, %v749, 0
    %v4987 = vsel %vm4982, %v751, 0
    %4989 = vmatprep.subr.mxu0 %v4719
    %4990 = vmatpush1.msra.mxu0 %v4718
    %4991 = vmatprep.subr.mxu0 %v4715
    %4992 = vmatpush1.msra.mxu0 %v4714
    %4993 = vmatprep.subr.mxu0 %v4711
    %4994 = vmatpush1.msra.mxu0 %v4710
    %4995 = vmatprep.subr.mxu0 %v4707
    %4996 = vmatpush1.msra.mxu0 %v4706
    %4997 = vmatprep.subr.mxu0 %v4703
    %4998 = vmatpush1.msra.mxu0 %v4702
    %4999 = vmatprep.subr.mxu0 %v4699
    %5000 = vmatpush1.msra.mxu0 %v4698
    %5001 = vmatprep.subr.mxu0 %v4695
    %5002 = vmatpush1.msra.mxu0 %v4694
    %5003 = vmatprep.subr.mxu0 %v4979
    %5004 = vmatpush1.msra.mxu0 %v4978
    %5005 = vmatprep.subr.mxu0 %v4975
    %5006 = vmatpush1.msra.mxu0 %v4974
    %5007 = vmatprep.subr.mxu0 %v4971
    %5008 = vmatpush1.msra.mxu0 %v4970
    %5009 = vmatprep.subr.mxu0 %v4967
    %5010 = vmatpush1.msra.mxu0 %v4966
    %5011 = vmatprep.subr.mxu0 %v4963
    %5012 = vmatpush1.msra.mxu0 %v4962
    %5013 = vmatprep.subr.mxu0 %v4959
    %5014 = vmatpush1.msra.mxu0 %v4958
    %5015 = vmatprep.subr.mxu0 %v4955
    %5016 = vmatpush1.msra.mxu0 %v4954
    %5017 = vmatprep.subr.mxu0 %v4951
    %5018 = vmatpush1.msra.mxu0 %v4950
    %5019 = vmatprep.subr.mxu0 %v4947
    %5020 = vmatpush1.msra.mxu0 %v4946
    %5021 = vmatprep.subr.mxu0 0.0
    %5022 = vmatpush2.msra.mxu0 0.0
    %5023 = vmatprep.subr.mxu0 0.0
    %5024 = vmatpush2.msra.mxu0 0.0
    %5025 = vmatprep.subr.mxu0 0.0
    %5026 = vmatpush2.msra.mxu0 0.0
    %5027 = vmatprep.subr.mxu0 0.0
    %5028 = vmatpush2.msra.mxu0 0.0
    %5029 = vmatprep.subr.mxu0 0.0
    %5030 = vmatpush2.msra.mxu0 0.0
    %5031 = vmatprep.subr.mxu0 0.0
    %5032 = vmatpush2.msra.mxu0 0.0
    %5033 = vmatprep.subr.mxu0 0.0
    %5034 = vmatpush2.msra.mxu0 0.0
    %5035 = vmatprep.subr.mxu0 0.0
    %5036 = vmatpush2.msra.mxu0 0.0
    %5037 = vmatprep.subr.mxu0 0.0
    %5038 = vmatpush2.msra.mxu0 0.0
    %5039 = vmatprep.subr.mxu0 0.0
    %5040 = vmatpush2.msra.mxu0 0.0
    %5041 = vmatprep.subr.mxu0 0.0
    %5042 = vmatpush2.msra.mxu0 0.0
    %5043 = vmatprep.subr.mxu0 0.0
    %5044 = vmatpush2.msra.mxu0 0.0
    %5045 = vmatprep.subr.mxu0 0.0
    %5046 = vmatpush2.msra.mxu0 0.0
    %5047 = vmatprep.subr.mxu0 0.0
    %5048 = vmatpush2.msra.mxu0 0.0
    %5049 = vmatprep.subr.mxu0 %v4727
    %5050 = vmatpush2.msra.mxu0 %v4726
    %5051 = vmatprep.subr.mxu0 %v4723
    %5052 = vmatpush2.msra.mxu0 %v4722
    %5053 = vmatprep.mubr.f32.mxu0 %v4984
    %5054 = vmatmul.mubr.f32.gmra.mxu0 %v748
    %v5055 = vpop.f32.mrf.mxu0
    %v5056 = vadd.f32 0.0, %v5055
    %v5057 = vpop.f32.mrf.mxu0
    %v5058 = vadd.f32 0.0, %v5057
    %5059 = vmatprep.mubr.f32.mxu0 %v4987
    %5060 = vmatmul.mubr.f32.gmra.mxu0 %v750
    %v5061 = vpop.f32.mrf.mxu0
    %v5062 = vadd.f32 0.0, %v5061
    %v5063 = vpop.f32.mrf.mxu0
    %v5064 = vadd.f32 0.0, %v5063
    %5065 = vdwg.mxu0
    %5066 = vmatprep.subr.mxu0 %v4721
    %5067 = vmatpush1.msra.mxu0 %v4720
    %5068 = vmatprep.subr.mxu0 %v4717
    %5069 = vmatpush1.msra.mxu0 %v4716
    %5070 = vmatprep.subr.mxu0 %v4713
    %5071 = vmatpush1.msra.mxu0 %v4712
    %5072 = vmatprep.subr.mxu0 %v4709
    %5073 = vmatpush1.msra.mxu0 %v4708
    %5074 = vmatprep.subr.mxu0 %v4705
    %5075 = vmatpush1.msra.mxu0 %v4704
    %5076 = vmatprep.subr.mxu0 %v4701
    %5077 = vmatpush1.msra.mxu0 %v4700
    %5078 = vmatprep.subr.mxu0 %v4697
    %5079 = vmatpush1.msra.mxu0 %v4696
    %5080 = vmatprep.subr.mxu0 %v4981
    %5081 = vmatpush1.msra.mxu0 %v4980
    %5082 = vmatprep.subr.mxu0 %v4977
    %5083 = vmatpush1.msra.mxu0 %v4976
    %5084 = vmatprep.subr.mxu0 %v4973
    %5085 = vmatpush1.msra.mxu0 %v4972
    %5086 = vmatprep.subr.mxu0 %v4969
    %5087 = vmatpush1.msra.mxu0 %v4968
    %5088 = vmatprep.subr.mxu0 %v4965
    %5089 = vmatpush1.msra.mxu0 %v4964
    %5090 = vmatprep.subr.mxu0 %v4961
    %5091 = vmatpush1.msra.mxu0 %v4960
    %5092 = vmatprep.subr.mxu0 %v4957
    %5093 = vmatpush1.msra.mxu0 %v4956
    %5094 = vmatprep.subr.mxu0 %v4953
    %5095 = vmatpush1.msra.mxu0 %v4952
    %5096 = vmatprep.subr.mxu0 %v4949
    %5097 = vmatpush1.msra.mxu0 %v4948
    %5098 = vmatprep.subr.mxu0 0.0
    %5099 = vmatpush2.msra.mxu0 0.0
    %5100 = vmatprep.subr.mxu0 0.0
    %5101 = vmatpush2.msra.mxu0 0.0
    %5102 = vmatprep.subr.mxu0 0.0
    %5103 = vmatpush2.msra.mxu0 0.0
    %5104 = vmatprep.subr.mxu0 0.0
    %5105 = vmatpush2.msra.mxu0 0.0
    %5106 = vmatprep.subr.mxu0 0.0
    %5107 = vmatpush2.msra.mxu0 0.0
    %5108 = vmatprep.subr.mxu0 0.0
    %5109 = vmatpush2.msra.mxu0 0.0
    %5110 = vmatprep.subr.mxu0 0.0
    %5111 = vmatpush2.msra.mxu0 0.0
    %5112 = vmatprep.subr.mxu0 0.0
    %5113 = vmatpush2.msra.mxu0 0.0
    %5114 = vmatprep.subr.mxu0 0.0
    %5115 = vmatpush2.msra.mxu0 0.0
    %5116 = vmatprep.subr.mxu0 0.0
    %5117 = vmatpush2.msra.mxu0 0.0
    %5118 = vmatprep.subr.mxu0 0.0
    %5119 = vmatpush2.msra.mxu0 0.0
    %5120 = vmatprep.subr.mxu0 0.0
    %5121 = vmatpush2.msra.mxu0 0.0
    %5122 = vmatprep.subr.mxu0 0.0
    %5123 = vmatpush2.msra.mxu0 0.0
    %5124 = vmatprep.subr.mxu0 0.0
    %5125 = vmatpush2.msra.mxu0 0.0
    %5126 = vmatprep.subr.mxu0 %v4729
    %5127 = vmatpush2.msra.mxu0 %v4728
    %5128 = vmatprep.subr.mxu0 %v4725
    %5129 = vmatpush2.msra.mxu0 %v4724
    %5130 = vmatprep.mubr.f32.mxu0 %v4984
    %5131 = vmatmul.mubr.f32.gmra.mxu0 %v748
    %v5132 = vpop.f32.mrf.mxu0
    %v5133 = vadd.f32 0.0, %v5132
    %v5134 = vpop.f32.mrf.mxu0
    %v5135 = vadd.f32 0.0, %v5134
    %5136 = vmatprep.mubr.f32.mxu0 %v4987
    %5137 = vmatmul.mubr.f32.gmra.mxu0 %v750
    %v5138 = vpop.f32.mrf.mxu0
    %v5139 = vadd.f32 0.0, %v5138
    %v5140 = vpop.f32.mrf.mxu0
    %v5141 = vadd.f32 0.0, %v5140
    %5142 = vdwg.mxu0
    %vm5143 = vcmask 48128
    %v5145 = vsel %vm5143, %v5135, 0
    %v5148 = vsel %vm5143, %v5141, 0
    %vm5150 = vcmask 1045504
    %v5152 = vsel %vm5150, %v800, 0
    %5154 = vmatprep.subr.mxu0 0.0
    %5155 = vmatpush1.msra.mxu0 %v767
    %5156 = vmatprep.subr.mxu0 0.0
    %5157 = vmatpush1.msra.mxu0 %v766
    %5158 = vmatprep.subr.mxu0 0.0
    %5159 = vmatpush1.msra.mxu0 %v765
    %5160 = vmatprep.subr.mxu0 0.0
    %5161 = vmatpush1.msra.mxu0 %v764
    %5162 = vmatprep.subr.mxu0 0.0
    %5163 = vmatpush1.msra.mxu0 %v763
    %5164 = vmatprep.subr.mxu0 0.0
    %5165 = vmatpush1.msra.mxu0 %v762
    %5166 = vmatprep.subr.mxu0 0.0
    %5167 = vmatpush1.msra.mxu0 %v761
    %5168 = vmatprep.subr.mxu0 0.0
    %5169 = vmatpush1.msra.mxu0 %v760
    %5170 = vmatprep.subr.mxu0 0.0
    %5171 = vmatpush1.msra.mxu0 %v759
    %5172 = vmatprep.subr.mxu0 0.0
    %5173 = vmatpush1.msra.mxu0 %v758
    %5174 = vmatprep.subr.mxu0 0.0
    %5175 = vmatpush1.msra.mxu0 %v757
    %5176 = vmatprep.subr.mxu0 0.0
    %5177 = vmatpush1.msra.mxu0 %v756
    %5178 = vmatprep.subr.mxu0 0.0
    %5179 = vmatpush1.msra.mxu0 %v755
    %5180 = vmatprep.subr.mxu0 0.0
    %5181 = vmatpush1.msra.mxu0 %v754
    %5182 = vmatprep.subr.mxu0 0.0
    %5183 = vmatpush1.msra.mxu0 %v753
    %5184 = vmatprep.subr.mxu0 0.0
    %5185 = vmatpush1.msra.mxu0 %v752
    %5186 = vmatprep.subr.mxu0 0.0
    %5187 = vmatpush2.msra.mxu0 %v783
    %5188 = vmatprep.subr.mxu0 0.0
    %5189 = vmatpush2.msra.mxu0 %v782
    %5190 = vmatprep.subr.mxu0 0.0
    %5191 = vmatpush2.msra.mxu0 %v781
    %5192 = vmatprep.subr.mxu0 0.0
    %5193 = vmatpush2.msra.mxu0 %v780
    %5194 = vmatprep.subr.mxu0 0.0
    %5195 = vmatpush2.msra.mxu0 %v779
    %5196 = vmatprep.subr.mxu0 0.0
    %5197 = vmatpush2.msra.mxu0 %v778
    %5198 = vmatprep.subr.mxu0 0.0
    %5199 = vmatpush2.msra.mxu0 %v777
    %5200 = vmatprep.subr.mxu0 0.0
    %5201 = vmatpush2.msra.mxu0 %v776
    %5202 = vmatprep.subr.mxu0 0.0
    %5203 = vmatpush2.msra.mxu0 %v775
    %5204 = vmatprep.subr.mxu0 0.0
    %5205 = vmatpush2.msra.mxu0 %v774
    %5206 = vmatprep.subr.mxu0 0.0
    %5207 = vmatpush2.msra.mxu0 %v773
    %5208 = vmatprep.subr.mxu0 0.0
    %5209 = vmatpush2.msra.mxu0 %v772
    %5210 = vmatprep.subr.mxu0 0.0
    %5211 = vmatpush2.msra.mxu0 %v771
    %5212 = vmatprep.subr.mxu0 0.0
    %5213 = vmatpush2.msra.mxu0 %v770
    %5214 = vmatprep.subr.mxu0 0.0
    %5215 = vmatpush2.msra.mxu0 %v769
    %5216 = vmatprep.subr.mxu0 0.0
    %5217 = vmatpush2.msra.mxu0 %v768
    %5218 = vmatprep.mubr.f32.mxu0 %v5058
    %5219 = vmatmul.mubr.f32.gmra.mxu0 %v5056
    %v5220 = vpop.f32.mrf.mxu0
    %v5221 = vadd.f32 0.0, %v5220
    %v5222 = vpop.f32.mrf.mxu0
    %5223 = vmatprep.mubr.f32.mxu0 %v5064
    %5224 = vmatmul.mubr.f32.gmra.mxu0 %v5062
    %v5225 = vpop.f32.mrf.mxu0
    %v5226 = vadd.f32 0.0, %v5225
    %v5227 = vpop.f32.mrf.mxu0
    %5228 = vdwg.mxu0
    %5229 = vmatprep.subr.mxu0 0.0
    %5230 = vmatpush1.msra.mxu0 %v799
    %5231 = vmatprep.subr.mxu0 0.0
    %5232 = vmatpush1.msra.mxu0 %v798
    %5233 = vmatprep.subr.mxu0 0.0
    %5234 = vmatpush1.msra.mxu0 %v797
    %5235 = vmatprep.subr.mxu0 0.0
    %5236 = vmatpush1.msra.mxu0 %v796
    %5237 = vmatprep.subr.mxu0 0.0
    %5238 = vmatpush1.msra.mxu0 %v795
    %5239 = vmatprep.subr.mxu0 0.0
    %5240 = vmatpush1.msra.mxu0 %v794
    %5241 = vmatprep.subr.mxu0 0.0
    %5242 = vmatpush1.msra.mxu0 %v793
    %5243 = vmatprep.subr.mxu0 0.0
    %5244 = vmatpush1.msra.mxu0 %v792
    %5245 = vmatprep.subr.mxu0 0.0
    %5246 = vmatpush1.msra.mxu0 %v791
    %5247 = vmatprep.subr.mxu0 0.0
    %5248 = vmatpush1.msra.mxu0 %v790
    %5249 = vmatprep.subr.mxu0 0.0
    %5250 = vmatpush1.msra.mxu0 %v789
    %5251 = vmatprep.subr.mxu0 0.0
    %5252 = vmatpush1.msra.mxu0 %v788
    %5253 = vmatprep.subr.mxu0 0.0
    %5254 = vmatpush1.msra.mxu0 %v787
    %5255 = vmatprep.subr.mxu0 0.0
    %5256 = vmatpush1.msra.mxu0 %v786
    %5257 = vmatprep.subr.mxu0 0.0
    %5258 = vmatpush1.msra.mxu0 %v785
    %5259 = vmatprep.subr.mxu0 0.0
    %5260 = vmatpush1.msra.mxu0 %v784
    %5261 = vmatprep.subr.mxu0 0.0
    %5262 = vmatpush2.msra.mxu0 0.0
    %5263 = vmatprep.subr.mxu0 0.0
    %5264 = vmatpush2.msra.mxu0 0.0
    %5265 = vmatprep.subr.mxu0 0.0
    %5266 = vmatpush2.msra.mxu0 0.0
    %5267 = vmatprep.subr.mxu0 0.0
    %5268 = vmatpush2.msra.mxu0 0.0
    %5269 = vmatprep.subr.mxu0 0.0
    %5270 = vmatpush2.msra.mxu0 0.0
    %5271 = vmatprep.subr.mxu0 0.0
    %5272 = vmatpush2.msra.mxu0 0.0
    %5273 = vmatprep.subr.mxu0 0.0
    %5274 = vmatpush2.msra.mxu0 0.0
    %5275 = vmatprep.subr.mxu0 0.0
    %5276 = vmatpush2.msra.mxu0 0.0
    %5277 = vmatprep.subr.mxu0 0.0
    %5278 = vmatpush2.msra.mxu0 0.0
    %5279 = vmatprep.subr.mxu0 0.0
    %5280 = vmatpush2.msra.mxu0 0.0
    %5281 = vmatprep.subr.mxu0 0.0
    %5282 = vmatpush2.msra.mxu0 0.0
    %5283 = vmatprep.subr.mxu0 0.0
    %5284 = vmatpush2.msra.mxu0 0.0
    %5285 = vmatprep.subr.mxu0 0.0
    %5286 = vmatpush2.msra.mxu0 0.0
    %5287 = vmatprep.subr.mxu0 0.0
    %5288 = vmatpush2.msra.mxu0 0.0
    %5289 = vmatprep.subr.mxu0 0.0
    %5290 = vmatpush2.msra.mxu0 0.0
    %5291 = vmatprep.subr.mxu0 0.0
    %5292 = vmatpush2.msra.mxu0 %v5152
    %5293 = vmatprep.mubr.f32.mxu0 %v5145
    %5294 = vmatmul.mubr.f32.gmra.mxu0 %v5133
    %v5295 = vpop.f32.mrf.mxu0
    %v5296 = vadd.f32 %v5221, %v5295
    %v5297 = vpop.f32.mrf.mxu0
    %5298 = vmatprep.mubr.f32.mxu0 %v5148
    %5299 = vmatmul.mubr.f32.gmra.mxu0 %v5139
    %v5300 = vpop.f32.mrf.mxu0
    %v5301 = vadd.f32 %v5226, %v5300
    %v5302 = vpop.f32.mrf.mxu0
    %5303 = vdwg.mxu0
    %vm5304 = vcmask 64512
    %5305 = vst.msk [vmem:[%s4] sm:$0xff] %vm5304, %v5296
    %5306 = vst.msk [vmem:[%s4 + $0x8] sm:$0xff] %vm5304, %v5301
    // Predicated region
    $region34: #{lm_loss.1} parent=1 // pred_check
      _
    $region35: #{lm_loss.1} parent=1 // pred_check_branch
      %5308 = sbr.rel (0) target = $region37
    $region36: #{lm_loss.1} parent=1 // pred_region
      _
    $region37: #{lm_loss.1} parent=1 // pred_fallthru
      _
    // Predicated region
    $region38: #{lm_loss.1} parent=1 // pred_check
      _
    $region39: #{lm_loss.1} parent=1 // pred_check_branch
      %5310 = sbr.rel (0) target = $region41
    $region40: #{lm_loss.1} parent=1 // pred_region
      %s5312 = ssub.s32 16, 16
      %5313 = vsyncadd [#allocation4], %s5312
      %5316 = dma.smem_to_hbm [#allocation10], 16, %s5, [#allocation4]
    $region41: #{lm_loss.1} parent=1 // pred_fallthru
      _
    // Predicated region
    $region42: #{lm_loss.1} parent=1 // pred_check
      _
    $region43: #{lm_loss.1} parent=1 // pred_check_branch
      %5318 = sbr.rel (0) target = $region45
    $region44: #{lm_loss.1} parent=1 // pred_region
      _
    $region45: #{lm_loss.1} parent=1 // pred_fallthru
      _
    // Predicated region
    $region46: #{lm_loss.1} parent=1 // pred_check
      _
    $region47: #{lm_loss.1} parent=1 // pred_check_branch
      %5320 = sbr.rel (0) target = $region49
    $region48: #{lm_loss.1} parent=1 // pred_region
      %5321 = dma.done [#allocation4], 16
    $region49: #{lm_loss.1} parent=1 // pred_fallthru
      _
    %5322 = sfence
    %5323 = vsyncpa [#allocation3], 1
    %5324 = vsyncpa [#allocation6], 1
    %5325 = vsyncpa [#allocation9], 1
    %5326 = vsyncpa [#allocation4], 1

</llo_original>
